<compile_context>
chip_gen: v6e
topology: v6e:2x2x1
jax: 0.10.0
libtpu: 0.0.40
codegen_flags: <defaults>
</compile_context>

<pallas_src>
import jax
import jax.numpy as jnp
from jax.experimental import pallas as pl
from jax.experimental.pallas import tpu as pltpu


def _layernorm(h, g, b, eps=1e-5):
    # f32 statistics; gamma folded into the rsqrt scale.
    mu = jnp.mean(h, axis=-1, keepdims=True)
    var = jnp.mean(jnp.square(h - mu), axis=-1, keepdims=True)
    scale = jax.lax.rsqrt(var + eps) * g
    return (h - mu) * scale + b


def critic_kernel(obs_ref, act_ref,
                  wro_ref, wra_ref, br_ref,
                  w1o_ref, w1a_ref, b1_ref, g1_ref, be1_ref,
                  w2_ref, b2_ref, g2_ref, be2_ref,
                  w3_ref, b3_ref, g3_ref, be3_ref,
                  w4_ref, b4_ref,
                  out_ref):
    obs = obs_ref[...]   # bf16 [TILE_B, obs_feat]
    act = act_ref[...]   # bf16 [TILE_B, act_feat]

    def split_linear(wo_ref, wa_ref, bias_ref):
        # x @ W  ==  obs @ W_obs + act @ W_act   (f32 accumulation on the MXU)
        y = jnp.dot(obs, wo_ref[...], preferred_element_type=jnp.float32)
        y = y + jnp.dot(act, wa_ref[...], preferred_element_type=jnp.float32)
        return y + bias_ref[...]

    def linear(h, w_ref, bias_ref):
        return jnp.dot(h.astype(jnp.bfloat16), w_ref[...],
                       preferred_element_type=jnp.float32) + bias_ref[...]

    # residual branch
    residual = jnp.maximum(split_linear(wro_ref, wra_ref, br_ref), 0.0)

    # main trunk: (Linear -> LayerNorm -> ReLU) x 3   (dropout == identity, eval)
    h = jnp.maximum(_layernorm(split_linear(w1o_ref, w1a_ref, b1_ref),
                               g1_ref[...], be1_ref[...]), 0.0)
    h = jnp.maximum(_layernorm(linear(h, w2_ref, b2_ref),
                               g2_ref[...], be2_ref[...]), 0.0)
    h = jnp.maximum(_layernorm(linear(h, w3_ref, b3_ref),
                               g3_ref[...], be3_ref[...]), 0.0)

    h = h + residual

    # head: (TILE_B, H) @ (H, 1)  done as VPU multiply + lane reduction.
    out_ref[...] = jnp.sum(h * w4_ref[...], axis=-1, keepdims=True) + b4_ref[0, 0]


def critic_forward(obs_all_agents, act_all_agents, params, *, tile_b=128):
    """obs_all_agents: [B, obs_dim*n_agents], act_all_agents: [B, act_dim*n_agents]."""
    B, obs_feat = obs_all_agents.shape
    act_feat = act_all_agents.shape[-1]
    H = params["w2"].shape[0]

    tile_b = min(tile_b, B)
    grid = (pl.cdiv(B, tile_b),)

    bf16 = jnp.bfloat16
    obs = obs_all_agents.astype(bf16)
    act = act_all_agents.astype(bf16)

    def wspec(shape):
        # Weight / bias block == full array, constant index -> resident in VMEM.
        return pl.BlockSpec(shape, lambda i: (0,) * len(shape))

    in_specs = [
        pl.BlockSpec((tile_b, obs_feat), lambda i: (i, 0)),
        pl.BlockSpec((tile_b, act_feat), lambda i: (i, 0)),
        wspec((obs_feat, H)), wspec((act_feat, H)), wspec((1, H)),      # residual
        wspec((obs_feat, H)), wspec((act_feat, H)), wspec((1, H)),      # fc1
        wspec((1, H)), wspec((1, H)),                                   # ln1
        wspec((H, H)), wspec((1, H)), wspec((1, H)), wspec((1, H)),     # fc2 + ln2
        wspec((H, H)), wspec((1, H)), wspec((1, H)), wspec((1, H)),     # fc3 + ln3
        wspec((1, H)),                                                  # w4 row
        pl.BlockSpec(memory_space=pltpu.MemorySpace.SMEM),              # b4 scalar
    ]

    args = (
        obs, act,
        params["wro"].astype(bf16), params["wra"].astype(bf16), params["br"],
        params["w1o"].astype(bf16), params["w1a"].astype(bf16), params["b1"],
        params["g1"], params["be1"],
        params["w2"].astype(bf16), params["b2"], params["g2"], params["be2"],
        params["w3"].astype(bf16), params["b3"], params["g3"], params["be3"],
        params["w4"], params["b4"],
    )

    # Explicit VMEM budget (keeps the same tiling valid under v7x's 64 MiB).
    weight_bytes = 2 * (2 * (obs_feat + act_feat) * H + 2 * H * H)   # bf16 weights
    vec_bytes = 4 * (9 * H)                                          # f32 bias/gamma/beta/w4
    io_bytes = 2 * tile_b * (2 * (obs_feat + act_feat) + 4)          # double-buffered tiles
    live_bytes = 4 * 8 * tile_b * H                                  # f32 intermediates
    vmem_limit = int(1.5 * (weight_bytes + vec_bytes + io_bytes + live_bytes)) + (4 << 20)
    vmem_limit = min(max(vmem_limit, 16 << 20), 48 << 20)

    return pl.pallas_call(
        critic_kernel,
        out_shape=jax.ShapeDtypeStruct((B, 1), jnp.float32),
        grid=grid,
        in_specs=in_specs,
        out_specs=pl.BlockSpec((tile_b, 1), lambda i: (i, 0)),
        compiler_params=pltpu.CompilerParams(
            dimension_semantics=("parallel",),
            vmem_limit_bytes=vmem_limit,
        ),
    )(*args)


def init_params(key, obs_feat, act_feat, hidden_dim):
    """PyTorch-like uniform fan-in init. Linear weights stored transposed [in, out];
    fc1 / residual weights are pre-split into (obs, act) halves; w4 is a (1, H) row."""
    in_dim = obs_feat + act_feat
    ks = jax.random.split(key, 10)

    def lin(kw, kb, fan_in, fan_out):
        bound = 1.0 / (fan_in ** 0.5)
        w = jax.random.uniform(kw, (fan_in, fan_out), jnp.float32, -bound, bound)
        b = jax.random.uniform(kb, (1, fan_out), jnp.float32, -bound, bound)
        return w, b

    w1, b1 = lin(ks[0], ks[1], in_dim, hidden_dim)
    w2, b2 = lin(ks[2], ks[3], hidden_dim, hidden_dim)
    w3, b3 = lin(ks[4], ks[5], hidden_dim, hidden_dim)
    w4, b4 = lin(ks[6], ks[7], hidden_dim, 1)
    wr, br = lin(ks[8], ks[9], in_dim, hidden_dim)

    ones = jnp.ones((1, hidden_dim), jnp.float32)
    zeros = jnp.zeros((1, hidden_dim), jnp.float32)

    return dict(
        w1o=w1[:obs_feat], w1a=w1[obs_feat:], b1=b1, g1=ones, be1=zeros,
        w2=w2, b2=b2, g2=ones, be2=zeros,
        w3=w3, b3=b3, g3=ones, be3=zeros,
        w4=w4.T, b4=b4.reshape(1, 1),
        wro=wr[:obs_feat], wra=wr[obs_feat:], br=br,
    )


def critic_reference(obs, act, p):
    """Pure-JAX reference of the PyTorch forward (eval mode), using the same
    mixed precision as the kernel (bf16 matmul inputs, f32 accumulation/LN)."""
    bf16 = jnp.bfloat16
    x = jnp.concatenate([obs, act], axis=-1).astype(bf16)
    wr = jnp.concatenate([p["wro"], p["wra"]], axis=0).astype(bf16)
    w1 = jnp.concatenate([p["w1o"], p["w1a"]], axis=0).astype(bf16)

    def mm(a, w):
        return jnp.dot(a, w, preferred_element_type=jnp.float32)

    def ln(h, g, b, eps=1e-5):
        mu = jnp.mean(h, axis=-1, keepdims=True)
        var = jnp.mean((h - mu) ** 2, axis=-1, keepdims=True)
        return (h - mu) * jax.lax.rsqrt(var + eps) * g + b

    residual = jax.nn.relu(mm(x, wr) + p["br"])
    h = jax.nn.relu(ln(mm(x, w1) + p["b1"], p["g1"], p["be1"]))
    h = jax.nn.relu(ln(mm(h.astype(bf16), p["w2"].astype(bf16)) + p["b2"],
                       p["g2"], p["be2"]))
    h = jax.nn.relu(ln(mm(h.astype(bf16), p["w3"].astype(bf16)) + p["b3"],
                       p["g3"], p["be3"]))
    h = h + residual
    return jnp.sum(h * p["w4"], axis=-1, keepdims=True) + p["b4"]


if __name__ == "__main__":
    # small shapes consistent with the module (hidden_dim=256 is the module default
    # and is lane-aligned); B=256 with TILE_B=128 exercises a 2-step grid.
    B, obs_dim, act_dim, n_agents, hidden_dim = 256, 12, 2, 2, 256
    obs_feat = obs_dim * n_agents   # 24
    act_feat = act_dim * n_agents   # 4

    key = jax.random.PRNGKey(0)
    k_obs, k_act, k_par = jax.random.split(key, 3)

    obs = jax.random.normal(k_obs, (B, obs_feat), jnp.float32)
    act = jax.random.normal(k_act, (B, act_feat), jnp.float32)
    params = init_params(k_par, obs_feat, act_feat, hidden_dim)

    out = critic_forward(obs, act, params, tile_b=128)
    jax.block_until_ready(out)

    ref = critic_reference(obs, act, params)
    assert out.shape == (B, 1)
    max_err = float(jnp.max(jnp.abs(out - ref)))
    assert jnp.allclose(out, ref, atol=5e-3, rtol=5e-3), f"max_err={max_err}"

    print("KERNEL_OK")
</pallas_src>

<mosaic_0001>
module attributes {stable_mosaic.version = 11 : i64} {
  func.func @critic_kernel(%arg0: i32, %arg1: memref<128x24xbf16, #tpu.memory_space<vmem>>, %arg2: memref<128x4xbf16, #tpu.memory_space<vmem>>, %arg3: memref<24x256xbf16, #tpu.memory_space<vmem>>, %arg4: memref<4x256xbf16, #tpu.memory_space<vmem>>, %arg5: memref<1x256xf32, #tpu.memory_space<vmem>>, %arg6: memref<24x256xbf16, #tpu.memory_space<vmem>>, %arg7: memref<4x256xbf16, #tpu.memory_space<vmem>>, %arg8: memref<1x256xf32, #tpu.memory_space<vmem>>, %arg9: memref<1x256xf32, #tpu.memory_space<vmem>>, %arg10: memref<1x256xf32, #tpu.memory_space<vmem>>, %arg11: memref<256x256xbf16, #tpu.memory_space<vmem>>, %arg12: memref<1x256xf32, #tpu.memory_space<vmem>>, %arg13: memref<1x256xf32, #tpu.memory_space<vmem>>, %arg14: memref<1x256xf32, #tpu.memory_space<vmem>>, %arg15: memref<256x256xbf16, #tpu.memory_space<vmem>>, %arg16: memref<1x256xf32, #tpu.memory_space<vmem>>, %arg17: memref<1x256xf32, #tpu.memory_space<vmem>>, %arg18: memref<1x256xf32, #tpu.memory_space<vmem>>, %arg19: memref<1x256xf32, #tpu.memory_space<vmem>>, %arg20: memref<1x1xf32, #tpu.memory_space<smem>>, %arg21: memref<128x1xf32, #tpu.memory_space<vmem>>) attributes {dimension_semantics = [#tpu.dimension_semantics<parallel>], iteration_bounds = array<i64: 2>, scalar_prefetch = 0 : i64, scratch_operands = 0 : i64, tpu.core_type = #tpu.core_type<tc>, window_params = [{transform_indices = @transform_0, window_bounds = array<i64: 128, 24>}, {transform_indices = @transform_1, window_bounds = array<i64: 128, 4>}, {pipeline_mode = #tpu.pipeline_mode<synchronous>, transform_indices = @transform_2, window_bounds = array<i64: 24, 256>}, {pipeline_mode = #tpu.pipeline_mode<synchronous>, transform_indices = @transform_3, window_bounds = array<i64: 4, 256>}, {pipeline_mode = #tpu.pipeline_mode<synchronous>, transform_indices = @transform_4, window_bounds = array<i64: 1, 256>}, {pipeline_mode = #tpu.pipeline_mode<synchronous>, transform_indices = @transform_5, window_bounds = array<i64: 24, 256>}, {pipeline_mode = #tpu.pipeline_mode<synchronous>, transform_indices = @transform_6, window_bounds = array<i64: 4, 256>}, {pipeline_mode = #tpu.pipeline_mode<synchronous>, transform_indices = @transform_7, window_bounds = array<i64: 1, 256>}, {pipeline_mode = #tpu.pipeline_mode<synchronous>, transform_indices = @transform_8, window_bounds = array<i64: 1, 256>}, {pipeline_mode = #tpu.pipeline_mode<synchronous>, transform_indices = @transform_9, window_bounds = array<i64: 1, 256>}, {pipeline_mode = #tpu.pipeline_mode<synchronous>, transform_indices = @transform_10, window_bounds = array<i64: 256, 256>}, {pipeline_mode = #tpu.pipeline_mode<synchronous>, transform_indices = @transform_11, window_bounds = array<i64: 1, 256>}, {pipeline_mode = #tpu.pipeline_mode<synchronous>, transform_indices = @transform_12, window_bounds = array<i64: 1, 256>}, {pipeline_mode = #tpu.pipeline_mode<synchronous>, transform_indices = @transform_13, window_bounds = array<i64: 1, 256>}, {pipeline_mode = #tpu.pipeline_mode<synchronous>, transform_indices = @transform_14, window_bounds = array<i64: 256, 256>}, {pipeline_mode = #tpu.pipeline_mode<synchronous>, transform_indices = @transform_15, window_bounds = array<i64: 1, 256>}, {pipeline_mode = #tpu.pipeline_mode<synchronous>, transform_indices = @transform_16, window_bounds = array<i64: 1, 256>}, {pipeline_mode = #tpu.pipeline_mode<synchronous>, transform_indices = @transform_17, window_bounds = array<i64: 1, 256>}, {pipeline_mode = #tpu.pipeline_mode<synchronous>, transform_indices = @transform_18, window_bounds = array<i64: 1, 256>}, {transform_indices = @transform_19, window_bounds = array<i64: 1, 1>}, {transform_indices = @transform_20, window_bounds = array<i64: 128, 1>}]} {
    %c0 = arith.constant 0 : index
    %c0_0 = arith.constant 0 : index
    %0 = vector.load %arg1[%c0, %c0_0] : memref<128x24xbf16, #tpu.memory_space<vmem>>, vector<128x24xbf16>
    %c0_1 = arith.constant 0 : index
    %c0_2 = arith.constant 0 : index
    %1 = vector.load %arg2[%c0_1, %c0_2] : memref<128x4xbf16, #tpu.memory_space<vmem>>, vector<128x4xbf16>
    %c0_3 = arith.constant 0 : index
    %c0_4 = arith.constant 0 : index
    %2 = vector.load %arg3[%c0_3, %c0_4] : memref<24x256xbf16, #tpu.memory_space<vmem>>, vector<24x256xbf16>
    %cst = arith.constant dense<0.000000e+00> : vector<128x256xf32>
    %3 = tpu.matmul %0, %2, %cst {dimension_numbers = #tpu.dot_dimension_numbers<[1], [0], [0], [1], [0, 0, 1, 1], [], []>} : vector<128x24xbf16>, vector<24x256xbf16>, vector<128x256xf32> -> vector<128x256xf32>
    %c0_5 = arith.constant 0 : index
    %c0_6 = arith.constant 0 : index
    %4 = vector.load %arg4[%c0_5, %c0_6] : memref<4x256xbf16, #tpu.memory_space<vmem>>, vector<4x256xbf16>
    %cst_7 = arith.constant dense<0.000000e+00> : vector<128x256xf32>
    %5 = tpu.matmul %1, %4, %cst_7 {dimension_numbers = #tpu.dot_dimension_numbers<[1], [0], [0], [1], [0, 0, 1, 1], [], []>} : vector<128x4xbf16>, vector<4x256xbf16>, vector<128x256xf32> -> vector<128x256xf32>
    %6 = arith.addf %3, %5 : vector<128x256xf32>
    %c0_8 = arith.constant 0 : index
    %c0_9 = arith.constant 0 : index
    %7 = vector.load %arg5[%c0_8, %c0_9] : memref<1x256xf32, #tpu.memory_space<vmem>>, vector<1x256xf32>
    %8 = vector.broadcast %7 : vector<1x256xf32> to vector<128x256xf32>
    %9 = arith.addf %6, %8 : vector<128x256xf32>
    %cst_10 = arith.constant 0.000000e+00 : f32
    %10 = vector.broadcast %cst_10 : f32 to vector<128x256xf32>
    %11 = arith.maximumf %9, %10 : vector<128x256xf32>
    %c0_11 = arith.constant 0 : index
    %c0_12 = arith.constant 0 : index
    %12 = vector.load %arg6[%c0_11, %c0_12] : memref<24x256xbf16, #tpu.memory_space<vmem>>, vector<24x256xbf16>
    %cst_13 = arith.constant dense<0.000000e+00> : vector<128x256xf32>
    %13 = tpu.matmul %0, %12, %cst_13 {dimension_numbers = #tpu.dot_dimension_numbers<[1], [0], [0], [1], [0, 0, 1, 1], [], []>} : vector<128x24xbf16>, vector<24x256xbf16>, vector<128x256xf32> -> vector<128x256xf32>
    %c0_14 = arith.constant 0 : index
    %c0_15 = arith.constant 0 : index
    %14 = vector.load %arg7[%c0_14, %c0_15] : memref<4x256xbf16, #tpu.memory_space<vmem>>, vector<4x256xbf16>
    %cst_16 = arith.constant dense<0.000000e+00> : vector<128x256xf32>
    %15 = tpu.matmul %1, %14, %cst_16 {dimension_numbers = #tpu.dot_dimension_numbers<[1], [0], [0], [1], [0, 0, 1, 1], [], []>} : vector<128x4xbf16>, vector<4x256xbf16>, vector<128x256xf32> -> vector<128x256xf32>
    %16 = arith.addf %13, %15 : vector<128x256xf32>
    %c0_17 = arith.constant 0 : index
    %c0_18 = arith.constant 0 : index
    %17 = vector.load %arg8[%c0_17, %c0_18] : memref<1x256xf32, #tpu.memory_space<vmem>>, vector<1x256xf32>
    %18 = vector.broadcast %17 : vector<1x256xf32> to vector<128x256xf32>
    %19 = arith.addf %16, %18 : vector<128x256xf32>
    %c0_19 = arith.constant 0 : index
    %c0_20 = arith.constant 0 : index
    %20 = vector.load %arg9[%c0_19, %c0_20] : memref<1x256xf32, #tpu.memory_space<vmem>>, vector<1x256xf32>
    %c0_21 = arith.constant 0 : index
    %c0_22 = arith.constant 0 : index
    %21 = vector.load %arg10[%c0_21, %c0_22] : memref<1x256xf32, #tpu.memory_space<vmem>>, vector<1x256xf32>
    %cst_23 = arith.constant dense<0.000000e+00> : vector<128xf32>
    %22 = vector.multi_reduction <add>, %19, %cst_23 [1] : vector<128x256xf32> to vector<128xf32>
    %23 = vector.shape_cast %22 : vector<128xf32> to vector<128x1xf32>
    %cst_24 = arith.constant 2.560000e+02 : f32
    %24 = vector.broadcast %cst_24 : f32 to vector<128x1xf32>
    %25 = arith.divf %23, %24 : vector<128x1xf32>
    %26 = vector.broadcast %25 : vector<128x1xf32> to vector<128x256xf32>
    %27 = arith.subf %19, %26 : vector<128x256xf32>
    %28 = arith.mulf %27, %27 : vector<128x256xf32>
    %cst_25 = arith.constant dense<0.000000e+00> : vector<128xf32>
    %29 = vector.multi_reduction <add>, %28, %cst_25 [1] : vector<128x256xf32> to vector<128xf32>
    %30 = vector.shape_cast %29 : vector<128xf32> to vector<128x1xf32>
    %cst_26 = arith.constant 2.560000e+02 : f32
    %31 = vector.broadcast %cst_26 : f32 to vector<128x1xf32>
    %32 = arith.divf %30, %31 : vector<128x1xf32>
    %cst_27 = arith.constant 9.99999974E-6 : f32
    %33 = vector.broadcast %cst_27 : f32 to vector<128x1xf32>
    %34 = arith.addf %32, %33 : vector<128x1xf32>
    %35 = math.rsqrt %34 : vector<128x1xf32>
    %36 = vector.broadcast %35 : vector<128x1xf32> to vector<128x256xf32>
    %37 = vector.broadcast %20 : vector<1x256xf32> to vector<128x256xf32>
    %38 = arith.mulf %36, %37 : vector<128x256xf32>
    %39 = vector.broadcast %25 : vector<128x1xf32> to vector<128x256xf32>
    %40 = arith.subf %19, %39 : vector<128x256xf32>
    %41 = arith.mulf %40, %38 : vector<128x256xf32>
    %42 = vector.broadcast %21 : vector<1x256xf32> to vector<128x256xf32>
    %43 = arith.addf %41, %42 : vector<128x256xf32>
    %cst_28 = arith.constant 0.000000e+00 : f32
    %44 = vector.broadcast %cst_28 : f32 to vector<128x256xf32>
    %45 = arith.maximumf %43, %44 : vector<128x256xf32>
    %46 = arith.truncf %45 : vector<128x256xf32> to vector<128x256xbf16>
    %c0_29 = arith.constant 0 : index
    %c0_30 = arith.constant 0 : index
    %47 = vector.load %arg11[%c0_29, %c0_30] : memref<256x256xbf16, #tpu.memory_space<vmem>>, vector<256x256xbf16>
    %cst_31 = arith.constant dense<0.000000e+00> : vector<128x256xf32>
    %48 = tpu.matmul %46, %47, %cst_31 {dimension_numbers = #tpu.dot_dimension_numbers<[1], [0], [0], [1], [0, 0, 1, 1], [], []>} : vector<128x256xbf16>, vector<256x256xbf16>, vector<128x256xf32> -> vector<128x256xf32>
    %c0_32 = arith.constant 0 : index
    %c0_33 = arith.constant 0 : index
    %49 = vector.load %arg12[%c0_32, %c0_33] : memref<1x256xf32, #tpu.memory_space<vmem>>, vector<1x256xf32>
    %50 = vector.broadcast %49 : vector<1x256xf32> to vector<128x256xf32>
    %51 = arith.addf %48, %50 : vector<128x256xf32>
    %c0_34 = arith.constant 0 : index
    %c0_35 = arith.constant 0 : index
    %52 = vector.load %arg13[%c0_34, %c0_35] : memref<1x256xf32, #tpu.memory_space<vmem>>, vector<1x256xf32>
    %c0_36 = arith.constant 0 : index
    %c0_37 = arith.constant 0 : index
    %53 = vector.load %arg14[%c0_36, %c0_37] : memref<1x256xf32, #tpu.memory_space<vmem>>, vector<1x256xf32>
    %cst_38 = arith.constant dense<0.000000e+00> : vector<128xf32>
    %54 = vector.multi_reduction <add>, %51, %cst_38 [1] : vector<128x256xf32> to vector<128xf32>
    %55 = vector.shape_cast %54 : vector<128xf32> to vector<128x1xf32>
    %cst_39 = arith.constant 2.560000e+02 : f32
    %56 = vector.broadcast %cst_39 : f32 to vector<128x1xf32>
    %57 = arith.divf %55, %56 : vector<128x1xf32>
    %58 = vector.broadcast %57 : vector<128x1xf32> to vector<128x256xf32>
    %59 = arith.subf %51, %58 : vector<128x256xf32>
    %60 = arith.mulf %59, %59 : vector<128x256xf32>
    %cst_40 = arith.constant dense<0.000000e+00> : vector<128xf32>
    %61 = vector.multi_reduction <add>, %60, %cst_40 [1] : vector<128x256xf32> to vector<128xf32>
    %62 = vector.shape_cast %61 : vector<128xf32> to vector<128x1xf32>
    %cst_41 = arith.constant 2.560000e+02 : f32
    %63 = vector.broadcast %cst_41 : f32 to vector<128x1xf32>
    %64 = arith.divf %62, %63 : vector<128x1xf32>
    %cst_42 = arith.constant 9.99999974E-6 : f32
    %65 = vector.broadcast %cst_42 : f32 to vector<128x1xf32>
    %66 = arith.addf %64, %65 : vector<128x1xf32>
    %67 = math.rsqrt %66 : vector<128x1xf32>
    %68 = vector.broadcast %67 : vector<128x1xf32> to vector<128x256xf32>
    %69 = vector.broadcast %52 : vector<1x256xf32> to vector<128x256xf32>
    %70 = arith.mulf %68, %69 : vector<128x256xf32>
    %71 = vector.broadcast %57 : vector<128x1xf32> to vector<128x256xf32>
    %72 = arith.subf %51, %71 : vector<128x256xf32>
    %73 = arith.mulf %72, %70 : vector<128x256xf32>
    %74 = vector.broadcast %53 : vector<1x256xf32> to vector<128x256xf32>
    %75 = arith.addf %73, %74 : vector<128x256xf32>
    %cst_43 = arith.constant 0.000000e+00 : f32
    %76 = vector.broadcast %cst_43 : f32 to vector<128x256xf32>
    %77 = arith.maximumf %75, %76 : vector<128x256xf32>
    %78 = arith.truncf %77 : vector<128x256xf32> to vector<128x256xbf16>
    %c0_44 = arith.constant 0 : index
    %c0_45 = arith.constant 0 : index
    %79 = vector.load %arg15[%c0_44, %c0_45] : memref<256x256xbf16, #tpu.memory_space<vmem>>, vector<256x256xbf16>
    %cst_46 = arith.constant dense<0.000000e+00> : vector<128x256xf32>
    %80 = tpu.matmul %78, %79, %cst_46 {dimension_numbers = #tpu.dot_dimension_numbers<[1], [0], [0], [1], [0, 0, 1, 1], [], []>} : vector<128x256xbf16>, vector<256x256xbf16>, vector<128x256xf32> -> vector<128x256xf32>
    %c0_47 = arith.constant 0 : index
    %c0_48 = arith.constant 0 : index
    %81 = vector.load %arg16[%c0_47, %c0_48] : memref<1x256xf32, #tpu.memory_space<vmem>>, vector<1x256xf32>
    %82 = vector.broadcast %81 : vector<1x256xf32> to vector<128x256xf32>
    %83 = arith.addf %80, %82 : vector<128x256xf32>
    %c0_49 = arith.constant 0 : index
    %c0_50 = arith.constant 0 : index
    %84 = vector.load %arg17[%c0_49, %c0_50] : memref<1x256xf32, #tpu.memory_space<vmem>>, vector<1x256xf32>
    %c0_51 = arith.constant 0 : index
    %c0_52 = arith.constant 0 : index
    %85 = vector.load %arg18[%c0_51, %c0_52] : memref<1x256xf32, #tpu.memory_space<vmem>>, vector<1x256xf32>
    %cst_53 = arith.constant dense<0.000000e+00> : vector<128xf32>
    %86 = vector.multi_reduction <add>, %83, %cst_53 [1] : vector<128x256xf32> to vector<128xf32>
    %87 = vector.shape_cast %86 : vector<128xf32> to vector<128x1xf32>
    %cst_54 = arith.constant 2.560000e+02 : f32
    %88 = vector.broadcast %cst_54 : f32 to vector<128x1xf32>
    %89 = arith.divf %87, %88 : vector<128x1xf32>
    %90 = vector.broadcast %89 : vector<128x1xf32> to vector<128x256xf32>
    %91 = arith.subf %83, %90 : vector<128x256xf32>
    %92 = arith.mulf %91, %91 : vector<128x256xf32>
    %cst_55 = arith.constant dense<0.000000e+00> : vector<128xf32>
    %93 = vector.multi_reduction <add>, %92, %cst_55 [1] : vector<128x256xf32> to vector<128xf32>
    %94 = vector.shape_cast %93 : vector<128xf32> to vector<128x1xf32>
    %cst_56 = arith.constant 2.560000e+02 : f32
    %95 = vector.broadcast %cst_56 : f32 to vector<128x1xf32>
    %96 = arith.divf %94, %95 : vector<128x1xf32>
    %cst_57 = arith.constant 9.99999974E-6 : f32
    %97 = vector.broadcast %cst_57 : f32 to vector<128x1xf32>
    %98 = arith.addf %96, %97 : vector<128x1xf32>
    %99 = math.rsqrt %98 : vector<128x1xf32>
    %100 = vector.broadcast %99 : vector<128x1xf32> to vector<128x256xf32>
    %101 = vector.broadcast %84 : vector<1x256xf32> to vector<128x256xf32>
    %102 = arith.mulf %100, %101 : vector<128x256xf32>
    %103 = vector.broadcast %89 : vector<128x1xf32> to vector<128x256xf32>
    %104 = arith.subf %83, %103 : vector<128x256xf32>
    %105 = arith.mulf %104, %102 : vector<128x256xf32>
    %106 = vector.broadcast %85 : vector<1x256xf32> to vector<128x256xf32>
    %107 = arith.addf %105, %106 : vector<128x256xf32>
    %cst_58 = arith.constant 0.000000e+00 : f32
    %108 = vector.broadcast %cst_58 : f32 to vector<128x256xf32>
    %109 = arith.maximumf %107, %108 : vector<128x256xf32>
    %110 = arith.addf %109, %11 : vector<128x256xf32>
    %c0_59 = arith.constant 0 : index
    %c0_60 = arith.constant 0 : index
    %111 = vector.load %arg19[%c0_59, %c0_60] : memref<1x256xf32, #tpu.memory_space<vmem>>, vector<1x256xf32>
    %112 = vector.broadcast %111 : vector<1x256xf32> to vector<128x256xf32>
    %113 = arith.mulf %110, %112 : vector<128x256xf32>
    %cst_61 = arith.constant dense<0.000000e+00> : vector<128xf32>
    %114 = vector.multi_reduction <add>, %113, %cst_61 [1] : vector<128x256xf32> to vector<128xf32>
    %115 = vector.shape_cast %114 : vector<128xf32> to vector<128x1xf32>
    %c0_62 = arith.constant 0 : index
    %c0_63 = arith.constant 0 : index
    %116 = memref.load %arg20[%c0_62, %c0_63] : memref<1x1xf32, #tpu.memory_space<smem>>
    %117 = vector.broadcast %116 : f32 to vector<128x1xf32>
    %118 = arith.addf %115, %117 : vector<128x1xf32>
    %c0_64 = arith.constant 0 : index
    %c0_65 = arith.constant 0 : index
    %119 = vector.load %arg21[%c0_64, %c0_65] : memref<128x1xf32, #tpu.memory_space<vmem>>, vector<128x1xf32>
    tpu.vector_store %arg21[%c0_64, %c0_65], %118 {strides = array<i32>} : memref<128x1xf32, #tpu.memory_space<vmem>>, vector<128x1xf32>,
    return
  }
  func.func @transform_0(%arg0: i32) -> (i32, i32) {
    %c0_i32 = arith.constant 0 : i32
    %c0_i32_0 = arith.constant 0 : i32
    return %arg0, %c0_i32 : i32, i32
  }
  func.func @transform_1(%arg0: i32) -> (i32, i32) {
    %c0_i32 = arith.constant 0 : i32
    %c0_i32_0 = arith.constant 0 : i32
    return %arg0, %c0_i32 : i32, i32
  }
  func.func @transform_2(%arg0: i32) -> (i32, i32) {
    %c0_i32 = arith.constant 0 : i32
    %c0_i32_0 = arith.constant 0 : i32
    %c0_i32_1 = arith.constant 0 : i32
    return %c0_i32, %c0_i32_0 : i32, i32
  }
  func.func @transform_3(%arg0: i32) -> (i32, i32) {
    %c0_i32 = arith.constant 0 : i32
    %c0_i32_0 = arith.constant 0 : i32
    %c0_i32_1 = arith.constant 0 : i32
    return %c0_i32, %c0_i32_0 : i32, i32
  }
  func.func @transform_4(%arg0: i32) -> (i32, i32) {
    %c0_i32 = arith.constant 0 : i32
    %c0_i32_0 = arith.constant 0 : i32
    %c0_i32_1 = arith.constant 0 : i32
    return %c0_i32, %c0_i32_0 : i32, i32
  }
  func.func @transform_5(%arg0: i32) -> (i32, i32) {
    %c0_i32 = arith.constant 0 : i32
    %c0_i32_0 = arith.constant 0 : i32
    %c0_i32_1 = arith.constant 0 : i32
    return %c0_i32, %c0_i32_0 : i32, i32
  }
  func.func @transform_6(%arg0: i32) -> (i32, i32) {
    %c0_i32 = arith.constant 0 : i32
    %c0_i32_0 = arith.constant 0 : i32
    %c0_i32_1 = arith.constant 0 : i32
    return %c0_i32, %c0_i32_0 : i32, i32
  }
  func.func @transform_7(%arg0: i32) -> (i32, i32) {
    %c0_i32 = arith.constant 0 : i32
    %c0_i32_0 = arith.constant 0 : i32
    %c0_i32_1 = arith.constant 0 : i32
    return %c0_i32, %c0_i32_0 : i32, i32
  }
  func.func @transform_8(%arg0: i32) -> (i32, i32) {
    %c0_i32 = arith.constant 0 : i32
    %c0_i32_0 = arith.constant 0 : i32
    %c0_i32_1 = arith.constant 0 : i32
    return %c0_i32, %c0_i32_0 : i32, i32
  }
  func.func @transform_9(%arg0: i32) -> (i32, i32) {
    %c0_i32 = arith.constant 0 : i32
    %c0_i32_0 = arith.constant 0 : i32
    %c0_i32_1 = arith.constant 0 : i32
    return %c0_i32, %c0_i32_0 : i32, i32
  }
  func.func @transform_10(%arg0: i32) -> (i32, i32) {
    %c0_i32 = arith.constant 0 : i32
    %c0_i32_0 = arith.constant 0 : i32
    %c0_i32_1 = arith.constant 0 : i32
    return %c0_i32, %c0_i32_0 : i32, i32
  }
  func.func @transform_11(%arg0: i32) -> (i32, i32) {
    %c0_i32 = arith.constant 0 : i32
    %c0_i32_0 = arith.constant 0 : i32
    %c0_i32_1 = arith.constant 0 : i32
    return %c0_i32, %c0_i32_0 : i32, i32
  }
  func.func @transform_12(%arg0: i32) -> (i32, i32) {
    %c0_i32 = arith.constant 0 : i32
    %c0_i32_0 = arith.constant 0 : i32
    %c0_i32_1 = arith.constant 0 : i32
    return %c0_i32, %c0_i32_0 : i32, i32
  }
  func.func @transform_13(%arg0: i32) -> (i32, i32) {
    %c0_i32 = arith.constant 0 : i32
    %c0_i32_0 = arith.constant 0 : i32
    %c0_i32_1 = arith.constant 0 : i32
    return %c0_i32, %c0_i32_0 : i32, i32
  }
  func.func @transform_14(%arg0: i32) -> (i32, i32) {
    %c0_i32 = arith.constant 0 : i32
    %c0_i32_0 = arith.constant 0 : i32
    %c0_i32_1 = arith.constant 0 : i32
    return %c0_i32, %c0_i32_0 : i32, i32
  }
  func.func @transform_15(%arg0: i32) -> (i32, i32) {
    %c0_i32 = arith.constant 0 : i32
    %c0_i32_0 = arith.constant 0 : i32
    %c0_i32_1 = arith.constant 0 : i32
    return %c0_i32, %c0_i32_0 : i32, i32
  }
  func.func @transform_16(%arg0: i32) -> (i32, i32) {
    %c0_i32 = arith.constant 0 : i32
    %c0_i32_0 = arith.constant 0 : i32
    %c0_i32_1 = arith.constant 0 : i32
    return %c0_i32, %c0_i32_0 : i32, i32
  }
  func.func @transform_17(%arg0: i32) -> (i32, i32) {
    %c0_i32 = arith.constant 0 : i32
    %c0_i32_0 = arith.constant 0 : i32
    %c0_i32_1 = arith.constant 0 : i32
    return %c0_i32, %c0_i32_0 : i32, i32
  }
  func.func @transform_18(%arg0: i32) -> (i32, i32) {
    %c0_i32 = arith.constant 0 : i32
    %c0_i32_0 = arith.constant 0 : i32
    %c0_i32_1 = arith.constant 0 : i32
    return %c0_i32, %c0_i32_0 : i32, i32
  }
  func.func @transform_19(%arg0: i32) -> (i32, i32) {
    %c0_i32 = arith.constant 0 : i32
    %c0_i32_0 = arith.constant 0 : i32
    %c0_i32_1 = arith.constant 0 : i32
    return %c0_i32, %c0_i32_0 : i32, i32
  }
  func.func @transform_20(%arg0: i32) -> (i32, i32) {
    %c0_i32 = arith.constant 0 : i32
    %c0_i32_0 = arith.constant 0 : i32
    return %arg0, %c0_i32 : i32, i32
  }
}

</mosaic_0001>

<llo_original>
// kernel: tpu_custom_call.1
$region0: #{tpu_custom_call.1}
  #allocation0 [shape = 'u32[]', space=smem, size = 0x4, offset = 0x4, fixed_abs, tag = 'smem constant byte address 0x4 - core index']
  #allocation1 [shape = 'u32[144,128]{1,0:T(1,128)}', space=vmem, size = 0x12000, scoped, tag = 'internal scratch']
  #allocation2 [shape = 'f32[1,1]{1,0:T(1,128)S(6)}', space=smem, size = 0x200, scoped, tag = 'scoped memory for tpu_custom_call.1']
  %s0 = inlined_call_operand.vmem [shape: bf16[256,24], index: 0, kind: input, shape index: {}]
  %s1 = inlined_call_operand.vmem [shape: bf16[256,4], index: 1, kind: input, shape index: {}]
  %s2 = inlined_call_operand.vmem [shape: bf16[24,256], index: 2, kind: input, shape index: {}]
  %s3 = inlined_call_operand.hbm [shape: bf16[4,256], index: 3, kind: input, shape index: {}]
  %s4 = inlined_call_operand.hbm [shape: f32[1,256], index: 4, kind: input, shape index: {}]
  %s5 = inlined_call_operand.vmem [shape: bf16[24,256], index: 5, kind: input, shape index: {}]
  %s6 = inlined_call_operand.hbm [shape: bf16[4,256], index: 6, kind: input, shape index: {}]
  %s7 = inlined_call_operand.hbm [shape: f32[1,256], index: 7, kind: input, shape index: {}]
  %s8 = inlined_call_operand.hbm [shape: f32[1,256], index: 8, kind: input, shape index: {}]
  %s9 = inlined_call_operand.hbm [shape: f32[1,256], index: 9, kind: input, shape index: {}]
  %s10 = inlined_call_operand.vmem [shape: bf16[256,256], index: 10, kind: input, shape index: {}]
  %s11 = inlined_call_operand.vmem [shape: f32[1,256], index: 11, kind: input, shape index: {}]
  %s12 = inlined_call_operand.hbm [shape: f32[1,256], index: 12, kind: input, shape index: {}]
  %s13 = inlined_call_operand.vmem [shape: f32[1,256], index: 13, kind: input, shape index: {}]
  %s14 = inlined_call_operand.hbm [shape: bf16[256,256], index: 14, kind: input, shape index: {}]
  %s15 = inlined_call_operand.vmem [shape: f32[1,256], index: 15, kind: input, shape index: {}]
  %s16 = inlined_call_operand.vmem [shape: f32[1,256], index: 16, kind: input, shape index: {}]
  %s17 = inlined_call_operand.vmem [shape: f32[1,256], index: 17, kind: input, shape index: {}]
  %s18 = inlined_call_operand.vmem [shape: f32[1,256], index: 18, kind: input, shape index: {}]
  %s19 = inlined_call_operand.<no memory space> [shape: f32[1,1], index: 19, kind: input, shape index: {}]
  %s20 = inlined_call_operand.vmem [shape: f32[256,1], index: 20, kind: output, shape index: {}]
  %s21 = sld [smem:[#allocation0]]
  $region145: #{tpu_custom_call.1} parent=0
    _
  %s23 = ssub.s32 1, %s21
  %s24 = scalar_select 0, %s23, %s21
  %25 = sst [smem:[#allocation2]] %s19
  $region1: #{tpu_custom_call.1} parent=0
    #allocation3 [shape = 'u8[2048]{0}', space=vmem, size = 0x800, scoped, tag = 'input window, operand 3, single buffered']
    #allocation4 [shape = 's32[2]{0}', space=sflag, size = 0x8, scoped, tag = 'scoped memory for tpu_custom_call.1']
    #allocation5 [shape = 'u8[1024]{0}', space=vmem, size = 0x400, scoped, tag = 'input window, operand 4, single buffered']
    #allocation6 [shape = 's32[1]{0}', space=sflag, size = 0x4, scoped, tag = 'scoped memory for tpu_custom_call.1']
    #allocation7 [shape = 'u8[2048]{0}', space=vmem, size = 0x800, scoped, tag = 'input window, operand 6, single buffered']
    #allocation8 [shape = 'u8[1024]{0}', space=vmem, size = 0x400, scoped, tag = 'input window, operand 7, single buffered']
    #allocation9 [shape = 's32[1]{0}', space=sflag, size = 0x4, scoped, tag = 'scoped memory for tpu_custom_call.1']
    #allocation10 [shape = 'u8[1024]{0}', space=vmem, size = 0x400, scoped, tag = 'input window, operand 8, single buffered']
    #allocation11 [shape = 'u8[1024]{0}', space=vmem, size = 0x400, scoped, tag = 'input window, operand 9, single buffered']
    #allocation12 [shape = 's32[1]{0}', space=sflag, size = 0x4, scoped, tag = 'scoped memory for tpu_custom_call.1']
    #allocation13 [shape = 'u8[1024]{0}', space=vmem, size = 0x400, scoped, tag = 'input window, operand 12, single buffered']
    #allocation14 [shape = 'u8[131072]{0}', space=vmem, size = 0x20000, scoped, tag = 'input window, operand 14, single buffered']
    #allocation15 [shape = 's32[1]{0}', space=sflag, size = 0x4, scoped, tag = 'scoped memory for tpu_custom_call.1']
    %26 = vsyncpa [#allocation4], 0
    %27 = vsyncpa [#allocation6], 0
    %28 = vsyncpa [#allocation9], 0
    %29 = vsyncpa [#allocation12], 0
    %30 = vsyncpa [#allocation15], 0
    loop: start=0, step=1, limit=4
    $region2: #{tpu_custom_call.1} parent=1 // loop_pre_header
      _
    $region3: #{tpu_custom_call.1} parent=1 // loop_header
      %s32 = sphi 0, %s36
      %p33 = scmp.ge.s32.totalorder %s32, 4
      %s42 = sphi 0, %s44
      %s45 = sphi 0, %s42
      %s46 = sphi 0, %s45
      %s62 = sphi 0, %s46
      %s68 = sphi 0, %s70
      %s71 = sphi 0, %s68
      %s72 = sphi 0, %s71
      %s88 = sphi 0, %s72
      %s92 = sphi 0, %s92
      %s94 = sphi 0, %s92
      %s95 = sphi 0, %s94
      %s109 = sphi 0, %s95
      %s113 = sphi 0, %s113
      %s115 = sphi 0, %s113
      %s116 = sphi 0, %s115
      %s130 = sphi 0, %s116
      %s134 = sphi 0, %s134
      %s136 = sphi 0, %s134
      %s137 = sphi 0, %s136
      %s151 = sphi 0, %s137
      %s155 = sphi 0, %s155
      %s157 = sphi 0, %s155
      %s158 = sphi 0, %s157
      %s172 = sphi 0, %s158
      %s176 = sphi 0, %s176
      %s178 = sphi 0, %s176
      %s179 = sphi 0, %s178
      %s193 = sphi 0, %s179
      %s197 = sphi 0, %s197
      %s199 = sphi 0, %s197
      %s200 = sphi 0, %s199
      %s214 = sphi 0, %s200
      %s218 = sphi 0, %s218
      %s220 = sphi 0, %s218
      %s221 = sphi 0, %s220
      %s235 = sphi 0, %s221
      %s239 = sphi 0, %s239
      %s241 = sphi 0, %s239
      %s242 = sphi 0, %s241
      %s256 = sphi 0, %s242
      %s260 = sphi 0, %s260
      %s262 = sphi 0, %s260
      %s263 = sphi 0, %s262
      %s277 = sphi 0, %s263
      %s281 = sphi 0, %s281
      %s283 = sphi 0, %s281
      %s284 = sphi 0, %s283
      %s298 = sphi 0, %s284
      %s302 = sphi 0, %s302
      %s304 = sphi 0, %s302
      %s305 = sphi 0, %s304
      %s319 = sphi 0, %s305
      %s323 = sphi 0, %s323
      %s325 = sphi 0, %s323
      %s326 = sphi 0, %s325
      %s340 = sphi 0, %s326
      %s344 = sphi 0, %s344
      %s346 = sphi 0, %s344
      %s347 = sphi 0, %s346
      %s361 = sphi 0, %s347
      %s365 = sphi 0, %s365
      %s367 = sphi 0, %s365
      %s368 = sphi 0, %s367
      %s382 = sphi 0, %s368
      %s386 = sphi 0, %s386
      %s388 = sphi 0, %s386
      %s389 = sphi 0, %s388
      %s403 = sphi 0, %s389
      %s407 = sphi 0, %s407
      %s409 = sphi 0, %s407
      %s410 = sphi 0, %s409
      %s424 = sphi 0, %s410
      %s428 = sphi 0, %s428
      %s430 = sphi 0, %s428
      %s431 = sphi 0, %s430
      %s445 = sphi 0, %s431
      %s449 = sphi 0, %s449
      %s451 = sphi 0, %s449
      %s452 = sphi 0, %s451
      %s466 = sphi 0, %s452
      %s472 = sphi 0, %s474
      %s475 = sphi 0, %s472
      %s476 = sphi 0, %s475
      %s492 = sphi 0, %s476
    $region4: #{tpu_custom_call.1} parent=1 // loop_header_branch
      %35 = sbr.rel (%p33) target = $region8
    $region5: #{tpu_custom_call.1} parent=1 // loop_body
      %s37 = ssub.s32 %s32, 1
      %s38 = ssub.s32 %s32, 2
      %s39 = sadd.s32 %s32, 1
      %s40 = ssub.s32 %s32, %s39
      %p41 = scmp.eq.s32.totalorder %s40, 0
      %s43 = sadd.s32 %s42, 1
      %s44 = scalar_select %p41, %s42, %s43
      %p47 = pneg %p41
      %p48 = scmp.eq.s32.totalorder %s32, 1
      %p49 = por %p47, %p48
      %p50 = scmp.ne.s32.totalorder %s42, %s45
      %p51 = scmp.eq.s32.totalorder %s32, 0
      %p52 = por %p50, %p51
      %p53 = scmp.ne.s32.totalorder %s42, %s45
      %p54 = scmp.eq.s32.totalorder %s37, 1
      %p55 = por %p53, %p54
      %p56 = scmp.ne.s32.totalorder %s45, %s46
      %p57 = scmp.eq.s32.totalorder %s37, 0
      %p58 = por %p56, %p57
      %p59 = scmp.ne.s32.totalorder %s45, %s46
      %p60 = scmp.eq.s32.totalorder %s38, 1
      %p61 = por %p59, %p60
      %p63 = scmp.ne.s32.totalorder %s46, %s62
      %p64 = scmp.eq.s32.totalorder %s38, 0
      %p65 = por %p63, %p64
      %s66 = ssub.s32 %s32, %s39
      %p67 = scmp.eq.s32.totalorder %s66, 0
      %s69 = sadd.s32 %s68, 1
      %s70 = scalar_select %p67, %s68, %s69
      %p73 = pneg %p67
      %p74 = scmp.eq.s32.totalorder %s32, 1
      %p75 = por %p73, %p74
      %p76 = scmp.ne.s32.totalorder %s68, %s71
      %p77 = scmp.eq.s32.totalorder %s32, 0
      %p78 = por %p76, %p77
      %p79 = scmp.ne.s32.totalorder %s68, %s71
      %p80 = scmp.eq.s32.totalorder %s37, 1
      %p81 = por %p79, %p80
      %p82 = scmp.ne.s32.totalorder %s71, %s72
      %p83 = scmp.eq.s32.totalorder %s37, 0
      %p84 = por %p82, %p83
      %p85 = scmp.ne.s32.totalorder %s71, %s72
      %p86 = scmp.eq.s32.totalorder %s38, 1
      %p87 = por %p85, %p86
      %p89 = scmp.ne.s32.totalorder %s72, %s88
      %p90 = scmp.eq.s32.totalorder %s38, 0
      %p91 = por %p89, %p90
      %s93 = sadd.s32 %s92, 1
      %p96 = scmp.eq.s32.totalorder %s32, 1
      %p97 = scmp.ne.s32.totalorder %s92, %s94
      %p98 = scmp.eq.s32.totalorder %s32, 0
      %p99 = por %p97, %p98
      %p100 = scmp.ne.s32.totalorder %s92, %s94
      %p101 = scmp.eq.s32.totalorder %s37, 1
      %p102 = por %p100, %p101
      %p103 = scmp.ne.s32.totalorder %s94, %s95
      %p104 = scmp.eq.s32.totalorder %s37, 0
      %p105 = por %p103, %p104
      %p106 = scmp.ne.s32.totalorder %s94, %s95
      %p107 = scmp.eq.s32.totalorder %s38, 1
      %p108 = por %p106, %p107
      %p110 = scmp.ne.s32.totalorder %s95, %s109
      %p111 = scmp.eq.s32.totalorder %s38, 0
      %p112 = por %p110, %p111
      %s114 = sadd.s32 %s113, 1
      %p117 = scmp.eq.s32.totalorder %s32, 1
      %p118 = scmp.ne.s32.totalorder %s113, %s115
      %p119 = scmp.eq.s32.totalorder %s32, 0
      %p120 = por %p118, %p119
      %p121 = scmp.ne.s32.totalorder %s113, %s115
      %p122 = scmp.eq.s32.totalorder %s37, 1
      %p123 = por %p121, %p122
      %p124 = scmp.ne.s32.totalorder %s115, %s116
      %p125 = scmp.eq.s32.totalorder %s37, 0
      %p126 = por %p124, %p125
      %p127 = scmp.ne.s32.totalorder %s115, %s116
      %p128 = scmp.eq.s32.totalorder %s38, 1
      %p129 = por %p127, %p128
      %p131 = scmp.ne.s32.totalorder %s116, %s130
      %p132 = scmp.eq.s32.totalorder %s38, 0
      %p133 = por %p131, %p132
      %s135 = sadd.s32 %s134, 1
      %p138 = scmp.eq.s32.totalorder %s32, 1
      %p139 = scmp.ne.s32.totalorder %s134, %s136
      %p140 = scmp.eq.s32.totalorder %s32, 0
      %p141 = por %p139, %p140
      %p142 = scmp.ne.s32.totalorder %s134, %s136
      %p143 = scmp.eq.s32.totalorder %s37, 1
      %p144 = por %p142, %p143
      %p145 = scmp.ne.s32.totalorder %s136, %s137
      %p146 = scmp.eq.s32.totalorder %s37, 0
      %p147 = por %p145, %p146
      %p148 = scmp.ne.s32.totalorder %s136, %s137
      %p149 = scmp.eq.s32.totalorder %s38, 1
      %p150 = por %p148, %p149
      %p152 = scmp.ne.s32.totalorder %s137, %s151
      %p153 = scmp.eq.s32.totalorder %s38, 0
      %p154 = por %p152, %p153
      %s156 = sadd.s32 %s155, 1
      %p159 = scmp.eq.s32.totalorder %s32, 1
      %p160 = scmp.ne.s32.totalorder %s155, %s157
      %p161 = scmp.eq.s32.totalorder %s32, 0
      %p162 = por %p160, %p161
      %p163 = scmp.ne.s32.totalorder %s155, %s157
      %p164 = scmp.eq.s32.totalorder %s37, 1
      %p165 = por %p163, %p164
      %p166 = scmp.ne.s32.totalorder %s157, %s158
      %p167 = scmp.eq.s32.totalorder %s37, 0
      %p168 = por %p166, %p167
      %p169 = scmp.ne.s32.totalorder %s157, %s158
      %p170 = scmp.eq.s32.totalorder %s38, 1
      %p171 = por %p169, %p170
      %p173 = scmp.ne.s32.totalorder %s158, %s172
      %p174 = scmp.eq.s32.totalorder %s38, 0
      %p175 = por %p173, %p174
      %s177 = sadd.s32 %s176, 1
      %p180 = scmp.eq.s32.totalorder %s32, 1
      %p181 = scmp.ne.s32.totalorder %s176, %s178
      %p182 = scmp.eq.s32.totalorder %s32, 0
      %p183 = por %p181, %p182
      %p184 = scmp.ne.s32.totalorder %s176, %s178
      %p185 = scmp.eq.s32.totalorder %s37, 1
      %p186 = por %p184, %p185
      %p187 = scmp.ne.s32.totalorder %s178, %s179
      %p188 = scmp.eq.s32.totalorder %s37, 0
      %p189 = por %p187, %p188
      %p190 = scmp.ne.s32.totalorder %s178, %s179
      %p191 = scmp.eq.s32.totalorder %s38, 1
      %p192 = por %p190, %p191
      %p194 = scmp.ne.s32.totalorder %s179, %s193
      %p195 = scmp.eq.s32.totalorder %s38, 0
      %p196 = por %p194, %p195
      %s198 = sadd.s32 %s197, 1
      %p201 = scmp.eq.s32.totalorder %s32, 1
      %p202 = scmp.ne.s32.totalorder %s197, %s199
      %p203 = scmp.eq.s32.totalorder %s32, 0
      %p204 = por %p202, %p203
      %p205 = scmp.ne.s32.totalorder %s197, %s199
      %p206 = scmp.eq.s32.totalorder %s37, 1
      %p207 = por %p205, %p206
      %p208 = scmp.ne.s32.totalorder %s199, %s200
      %p209 = scmp.eq.s32.totalorder %s37, 0
      %p210 = por %p208, %p209
      %p211 = scmp.ne.s32.totalorder %s199, %s200
      %p212 = scmp.eq.s32.totalorder %s38, 1
      %p213 = por %p211, %p212
      %p215 = scmp.ne.s32.totalorder %s200, %s214
      %p216 = scmp.eq.s32.totalorder %s38, 0
      %p217 = por %p215, %p216
      %s219 = sadd.s32 %s218, 1
      %p222 = scmp.eq.s32.totalorder %s32, 1
      %p223 = scmp.ne.s32.totalorder %s218, %s220
      %p224 = scmp.eq.s32.totalorder %s32, 0
      %p225 = por %p223, %p224
      %p226 = scmp.ne.s32.totalorder %s218, %s220
      %p227 = scmp.eq.s32.totalorder %s37, 1
      %p228 = por %p226, %p227
      %p229 = scmp.ne.s32.totalorder %s220, %s221
      %p230 = scmp.eq.s32.totalorder %s37, 0
      %p231 = por %p229, %p230
      %p232 = scmp.ne.s32.totalorder %s220, %s221
      %p233 = scmp.eq.s32.totalorder %s38, 1
      %p234 = por %p232, %p233
      %p236 = scmp.ne.s32.totalorder %s221, %s235
      %p237 = scmp.eq.s32.totalorder %s38, 0
      %p238 = por %p236, %p237
      %s240 = sadd.s32 %s239, 1
      %p243 = scmp.eq.s32.totalorder %s32, 1
      %p244 = scmp.ne.s32.totalorder %s239, %s241
      %p245 = scmp.eq.s32.totalorder %s32, 0
      %p246 = por %p244, %p245
      %p247 = scmp.ne.s32.totalorder %s239, %s241
      %p248 = scmp.eq.s32.totalorder %s37, 1
      %p249 = por %p247, %p248
      %p250 = scmp.ne.s32.totalorder %s241, %s242
      %p251 = scmp.eq.s32.totalorder %s37, 0
      %p252 = por %p250, %p251
      %p253 = scmp.ne.s32.totalorder %s241, %s242
      %p254 = scmp.eq.s32.totalorder %s38, 1
      %p255 = por %p253, %p254
      %p257 = scmp.ne.s32.totalorder %s242, %s256
      %p258 = scmp.eq.s32.totalorder %s38, 0
      %p259 = por %p257, %p258
      %s261 = sadd.s32 %s260, 1
      %p264 = scmp.eq.s32.totalorder %s32, 1
      %p265 = scmp.ne.s32.totalorder %s260, %s262
      %p266 = scmp.eq.s32.totalorder %s32, 0
      %p267 = por %p265, %p266
      %p268 = scmp.ne.s32.totalorder %s260, %s262
      %p269 = scmp.eq.s32.totalorder %s37, 1
      %p270 = por %p268, %p269
      %p271 = scmp.ne.s32.totalorder %s262, %s263
      %p272 = scmp.eq.s32.totalorder %s37, 0
      %p273 = por %p271, %p272
      %p274 = scmp.ne.s32.totalorder %s262, %s263
      %p275 = scmp.eq.s32.totalorder %s38, 1
      %p276 = por %p274, %p275
      %p278 = scmp.ne.s32.totalorder %s263, %s277
      %p279 = scmp.eq.s32.totalorder %s38, 0
      %p280 = por %p278, %p279
      %s282 = sadd.s32 %s281, 1
      %p285 = scmp.eq.s32.totalorder %s32, 1
      %p286 = scmp.ne.s32.totalorder %s281, %s283
      %p287 = scmp.eq.s32.totalorder %s32, 0
      %p288 = por %p286, %p287
      %p289 = scmp.ne.s32.totalorder %s281, %s283
      %p290 = scmp.eq.s32.totalorder %s37, 1
      %p291 = por %p289, %p290
      %p292 = scmp.ne.s32.totalorder %s283, %s284
      %p293 = scmp.eq.s32.totalorder %s37, 0
      %p294 = por %p292, %p293
      %p295 = scmp.ne.s32.totalorder %s283, %s284
      %p296 = scmp.eq.s32.totalorder %s38, 1
      %p297 = por %p295, %p296
      %p299 = scmp.ne.s32.totalorder %s284, %s298
      %p300 = scmp.eq.s32.totalorder %s38, 0
      %p301 = por %p299, %p300
      %s303 = sadd.s32 %s302, 1
      %p306 = scmp.eq.s32.totalorder %s32, 1
      %p307 = scmp.ne.s32.totalorder %s302, %s304
      %p308 = scmp.eq.s32.totalorder %s32, 0
      %p309 = por %p307, %p308
      %p310 = scmp.ne.s32.totalorder %s302, %s304
      %p311 = scmp.eq.s32.totalorder %s37, 1
      %p312 = por %p310, %p311
      %p313 = scmp.ne.s32.totalorder %s304, %s305
      %p314 = scmp.eq.s32.totalorder %s37, 0
      %p315 = por %p313, %p314
      %p316 = scmp.ne.s32.totalorder %s304, %s305
      %p317 = scmp.eq.s32.totalorder %s38, 1
      %p318 = por %p316, %p317
      %p320 = scmp.ne.s32.totalorder %s305, %s319
      %p321 = scmp.eq.s32.totalorder %s38, 0
      %p322 = por %p320, %p321
      %s324 = sadd.s32 %s323, 1
      %p327 = scmp.eq.s32.totalorder %s32, 1
      %p328 = scmp.ne.s32.totalorder %s323, %s325
      %p329 = scmp.eq.s32.totalorder %s32, 0
      %p330 = por %p328, %p329
      %p331 = scmp.ne.s32.totalorder %s323, %s325
      %p332 = scmp.eq.s32.totalorder %s37, 1
      %p333 = por %p331, %p332
      %p334 = scmp.ne.s32.totalorder %s325, %s326
      %p335 = scmp.eq.s32.totalorder %s37, 0
      %p336 = por %p334, %p335
      %p337 = scmp.ne.s32.totalorder %s325, %s326
      %p338 = scmp.eq.s32.totalorder %s38, 1
      %p339 = por %p337, %p338
      %p341 = scmp.ne.s32.totalorder %s326, %s340
      %p342 = scmp.eq.s32.totalorder %s38, 0
      %p343 = por %p341, %p342
      %s345 = sadd.s32 %s344, 1
      %p348 = scmp.eq.s32.totalorder %s32, 1
      %p349 = scmp.ne.s32.totalorder %s344, %s346
      %p350 = scmp.eq.s32.totalorder %s32, 0
      %p351 = por %p349, %p350
      %p352 = scmp.ne.s32.totalorder %s344, %s346
      %p353 = scmp.eq.s32.totalorder %s37, 1
      %p354 = por %p352, %p353
      %p355 = scmp.ne.s32.totalorder %s346, %s347
      %p356 = scmp.eq.s32.totalorder %s37, 0
      %p357 = por %p355, %p356
      %p358 = scmp.ne.s32.totalorder %s346, %s347
      %p359 = scmp.eq.s32.totalorder %s38, 1
      %p360 = por %p358, %p359
      %p362 = scmp.ne.s32.totalorder %s347, %s361
      %p363 = scmp.eq.s32.totalorder %s38, 0
      %p364 = por %p362, %p363
      %s366 = sadd.s32 %s365, 1
      %p369 = scmp.eq.s32.totalorder %s32, 1
      %p370 = scmp.ne.s32.totalorder %s365, %s367
      %p371 = scmp.eq.s32.totalorder %s32, 0
      %p372 = por %p370, %p371
      %p373 = scmp.ne.s32.totalorder %s365, %s367
      %p374 = scmp.eq.s32.totalorder %s37, 1
      %p375 = por %p373, %p374
      %p376 = scmp.ne.s32.totalorder %s367, %s368
      %p377 = scmp.eq.s32.totalorder %s37, 0
      %p378 = por %p376, %p377
      %p379 = scmp.ne.s32.totalorder %s367, %s368
      %p380 = scmp.eq.s32.totalorder %s38, 1
      %p381 = por %p379, %p380
      %p383 = scmp.ne.s32.totalorder %s368, %s382
      %p384 = scmp.eq.s32.totalorder %s38, 0
      %p385 = por %p383, %p384
      %s387 = sadd.s32 %s386, 1
      %p390 = scmp.eq.s32.totalorder %s32, 1
      %p391 = scmp.ne.s32.totalorder %s386, %s388
      %p392 = scmp.eq.s32.totalorder %s32, 0
      %p393 = por %p391, %p392
      %p394 = scmp.ne.s32.totalorder %s386, %s388
      %p395 = scmp.eq.s32.totalorder %s37, 1
      %p396 = por %p394, %p395
      %p397 = scmp.ne.s32.totalorder %s388, %s389
      %p398 = scmp.eq.s32.totalorder %s37, 0
      %p399 = por %p397, %p398
      %p400 = scmp.ne.s32.totalorder %s388, %s389
      %p401 = scmp.eq.s32.totalorder %s38, 1
      %p402 = por %p400, %p401
      %p404 = scmp.ne.s32.totalorder %s389, %s403
      %p405 = scmp.eq.s32.totalorder %s38, 0
      %p406 = por %p404, %p405
      %s408 = sadd.s32 %s407, 1
      %p411 = scmp.eq.s32.totalorder %s32, 1
      %p412 = scmp.ne.s32.totalorder %s407, %s409
      %p413 = scmp.eq.s32.totalorder %s32, 0
      %p414 = por %p412, %p413
      %p415 = scmp.ne.s32.totalorder %s407, %s409
      %p416 = scmp.eq.s32.totalorder %s37, 1
      %p417 = por %p415, %p416
      %p418 = scmp.ne.s32.totalorder %s409, %s410
      %p419 = scmp.eq.s32.totalorder %s37, 0
      %p420 = por %p418, %p419
      %p421 = scmp.ne.s32.totalorder %s409, %s410
      %p422 = scmp.eq.s32.totalorder %s38, 1
      %p423 = por %p421, %p422
      %p425 = scmp.ne.s32.totalorder %s410, %s424
      %p426 = scmp.eq.s32.totalorder %s38, 0
      %p427 = por %p425, %p426
      %s429 = sadd.s32 %s428, 1
      %p432 = scmp.eq.s32.totalorder %s32, 1
      %p433 = scmp.ne.s32.totalorder %s428, %s430
      %p434 = scmp.eq.s32.totalorder %s32, 0
      %p435 = por %p433, %p434
      %p436 = scmp.ne.s32.totalorder %s428, %s430
      %p437 = scmp.eq.s32.totalorder %s37, 1
      %p438 = por %p436, %p437
      %p439 = scmp.ne.s32.totalorder %s430, %s431
      %p440 = scmp.eq.s32.totalorder %s37, 0
      %p441 = por %p439, %p440
      %p442 = scmp.ne.s32.totalorder %s430, %s431
      %p443 = scmp.eq.s32.totalorder %s38, 1
      %p444 = por %p442, %p443
      %p446 = scmp.ne.s32.totalorder %s431, %s445
      %p447 = scmp.eq.s32.totalorder %s38, 0
      %p448 = por %p446, %p447
      %s450 = sadd.s32 %s449, 1
      %p453 = scmp.eq.s32.totalorder %s32, 1
      %p454 = scmp.ne.s32.totalorder %s449, %s451
      %p455 = scmp.eq.s32.totalorder %s32, 0
      %p456 = por %p454, %p455
      %p457 = scmp.ne.s32.totalorder %s449, %s451
      %p458 = scmp.eq.s32.totalorder %s37, 1
      %p459 = por %p457, %p458
      %p460 = scmp.ne.s32.totalorder %s451, %s452
      %p461 = scmp.eq.s32.totalorder %s37, 0
      %p462 = por %p460, %p461
      %p463 = scmp.ne.s32.totalorder %s451, %s452
      %p464 = scmp.eq.s32.totalorder %s38, 1
      %p465 = por %p463, %p464
      %p467 = scmp.ne.s32.totalorder %s452, %s466
      %p468 = scmp.eq.s32.totalorder %s38, 0
      %p469 = por %p467, %p468
      %s470 = ssub.s32 %s32, %s39
      %p471 = scmp.eq.s32.totalorder %s470, 0
      %s473 = sadd.s32 %s472, 1
      %s474 = scalar_select %p471, %s472, %s473
      %p477 = pneg %p471
      %p478 = scmp.eq.s32.totalorder %s32, 1
      %p479 = por %p477, %p478
      %p480 = scmp.ne.s32.totalorder %s472, %s475
      %p481 = scmp.eq.s32.totalorder %s32, 0
      %p482 = por %p480, %p481
      %p483 = scmp.ne.s32.totalorder %s472, %s475
      %p484 = scmp.eq.s32.totalorder %s37, 1
      %p485 = por %p483, %p484
      %p486 = scmp.ne.s32.totalorder %s475, %s476
      %p487 = scmp.eq.s32.totalorder %s37, 0
      %p488 = por %p486, %p487
      %p489 = scmp.ne.s32.totalorder %s475, %s476
      %p490 = scmp.eq.s32.totalorder %s38, 1
      %p491 = por %p489, %p490
      %p493 = scmp.ne.s32.totalorder %s476, %s492
      %p494 = scmp.eq.s32.totalorder %s38, 0
      %p495 = por %p493, %p494
      %p496 = scmp.le.s32.totalorder 1, %s32
      %p497 = scmp.lt.s32.totalorder %s32, 3
      %p498 = pnand %p496, %p497
      %p499 = pneg %p498
      // Predicated region
      $region9: #{tpu_custom_call.1} parent=5 // pred_check
        _
      $region10: #{tpu_custom_call.1} parent=5 // pred_check_branch
        %501 = sbr.rel (%p498) target = $region12
      $region11: #{tpu_custom_call.1} parent=5 // pred_region
        %s502 = ssub.s32 %s32, 1
        // Predicated region
        $region13: #{tpu_custom_call.1} parent=11 // pred_check
          %p503 = pneg %p105
        $region14: #{tpu_custom_call.1} parent=11 // pred_check_branch
          %505 = sbr.rel (%p503) target = $region16
        $region15: #{tpu_custom_call.1} parent=11 // pred_region
          _
        $region16: #{tpu_custom_call.1} parent=11 // pred_fallthru
          _
        // Predicated region
        $region17: #{tpu_custom_call.1} parent=11 // pred_check
          %p506 = pneg %p126
        $region18: #{tpu_custom_call.1} parent=11 // pred_check_branch
          %508 = sbr.rel (%p506) target = $region20
        $region19: #{tpu_custom_call.1} parent=11 // pred_region
          %s510 = ssub.s32 64, 64
          %511 = vsyncadd [#allocation4], %s510
          %s513 = sshll.u32 [#allocation3], 4
          %s514 = int_to_ptr.vmem [resolvable:$true] %s513
          %516 = dma.hbm_to_vmem [thread:$0]  %s3, 64, %s514, [#allocation4]
        $region20: #{tpu_custom_call.1} parent=11 // pred_fallthru
          _
        // Predicated region
        $region21: #{tpu_custom_call.1} parent=11 // pred_check
          %p517 = pneg %p147
        $region22: #{tpu_custom_call.1} parent=11 // pred_check_branch
          %519 = sbr.rel (%p517) target = $region24
        $region23: #{tpu_custom_call.1} parent=11 // pred_region
          %s521 = ssub.s32 32, 32
          %522 = vsyncadd [#allocation6], %s521
          %s524 = sshll.u32 [#allocation5], 4
          %s525 = int_to_ptr.vmem [resolvable:$true] %s524
          %527 = dma.hbm_to_vmem [thread:$0]  %s4, 32, %s525, [#allocation6]
        $region24: #{tpu_custom_call.1} parent=11 // pred_fallthru
          _
        // Predicated region
        $region25: #{tpu_custom_call.1} parent=11 // pred_check
          %p528 = pneg %p168
        $region26: #{tpu_custom_call.1} parent=11 // pred_check_branch
          %530 = sbr.rel (%p528) target = $region28
        $region27: #{tpu_custom_call.1} parent=11 // pred_region
          _
        $region28: #{tpu_custom_call.1} parent=11 // pred_fallthru
          _
        // Predicated region
        $region29: #{tpu_custom_call.1} parent=11 // pred_check
          %p531 = pneg %p189
        $region30: #{tpu_custom_call.1} parent=11 // pred_check_branch
          %533 = sbr.rel (%p531) target = $region32
        $region31: #{tpu_custom_call.1} parent=11 // pred_region
          %s535 = ssub.s32 64, 64
          %536 = vsyncadd [#allocation6], %s535
          %s538 = sshll.u32 [#allocation7], 4
          %s539 = int_to_ptr.vmem [resolvable:$true] %s538
          %541 = dma.hbm_to_vmem [thread:$0]  %s6, 64, %s539, [#allocation6]
        $region32: #{tpu_custom_call.1} parent=11 // pred_fallthru
          _
        // Predicated region
        $region33: #{tpu_custom_call.1} parent=11 // pred_check
          %p542 = pneg %p210
        $region34: #{tpu_custom_call.1} parent=11 // pred_check_branch
          %544 = sbr.rel (%p542) target = $region36
        $region35: #{tpu_custom_call.1} parent=11 // pred_region
          %s546 = ssub.s32 32, 32
          %547 = vsyncadd [#allocation9], %s546
          %s549 = sshll.u32 [#allocation8], 4
          %s550 = int_to_ptr.vmem [resolvable:$true] %s549
          %552 = dma.hbm_to_vmem [thread:$0]  %s7, 32, %s550, [#allocation9]
        $region36: #{tpu_custom_call.1} parent=11 // pred_fallthru
          _
        // Predicated region
        $region37: #{tpu_custom_call.1} parent=11 // pred_check
          %p553 = pneg %p231
        $region38: #{tpu_custom_call.1} parent=11 // pred_check_branch
          %555 = sbr.rel (%p553) target = $region40
        $region39: #{tpu_custom_call.1} parent=11 // pred_region
          %s557 = ssub.s32 32, 32
          %558 = vsyncadd [#allocation9], %s557
          %s560 = sshll.u32 [#allocation10], 4
          %s561 = int_to_ptr.vmem [resolvable:$true] %s560
          %563 = dma.hbm_to_vmem [thread:$0]  %s8, 32, %s561, [#allocation9]
        $region40: #{tpu_custom_call.1} parent=11 // pred_fallthru
          _
        // Predicated region
        $region41: #{tpu_custom_call.1} parent=11 // pred_check
          %p564 = pneg %p252
        $region42: #{tpu_custom_call.1} parent=11 // pred_check_branch
          %566 = sbr.rel (%p564) target = $region44
        $region43: #{tpu_custom_call.1} parent=11 // pred_region
          %s568 = ssub.s32 32, 32
          %569 = vsyncadd [#allocation12], %s568
          %s571 = sshll.u32 [#allocation11], 4
          %s572 = int_to_ptr.vmem [resolvable:$true] %s571
          %574 = dma.hbm_to_vmem [thread:$0]  %s9, 32, %s572, [#allocation12]
        $region44: #{tpu_custom_call.1} parent=11 // pred_fallthru
          _
        // Predicated region
        $region45: #{tpu_custom_call.1} parent=11 // pred_check
          %p575 = pneg %p273
        $region46: #{tpu_custom_call.1} parent=11 // pred_check_branch
          %577 = sbr.rel (%p575) target = $region48
        $region47: #{tpu_custom_call.1} parent=11 // pred_region
          _
        $region48: #{tpu_custom_call.1} parent=11 // pred_fallthru
          _
        // Predicated region
        $region49: #{tpu_custom_call.1} parent=11 // pred_check
          %p578 = pneg %p294
        $region50: #{tpu_custom_call.1} parent=11 // pred_check_branch
          %580 = sbr.rel (%p578) target = $region52
        $region51: #{tpu_custom_call.1} parent=11 // pred_region
          _
        $region52: #{tpu_custom_call.1} parent=11 // pred_fallthru
          _
        // Predicated region
        $region53: #{tpu_custom_call.1} parent=11 // pred_check
          %p581 = pneg %p315
        $region54: #{tpu_custom_call.1} parent=11 // pred_check_branch
          %583 = sbr.rel (%p581) target = $region56
        $region55: #{tpu_custom_call.1} parent=11 // pred_region
          %s585 = ssub.s32 32, 32
          %586 = vsyncadd [#allocation12], %s585
          %s588 = sshll.u32 [#allocation13], 4
          %s589 = int_to_ptr.vmem [resolvable:$true] %s588
          %591 = dma.hbm_to_vmem [thread:$0]  %s12, 32, %s589, [#allocation12]
        $region56: #{tpu_custom_call.1} parent=11 // pred_fallthru
          _
        // Predicated region
        $region57: #{tpu_custom_call.1} parent=11 // pred_check
          %p592 = pneg %p336
        $region58: #{tpu_custom_call.1} parent=11 // pred_check_branch
          %594 = sbr.rel (%p592) target = $region60
        $region59: #{tpu_custom_call.1} parent=11 // pred_region
          _
        $region60: #{tpu_custom_call.1} parent=11 // pred_fallthru
          _
        // Predicated region
        $region61: #{tpu_custom_call.1} parent=11 // pred_check
          %p595 = pneg %p357
        $region62: #{tpu_custom_call.1} parent=11 // pred_check_branch
          %597 = sbr.rel (%p595) target = $region64
        $region63: #{tpu_custom_call.1} parent=11 // pred_region
          %s599 = ssub.s32 4096, 4096
          %600 = vsyncadd [#allocation15], %s599
          %s601 = sshll.u32 [#allocation14], 4
          %s602 = int_to_ptr.vmem [resolvable:$true] %s601
          %607 = dma.hbm_to_vmem [thread:$0]  %s14, 4096, %s602, [#allocation15], 128, 128, 8
        $region64: #{tpu_custom_call.1} parent=11 // pred_fallthru
          _
        // Predicated region
        $region65: #{tpu_custom_call.1} parent=11 // pred_check
          %p608 = pneg %p378
        $region66: #{tpu_custom_call.1} parent=11 // pred_check_branch
          %610 = sbr.rel (%p608) target = $region68
        $region67: #{tpu_custom_call.1} parent=11 // pred_region
          _
        $region68: #{tpu_custom_call.1} parent=11 // pred_fallthru
          _
        // Predicated region
        $region69: #{tpu_custom_call.1} parent=11 // pred_check
          %p611 = pneg %p399
        $region70: #{tpu_custom_call.1} parent=11 // pred_check_branch
          %613 = sbr.rel (%p611) target = $region72
        $region71: #{tpu_custom_call.1} parent=11 // pred_region
          _
        $region72: #{tpu_custom_call.1} parent=11 // pred_fallthru
          _
        // Predicated region
        $region73: #{tpu_custom_call.1} parent=11 // pred_check
          %p614 = pneg %p420
        $region74: #{tpu_custom_call.1} parent=11 // pred_check_branch
          %616 = sbr.rel (%p614) target = $region76
        $region75: #{tpu_custom_call.1} parent=11 // pred_region
          _
        $region76: #{tpu_custom_call.1} parent=11 // pred_fallthru
          _
        // Predicated region
        $region77: #{tpu_custom_call.1} parent=11 // pred_check
          %p617 = pneg %p441
        $region78: #{tpu_custom_call.1} parent=11 // pred_check_branch
          %619 = sbr.rel (%p617) target = $region80
        $region79: #{tpu_custom_call.1} parent=11 // pred_region
          _
        $region80: #{tpu_custom_call.1} parent=11 // pred_fallthru
          _
        // Predicated region
        $region81: #{tpu_custom_call.1} parent=11 // pred_check
          %p620 = pneg %p462
        $region82: #{tpu_custom_call.1} parent=11 // pred_check_branch
          %622 = sbr.rel (%p620) target = $region84
        $region83: #{tpu_custom_call.1} parent=11 // pred_region
          _
        $region84: #{tpu_custom_call.1} parent=11 // pred_fallthru
          _
      $region12: #{tpu_custom_call.1} parent=5 // pred_fallthru
        _
      %p623 = scmp.lt.s32.totalorder %s32, 2
      // Predicated region
      $region85: #{tpu_custom_call.1} parent=5 // pred_check
        %p624 = pneg %p623
      $region86: #{tpu_custom_call.1} parent=5 // pred_check_branch
        %626 = sbr.rel (%p624) target = $region88
      $region87: #{tpu_custom_call.1} parent=5 // pred_region
        // Predicated region
        $region89: #{tpu_custom_call.1} parent=87 // pred_check
          %p627 = pneg %p52
        $region90: #{tpu_custom_call.1} parent=87 // pred_check_branch
          %629 = sbr.rel (%p627) target = $region92
        $region91: #{tpu_custom_call.1} parent=87 // pred_region
          %s630 = smul.u32 16, %s32
          %p631 = scmp.lt.s32.totalorder %s630, 31
          %s632 = scalar_select %p631, %s630, 31
          %s633 = smul.addr %s632, 4
          %s634 = scalar_lea.vmem %s0, %s633
          %s635 = smul.u32 16, %s32
        $region92: #{tpu_custom_call.1} parent=87 // pred_fallthru
          _
        // Predicated region
        $region93: #{tpu_custom_call.1} parent=87 // pred_check
          %p636 = pneg %p78
        $region94: #{tpu_custom_call.1} parent=87 // pred_check_branch
          %638 = sbr.rel (%p636) target = $region96
        $region95: #{tpu_custom_call.1} parent=87 // pred_region
          %s639 = smul.u32 16, %s32
          %p640 = scmp.lt.s32.totalorder %s639, 31
          %s641 = scalar_select %p640, %s639, 31
          %s642 = smul.addr %s641, 4
          %s643 = scalar_lea.vmem %s1, %s642
          %s644 = smul.u32 16, %s32
        $region96: #{tpu_custom_call.1} parent=87 // pred_fallthru
          _
      $region88: #{tpu_custom_call.1} parent=5 // pred_fallthru
        _
      %p645 = scmp.le.s32.totalorder 1, %s32
      %p646 = scmp.lt.s32.totalorder %s32, 3
      %p647 = pnand %p645, %p646
      %p648 = pneg %p647
      // Predicated region
      $region97: #{tpu_custom_call.1} parent=5 // pred_check
        _
      $region98: #{tpu_custom_call.1} parent=5 // pred_check_branch
        %650 = sbr.rel (%p647) target = $region100
      $region99: #{tpu_custom_call.1} parent=5 // pred_region
        %s651 = ssub.s32 %s32, 1
        // Predicated region
        $region101: #{tpu_custom_call.1} parent=99 // pred_check
          %p652 = pneg %p126
        $region102: #{tpu_custom_call.1} parent=99 // pred_check_branch
          %654 = sbr.rel (%p652) target = $region104
        $region103: #{tpu_custom_call.1} parent=99 // pred_region
          %655 = dma.done [#allocation4], 64
        $region104: #{tpu_custom_call.1} parent=99 // pred_fallthru
          _
        // Predicated region
        $region105: #{tpu_custom_call.1} parent=99 // pred_check
          %p656 = pneg %p147
        $region106: #{tpu_custom_call.1} parent=99 // pred_check_branch
          %658 = sbr.rel (%p656) target = $region108
        $region107: #{tpu_custom_call.1} parent=99 // pred_region
          %659 = dma.done [#allocation6], 32
        $region108: #{tpu_custom_call.1} parent=99 // pred_fallthru
          _
        // Predicated region
        $region109: #{tpu_custom_call.1} parent=99 // pred_check
          %p660 = pneg %p189
        $region110: #{tpu_custom_call.1} parent=99 // pred_check_branch
          %662 = sbr.rel (%p660) target = $region112
        $region111: #{tpu_custom_call.1} parent=99 // pred_region
          %663 = dma.done [#allocation6], 64
        $region112: #{tpu_custom_call.1} parent=99 // pred_fallthru
          _
        // Predicated region
        $region113: #{tpu_custom_call.1} parent=99 // pred_check
          %p664 = pneg %p210
        $region114: #{tpu_custom_call.1} parent=99 // pred_check_branch
          %666 = sbr.rel (%p664) target = $region116
        $region115: #{tpu_custom_call.1} parent=99 // pred_region
          %667 = dma.done [#allocation9], 32
        $region116: #{tpu_custom_call.1} parent=99 // pred_fallthru
          _
        // Predicated region
        $region117: #{tpu_custom_call.1} parent=99 // pred_check
          %p668 = pneg %p231
        $region118: #{tpu_custom_call.1} parent=99 // pred_check_branch
          %670 = sbr.rel (%p668) target = $region120
        $region119: #{tpu_custom_call.1} parent=99 // pred_region
          %671 = dma.done [#allocation9], 32
        $region120: #{tpu_custom_call.1} parent=99 // pred_fallthru
          _
        // Predicated region
        $region121: #{tpu_custom_call.1} parent=99 // pred_check
          %p672 = pneg %p252
        $region122: #{tpu_custom_call.1} parent=99 // pred_check_branch
          %674 = sbr.rel (%p672) target = $region124
        $region123: #{tpu_custom_call.1} parent=99 // pred_region
          %675 = dma.done [#allocation12], 32
        $region124: #{tpu_custom_call.1} parent=99 // pred_fallthru
          _
        // Predicated region
        $region125: #{tpu_custom_call.1} parent=99 // pred_check
          %p676 = pneg %p315
        $region126: #{tpu_custom_call.1} parent=99 // pred_check_branch
          %678 = sbr.rel (%p676) target = $region128
        $region127: #{tpu_custom_call.1} parent=99 // pred_region
          %679 = dma.done [#allocation12], 32
        $region128: #{tpu_custom_call.1} parent=99 // pred_fallthru
          _
        // Predicated region
        $region129: #{tpu_custom_call.1} parent=99 // pred_check
          %p680 = pneg %p357
        $region130: #{tpu_custom_call.1} parent=99 // pred_check_branch
          %682 = sbr.rel (%p680) target = $region132
        $region131: #{tpu_custom_call.1} parent=99 // pred_region
          %683 = dma.done [#allocation15], 4096
        $region132: #{tpu_custom_call.1} parent=99 // pred_fallthru
          _
        %s684 = smul.u32 16, %s37
        %p685 = scmp.lt.s32.totalorder %s684, 31
        %s686 = scalar_select %p685, %s684, 31
        %s687 = smul.addr %s686, 4
        %s688 = scalar_lea.vmem %s0, %s687
        %p689 = pneg %p58
        %p690 = pneg %p55
        %s691 = smul.u32 16, %s37
        %p692 = scmp.lt.s32.totalorder %s691, 31
        %s693 = scalar_select %p692, %s691, 31
        %s694 = smul.addr %s693, 4
        %s695 = scalar_lea.vmem %s1, %s694
        %p696 = pneg %p84
        %p697 = pneg %p81
        %p698 = pneg %p105
        %p699 = pneg %p102
        %p700 = pneg %p126
        %p701 = pneg %p123
        %p702 = pneg %p147
        %p703 = pneg %p144
        %p704 = pneg %p168
        %p705 = pneg %p165
        %p706 = pneg %p189
        %p707 = pneg %p186
        %p708 = pneg %p210
        %p709 = pneg %p207
        %p710 = pneg %p231
        %p711 = pneg %p228
        %p712 = pneg %p252
        %p713 = pneg %p249
        %p714 = pneg %p273
        %p715 = pneg %p270
        %p716 = pneg %p294
        %p717 = pneg %p291
        %p718 = pneg %p315
        %p719 = pneg %p312
        %p720 = pneg %p336
        %p721 = pneg %p333
        %p722 = pneg %p357
        %p723 = pneg %p354
        %p724 = pneg %p378
        %p725 = pneg %p375
        %p726 = pneg %p399
        %p727 = pneg %p396
        %p728 = pneg %p420
        %p729 = pneg %p417
        %p730 = pneg %p441
        %p731 = pneg %p438
        %p732 = pneg %p462
        %p733 = pneg %p459
        %p734 = pneg %p488
        %p735 = pneg %p485
        %s736 = smul.u32 16, %s37
        %p737 = scmp.lt.s32.totalorder %s736, 31
        %s738 = scalar_select %p737, %s736, 31
        %s739 = smul.addr %s738, 8
        %s740 = scalar_lea.vmem %s20, %s739
        %s741 = smul.u32 16, %s37
        %p742 = scmp.lt.s32.totalorder %s741, 31
        %s743 = scalar_select %p742, %s741, 31
        %s744 = smul.addr %s743, 4
        %s745 = scalar_lea.vmem %s0, %s744
        %s746 = smul.u32 16, %s37
        %s747 = smul.u32 16, %s37
        %p748 = scmp.lt.s32.totalorder %s747, 31
        %s749 = scalar_select %p748, %s747, 31
        %s750 = smul.addr %s749, 4
        %s751 = scalar_lea.vmem %s1, %s750
        %s752 = smul.u32 16, %s37
        %s753 = smul.u32 16, %s37
        %p754 = scmp.lt.s32.totalorder %s753, 31
        %s755 = scalar_select %p754, %s753, 31
        %s756 = smul.addr %s755, 8
        %s757 = scalar_lea.vmem %s20, %s756
        %s758 = smul.u32 16, %s37
        %v760 = vld [vmem:[%s745] sm:$0xf]
        %v761 = vld [vmem:[%s745 + $0x4] sm:$0xf]
        %v762 = vld [vmem:[%s745 + $0x8] sm:$0xf]
        %v763 = vld [vmem:[%s745 + $0xc] sm:$0xf]
        %v764 = vld [vmem:[%s745 + $0x10] sm:$0xf]
        %v765 = vld [vmem:[%s745 + $0x14] sm:$0xf]
        %v766 = vld [vmem:[%s745 + $0x18] sm:$0xf]
        %v767 = vld [vmem:[%s745 + $0x1c] sm:$0xf]
        %v768 = vld [vmem:[%s745 + $0x20] sm:$0xf]
        %v769 = vld [vmem:[%s745 + $0x24] sm:$0xf]
        %v770 = vld [vmem:[%s745 + $0x28] sm:$0xf]
        %v771 = vld [vmem:[%s745 + $0x2c] sm:$0xf]
        %v772 = vld [vmem:[%s745 + $0x30] sm:$0xf]
        %v773 = vld [vmem:[%s745 + $0x34] sm:$0xf]
        %v774 = vld [vmem:[%s745 + $0x38] sm:$0xf]
        %v775 = vld [vmem:[%s745 + $0x3c] sm:$0xf]
        %v776 = vld [vmem:[%s751] sm:$0xf]
        %v777 = vld [vmem:[%s751 + $0x4] sm:$0xf]
        %v778 = vld [vmem:[%s751 + $0x8] sm:$0xf]
        %v779 = vld [vmem:[%s751 + $0xc] sm:$0xf]
        %v780 = vld [vmem:[%s751 + $0x10] sm:$0xf]
        %v781 = vld [vmem:[%s751 + $0x14] sm:$0xf]
        %v782 = vld [vmem:[%s751 + $0x18] sm:$0xf]
        %v783 = vld [vmem:[%s751 + $0x1c] sm:$0xf]
        %v784 = vld [vmem:[%s751 + $0x20] sm:$0xf]
        %v785 = vld [vmem:[%s751 + $0x24] sm:$0xf]
        %v786 = vld [vmem:[%s751 + $0x28] sm:$0xf]
        %v787 = vld [vmem:[%s751 + $0x2c] sm:$0xf]
        %v788 = vld [vmem:[%s751 + $0x30] sm:$0xf]
        %v789 = vld [vmem:[%s751 + $0x34] sm:$0xf]
        %v790 = vld [vmem:[%s751 + $0x38] sm:$0xf]
        %v791 = vld [vmem:[%s751 + $0x3c] sm:$0xf]
        %v792 = vld [vmem:[%s2] sm:$0xff]
        %v793 = vld [vmem:[%s2 + $0x8] sm:$0xff]
        %v794 = vld [vmem:[%s2 + $0x10] sm:$0xff]
        %v795 = vld [vmem:[#allocation3] sm:$0xf]
        %v812 = vunpack.c.l.b16 %v776
        %v813 = vunpack.c.l.b16 %v777
        %v814 = vunpack.c.l.b16 %v778
        %v815 = vunpack.c.l.b16 %v779
        %v816 = vunpack.c.l.b16 %v780
        %v817 = vunpack.c.l.b16 %v781
        %v818 = vunpack.c.l.b16 %v782
        %v819 = vunpack.c.l.b16 %v783
        %v820 = vunpack.c.l.b16 %v784
        %v821 = vunpack.c.l.b16 %v785
        %v822 = vunpack.c.l.b16 %v786
        %v823 = vunpack.c.l.b16 %v787
        %v824 = vunpack.c.l.b16 %v788
        %v825 = vunpack.c.l.b16 %v789
        %v826 = vunpack.c.l.b16 %v790
        %v827 = vunpack.c.l.b16 %v791
        %v828 = vpack.c.b16 %v813, %v812
        %v829 = vpack.c.b16 %v815, %v814
        %v830 = vpack.c.b16 %v817, %v816
        %v831 = vpack.c.b16 %v819, %v818
        %v832 = vpack.c.b16 %v821, %v820
        %v833 = vpack.c.b16 %v823, %v822
        %v834 = vpack.c.b16 %v825, %v824
        %v835 = vpack.c.b16 %v827, %v826
        %v838 = vunpack.c.l.s4 1983009808
        %v839 = vunpack.c.0.s8 %v838
        %v840 = vlaneseq
        %v841 = vshrl.u32 %v840, 7
        %v842 = vsub.s32 %v839, %v841
        %v843 = vrot.slane %v795, %v842
        %v844 = vcombine.high %v843, %v843
        %vm845 = vcmask 31744
        %v847 = vsel %vm845, %v828, 0
        %v850 = vsel %vm845, %v829, 0
        %v853 = vsel %vm845, %v830, 0
        %v856 = vsel %vm845, %v831, 0
        %v859 = vsel %vm845, %v832, 0
        %v862 = vsel %vm845, %v833, 0
        %v865 = vsel %vm845, %v834, 0
        %v868 = vsel %vm845, %v835, 0
        %vm870 = vcmask 1041408
        %v872 = vsel %vm870, %v843, 0
        %v875 = vsel %vm870, %v844, 0
        %877 = vmatprep.subr.bf16.mxu0 0
        %878 = vmatpush1.bf16.msra.mxu0 0
        %879 = vmatprep.subr.bf16.mxu0 0
        %880 = vmatpush1.bf16.msra.mxu0 0
        %881 = vmatprep.subr.bf16.mxu0 0
        %882 = vmatpush1.bf16.msra.mxu0 0
        %883 = vmatprep.subr.bf16.mxu0 0
        %884 = vmatpush1.bf16.msra.mxu0 0
        %885 = vmatprep.subr.bf16.mxu0 0
        %886 = vmatpush1.bf16.msra.mxu0 0
        %887 = vmatprep.subr.bf16.mxu0 0
        %888 = vmatpush1.bf16.msra.mxu0 0
        %889 = vmatprep.subr.bf16.mxu0 0
        %890 = vmatpush1.bf16.msra.mxu0 0
        %891 = vmatprep.subr.bf16.mxu0 %v875
        %892 = vmatpush1.bf16.msra.mxu0 %v872
        %893 = vmatprep.subr.bf16.mxu0 0
        %894 = vmatpush2.bf16.msra.mxu0 0
        %895 = vmatprep.subr.bf16.mxu0 0
        %896 = vmatpush2.bf16.msra.mxu0 0
        %897 = vmatprep.subr.bf16.mxu0 0
        %898 = vmatpush2.bf16.msra.mxu0 0
        %899 = vmatprep.subr.bf16.mxu0 0
        %900 = vmatpush2.bf16.msra.mxu0 0
        %901 = vmatprep.subr.bf16.mxu0 0
        %902 = vmatpush2.bf16.msra.mxu0 0
        %903 = vmatprep.subr.bf16.mxu0 0
        %904 = vmatpush2.bf16.msra.mxu0 0
        %905 = vmatprep.subr.bf16.mxu0 0
        %906 = vmatpush2.bf16.msra.mxu0 0
        %907 = vmatprep.subr.bf16.mxu0 0
        %908 = vmatpush2.bf16.msra.mxu0 0
        %909 = vmatprep.mubr.bf16.mxu0 0
        %910 = vmatmul.mubr.bf16.gmra.mxu0 %v847
        %v911 = vpop.f32.mrf.mxu0
        %v912 = vadd.f32 0.0, %v911
        %v913 = vpop.f32.mrf.mxu0
        %v914 = vadd.f32 0.0, %v913
        %v915 = vpop.f32.mrf.mxu0
        %v916 = vadd.f32 0.0, %v915
        %v917 = vpop.f32.mrf.mxu0
        %v918 = vadd.f32 0.0, %v917
        %919 = vmatprep.mubr.bf16.mxu0 0
        %920 = vmatmul.mubr.bf16.gmra.mxu0 %v850
        %v921 = vpop.f32.mrf.mxu0
        %v922 = vadd.f32 0.0, %v921
        %v923 = vpop.f32.mrf.mxu0
        %v924 = vadd.f32 0.0, %v923
        %v925 = vpop.f32.mrf.mxu0
        %v926 = vadd.f32 0.0, %v925
        %v927 = vpop.f32.mrf.mxu0
        %v928 = vadd.f32 0.0, %v927
        %929 = vmatprep.mubr.bf16.mxu0 0
        %930 = vmatmul.mubr.bf16.gmra.mxu0 %v853
        %v931 = vpop.f32.mrf.mxu0
        %v932 = vadd.f32 0.0, %v931
        %v933 = vpop.f32.mrf.mxu0
        %v934 = vadd.f32 0.0, %v933
        %v935 = vpop.f32.mrf.mxu0
        %v936 = vadd.f32 0.0, %v935
        %v937 = vpop.f32.mrf.mxu0
        %v938 = vadd.f32 0.0, %v937
        %939 = vmatprep.mubr.bf16.mxu0 0
        %940 = vmatmul.mubr.bf16.gmra.mxu0 %v856
        %v941 = vpop.f32.mrf.mxu0
        %v942 = vadd.f32 0.0, %v941
        %v943 = vpop.f32.mrf.mxu0
        %v944 = vadd.f32 0.0, %v943
        %v945 = vpop.f32.mrf.mxu0
        %v946 = vadd.f32 0.0, %v945
        %v947 = vpop.f32.mrf.mxu0
        %v948 = vadd.f32 0.0, %v947
        %949 = vmatprep.mubr.bf16.mxu0 0
        %950 = vmatmul.mubr.bf16.gmra.mxu0 %v859
        %v951 = vpop.f32.mrf.mxu0
        %v952 = vadd.f32 0.0, %v951
        %v953 = vpop.f32.mrf.mxu0
        %v954 = vadd.f32 0.0, %v953
        %v955 = vpop.f32.mrf.mxu0
        %v956 = vadd.f32 0.0, %v955
        %v957 = vpop.f32.mrf.mxu0
        %v958 = vadd.f32 0.0, %v957
        %959 = vmatprep.mubr.bf16.mxu0 0
        %960 = vmatmul.mubr.bf16.gmra.mxu0 %v862
        %v961 = vpop.f32.mrf.mxu0
        %v962 = vadd.f32 0.0, %v961
        %v963 = vpop.f32.mrf.mxu0
        %v964 = vadd.f32 0.0, %v963
        %v965 = vpop.f32.mrf.mxu0
        %v966 = vadd.f32 0.0, %v965
        %v967 = vpop.f32.mrf.mxu0
        %v968 = vadd.f32 0.0, %v967
        %969 = vmatprep.mubr.bf16.mxu0 0
        %970 = vmatmul.mubr.bf16.gmra.mxu0 %v865
        %v971 = vpop.f32.mrf.mxu0
        %v972 = vadd.f32 0.0, %v971
        %v973 = vpop.f32.mrf.mxu0
        %v974 = vadd.f32 0.0, %v973
        %v975 = vpop.f32.mrf.mxu0
        %v976 = vadd.f32 0.0, %v975
        %v977 = vpop.f32.mrf.mxu0
        %v978 = vadd.f32 0.0, %v977
        %979 = vmatprep.mubr.bf16.mxu0 0
        %980 = vmatmul.mubr.bf16.gmra.mxu0 %v868
        %v981 = vpop.f32.mrf.mxu0
        %v982 = vadd.f32 0.0, %v981
        %v983 = vpop.f32.mrf.mxu0
        %v984 = vadd.f32 0.0, %v983
        %v985 = vpop.f32.mrf.mxu0
        %v986 = vadd.f32 0.0, %v985
        %v987 = vpop.f32.mrf.mxu0
        %v988 = vadd.f32 0.0, %v987
        %989 = vdwg.mxu0
        %v1006 = vunpack.c.l.b16 %v760
        %v1007 = vunpack.c.l.b16 %v761
        %v1008 = vunpack.c.l.b16 %v762
        %v1009 = vunpack.c.l.b16 %v763
        %v1010 = vunpack.c.l.b16 %v764
        %v1011 = vunpack.c.l.b16 %v765
        %v1012 = vunpack.c.l.b16 %v766
        %v1013 = vunpack.c.l.b16 %v767
        %v1014 = vunpack.c.l.b16 %v768
        %v1015 = vunpack.c.l.b16 %v769
        %v1016 = vunpack.c.l.b16 %v770
        %v1017 = vunpack.c.l.b16 %v771
        %v1018 = vunpack.c.l.b16 %v772
        %v1019 = vunpack.c.l.b16 %v773
        %v1020 = vunpack.c.l.b16 %v774
        %v1021 = vunpack.c.l.b16 %v775
        %v1022 = vpack.c.b16 %v1007, %v1006
        %v1023 = vpack.c.b16 %v1009, %v1008
        %v1024 = vpack.c.b16 %v1011, %v1010
        %v1025 = vpack.c.b16 %v1013, %v1012
        %v1026 = vpack.c.b16 %v1015, %v1014
        %v1027 = vpack.c.b16 %v1017, %v1016
        %v1028 = vpack.c.b16 %v1019, %v1018
        %v1029 = vpack.c.b16 %v1021, %v1020
        %v1033 = vunpack.c.l.b16 %v792
        %v1034 = vunpack.c.h.b16 %v792
        %v1035 = vunpack.c.l.b16 %v793
        %v1036 = vunpack.c.h.b16 %v793
        %v1037 = vunpack.c.l.b16 %v794
        %v1038 = vunpack.c.h.b16 %v794
        %v1039 = vpack.c.b16 %v1035, %v1033
        %v1040 = vpack.c.b16 %v1036, %v1034
        %v1041 = vpack.c.b16 %v1037, %v1037
        %v1042 = vpack.c.b16 %v1038, %v1038
        %vm1045 = vcmask 195584
        %v1047 = vsel %vm1045, %v1022, 0
        %v1050 = vsel %vm1045, %v1023, 0
        %v1053 = vsel %vm1045, %v1024, 0
        %v1056 = vsel %vm1045, %v1025, 0
        %v1059 = vsel %vm1045, %v1026, 0
        %v1062 = vsel %vm1045, %v1027, 0
        %v1065 = vsel %vm1045, %v1028, 0
        %v1068 = vsel %vm1045, %v1029, 0
        %vm1070 = vcmask 1043456
        %v1072 = vsel %vm1070, %v1041, 0
        %v1075 = vsel %vm1070, %v1042, 0
        %1077 = vmatprep.subr.bf16.mxu0 0
        %1078 = vmatpush1.bf16.msra.mxu0 0
        %1079 = vmatprep.subr.bf16.mxu0 0
        %1080 = vmatpush1.bf16.msra.mxu0 0
        %1081 = vmatprep.subr.bf16.mxu0 0
        %1082 = vmatpush1.bf16.msra.mxu0 0
        %1083 = vmatprep.subr.bf16.mxu0 0
        %1084 = vmatpush1.bf16.msra.mxu0 0
        %1085 = vmatprep.subr.bf16.mxu0 0
        %1086 = vmatpush1.bf16.msra.mxu0 0
        %1087 = vmatprep.subr.bf16.mxu0 0
        %1088 = vmatpush1.bf16.msra.mxu0 0
        %1089 = vmatprep.subr.bf16.mxu0 %v1075
        %1090 = vmatpush1.bf16.msra.mxu0 %v1072
        %1091 = vmatprep.subr.bf16.mxu0 %v1040
        %1092 = vmatpush1.bf16.msra.mxu0 %v1039
        %1093 = vmatprep.subr.bf16.mxu0 0
        %1094 = vmatpush2.bf16.msra.mxu0 0
        %1095 = vmatprep.subr.bf16.mxu0 0
        %1096 = vmatpush2.bf16.msra.mxu0 0
        %1097 = vmatprep.subr.bf16.mxu0 0
        %1098 = vmatpush2.bf16.msra.mxu0 0
        %1099 = vmatprep.subr.bf16.mxu0 0
        %1100 = vmatpush2.bf16.msra.mxu0 0
        %1101 = vmatprep.subr.bf16.mxu0 0
        %1102 = vmatpush2.bf16.msra.mxu0 0
        %1103 = vmatprep.subr.bf16.mxu0 0
        %1104 = vmatpush2.bf16.msra.mxu0 0
        %1105 = vmatprep.subr.bf16.mxu0 0
        %1106 = vmatpush2.bf16.msra.mxu0 0
        %1107 = vmatprep.subr.bf16.mxu0 0
        %1108 = vmatpush2.bf16.msra.mxu0 0
        %1109 = vmatprep.mubr.bf16.mxu0 0
        %1110 = vmatmul.mubr.bf16.gmra.mxu0 %v1047
        %v1111 = vpop.f32.mrf.mxu0
        %v1112 = vadd.f32 %v912, %v1111
        %v1113 = vpop.f32.mrf.mxu0
        %v1114 = vadd.f32 %v914, %v1113
        %v1115 = vpop.f32.mrf.mxu0
        %v1116 = vadd.f32 %v916, %v1115
        %v1117 = vpop.f32.mrf.mxu0
        %v1118 = vadd.f32 %v918, %v1117
        %1119 = vmatprep.mubr.bf16.mxu0 0
        %1120 = vmatmul.mubr.bf16.gmra.mxu0 %v1050
        %v1121 = vpop.f32.mrf.mxu0
        %v1122 = vadd.f32 %v922, %v1121
        %v1123 = vpop.f32.mrf.mxu0
        %v1124 = vadd.f32 %v924, %v1123
        %v1125 = vpop.f32.mrf.mxu0
        %v1126 = vadd.f32 %v926, %v1125
        %v1127 = vpop.f32.mrf.mxu0
        %v1128 = vadd.f32 %v928, %v1127
        %1129 = vmatprep.mubr.bf16.mxu0 0
        %1130 = vmatmul.mubr.bf16.gmra.mxu0 %v1053
        %v1131 = vpop.f32.mrf.mxu0
        %v1132 = vadd.f32 %v932, %v1131
        %v1133 = vpop.f32.mrf.mxu0
        %v1134 = vadd.f32 %v934, %v1133
        %v1135 = vpop.f32.mrf.mxu0
        %v1136 = vadd.f32 %v936, %v1135
        %v1137 = vpop.f32.mrf.mxu0
        %v1138 = vadd.f32 %v938, %v1137
        %1139 = vmatprep.mubr.bf16.mxu0 0
        %1140 = vmatmul.mubr.bf16.gmra.mxu0 %v1056
        %v1141 = vpop.f32.mrf.mxu0
        %v1142 = vadd.f32 %v942, %v1141
        %v1143 = vpop.f32.mrf.mxu0
        %v1144 = vadd.f32 %v944, %v1143
        %v1145 = vpop.f32.mrf.mxu0
        %v1146 = vadd.f32 %v946, %v1145
        %v1147 = vpop.f32.mrf.mxu0
        %v1148 = vadd.f32 %v948, %v1147
        %1149 = vmatprep.mubr.bf16.mxu0 0
        %1150 = vmatmul.mubr.bf16.gmra.mxu0 %v1059
        %v1151 = vpop.f32.mrf.mxu0
        %v1152 = vadd.f32 %v952, %v1151
        %v1153 = vpop.f32.mrf.mxu0
        %v1154 = vadd.f32 %v954, %v1153
        %v1155 = vpop.f32.mrf.mxu0
        %v1156 = vadd.f32 %v956, %v1155
        %v1157 = vpop.f32.mrf.mxu0
        %v1158 = vadd.f32 %v958, %v1157
        %1159 = vmatprep.mubr.bf16.mxu0 0
        %1160 = vmatmul.mubr.bf16.gmra.mxu0 %v1062
        %v1161 = vpop.f32.mrf.mxu0
        %v1162 = vadd.f32 %v962, %v1161
        %v1163 = vpop.f32.mrf.mxu0
        %v1164 = vadd.f32 %v964, %v1163
        %v1165 = vpop.f32.mrf.mxu0
        %v1166 = vadd.f32 %v966, %v1165
        %v1167 = vpop.f32.mrf.mxu0
        %v1168 = vadd.f32 %v968, %v1167
        %1169 = vmatprep.mubr.bf16.mxu0 0
        %1170 = vmatmul.mubr.bf16.gmra.mxu0 %v1065
        %v1171 = vpop.f32.mrf.mxu0
        %v1172 = vadd.f32 %v972, %v1171
        %v1173 = vpop.f32.mrf.mxu0
        %v1174 = vadd.f32 %v974, %v1173
        %v1175 = vpop.f32.mrf.mxu0
        %v1176 = vadd.f32 %v976, %v1175
        %v1177 = vpop.f32.mrf.mxu0
        %v1178 = vadd.f32 %v978, %v1177
        %1179 = vmatprep.mubr.bf16.mxu0 0
        %1180 = vmatmul.mubr.bf16.gmra.mxu0 %v1068
        %v1181 = vpop.f32.mrf.mxu0
        %v1182 = vadd.f32 %v982, %v1181
        %v1183 = vpop.f32.mrf.mxu0
        %v1184 = vadd.f32 %v984, %v1183
        %v1185 = vpop.f32.mrf.mxu0
        %v1186 = vadd.f32 %v986, %v1185
        %v1187 = vpop.f32.mrf.mxu0
        %v1188 = vadd.f32 %v988, %v1187
        %1189 = vdwg.mxu0
        %v1190 = vld [vmem:[#allocation5] sm:$0x3]
        %v1192 = vlaneseq
        %v1193 = vshrl.u32 %v1192, 7
        %v1194 = vsub.s32 0, %v1193
        %v1195 = vrot.slane %v1190, %v1194
        %v1196 = vlaneseq
        %v1197 = vshrl.u32 %v1196, 7
        %v1198 = vsub.s32 1, %v1197
        %v1199 = vrot.slane %v1190, %v1198
        %v1202 = vadd.f32 %v1112, %v1195
        %v1203 = vadd.f32 %v1114, %v1199
        %v1204 = vadd.f32 %v1116, %v1195
        %v1205 = vadd.f32 %v1118, %v1199
        %v1206 = vadd.f32 %v1122, %v1195
        %v1207 = vadd.f32 %v1124, %v1199
        %v1208 = vadd.f32 %v1126, %v1195
        %v1209 = vadd.f32 %v1128, %v1199
        %v1210 = vadd.f32 %v1132, %v1195
        %v1211 = vadd.f32 %v1134, %v1199
        %v1212 = vadd.f32 %v1136, %v1195
        %v1213 = vadd.f32 %v1138, %v1199
        %v1214 = vadd.f32 %v1142, %v1195
        %v1215 = vadd.f32 %v1144, %v1199
        %v1216 = vadd.f32 %v1146, %v1195
        %v1217 = vadd.f32 %v1148, %v1199
        %v1218 = vadd.f32 %v1152, %v1195
        %v1219 = vadd.f32 %v1154, %v1199
        %v1220 = vadd.f32 %v1156, %v1195
        %v1221 = vadd.f32 %v1158, %v1199
        %v1222 = vadd.f32 %v1162, %v1195
        %v1223 = vadd.f32 %v1164, %v1199
        %v1224 = vadd.f32 %v1166, %v1195
        %v1225 = vadd.f32 %v1168, %v1199
        %v1226 = vadd.f32 %v1172, %v1195
        %v1227 = vadd.f32 %v1174, %v1199
        %v1228 = vadd.f32 %v1176, %v1195
        %v1229 = vadd.f32 %v1178, %v1199
        %v1230 = vadd.f32 %v1182, %v1195
        %v1231 = vadd.f32 %v1184, %v1199
        %v1232 = vadd.f32 %v1186, %v1195
        %v1233 = vadd.f32 %v1188, %v1199
        %v1234 = vmax.f32 %v1202, 0.0
        %v1235 = vmax.f32 %v1203, 0.0
        %v1236 = vmax.f32 %v1204, 0.0
        %v1237 = vmax.f32 %v1205, 0.0
        %v1238 = vmax.f32 %v1206, 0.0
        %v1239 = vmax.f32 %v1207, 0.0
        %v1240 = vmax.f32 %v1208, 0.0
        %v1241 = vmax.f32 %v1209, 0.0
        %v1242 = vmax.f32 %v1210, 0.0
        %v1243 = vmax.f32 %v1211, 0.0
        %v1244 = vmax.f32 %v1212, 0.0
        %v1245 = vmax.f32 %v1213, 0.0
        %v1246 = vmax.f32 %v1214, 0.0
        %v1247 = vmax.f32 %v1215, 0.0
        %v1248 = vmax.f32 %v1216, 0.0
        %v1249 = vmax.f32 %v1217, 0.0
        %v1250 = vmax.f32 %v1218, 0.0
        %v1251 = vmax.f32 %v1219, 0.0
        %v1252 = vmax.f32 %v1220, 0.0
        %v1253 = vmax.f32 %v1221, 0.0
        %v1254 = vmax.f32 %v1222, 0.0
        %v1255 = vmax.f32 %v1223, 0.0
        %v1256 = vmax.f32 %v1224, 0.0
        %v1257 = vmax.f32 %v1225, 0.0
        %v1258 = vmax.f32 %v1226, 0.0
        %v1259 = vmax.f32 %v1227, 0.0
        %v1260 = vmax.f32 %v1228, 0.0
        %v1261 = vmax.f32 %v1229, 0.0
        %v1262 = vmax.f32 %v1230, 0.0
        %v1263 = vmax.f32 %v1231, 0.0
        %v1264 = vmax.f32 %v1232, 0.0
        %v1265 = vmax.f32 %v1233, 0.0
        %v1266 = vld [vmem:[%s5] sm:$0xff]
        %v1267 = vld [vmem:[%s5 + $0x8] sm:$0xff]
        %v1268 = vld [vmem:[%s5 + $0x10] sm:$0xff]
        %v1269 = vld [vmem:[#allocation7] sm:$0xf]
        %v1272 = vunpack.c.l.s4 1983009808
        %v1273 = vunpack.c.0.s8 %v1272
        %v1274 = vlaneseq
        %v1275 = vshrl.u32 %v1274, 7
        %v1276 = vsub.s32 %v1273, %v1275
        %v1277 = vrot.slane %v1269, %v1276
        %v1278 = vcombine.high %v1277, %v1277
        %v1280 = vsel %vm870, %v1277, 0
        %v1283 = vsel %vm870, %v1278, 0
        %1285 = vmatprep.subr.bf16.mxu0 0
        %1286 = vmatpush1.bf16.msra.mxu0 0
        %1287 = vmatprep.subr.bf16.mxu0 0
        %1288 = vmatpush1.bf16.msra.mxu0 0
        %1289 = vmatprep.subr.bf16.mxu0 0
        %1290 = vmatpush1.bf16.msra.mxu0 0
        %1291 = vmatprep.subr.bf16.mxu0 0
        %1292 = vmatpush1.bf16.msra.mxu0 0
        %1293 = vmatprep.subr.bf16.mxu0 0
        %1294 = vmatpush1.bf16.msra.mxu0 0
        %1295 = vmatprep.subr.bf16.mxu0 0
        %1296 = vmatpush1.bf16.msra.mxu0 0
        %1297 = vmatprep.subr.bf16.mxu0 0
        %1298 = vmatpush1.bf16.msra.mxu0 0
        %1299 = vmatprep.subr.bf16.mxu0 %v1283
        %1300 = vmatpush1.bf16.msra.mxu0 %v1280
        %1301 = vmatprep.subr.bf16.mxu0 0
        %1302 = vmatpush2.bf16.msra.mxu0 0
        %1303 = vmatprep.subr.bf16.mxu0 0
        %1304 = vmatpush2.bf16.msra.mxu0 0
        %1305 = vmatprep.subr.bf16.mxu0 0
        %1306 = vmatpush2.bf16.msra.mxu0 0
        %1307 = vmatprep.subr.bf16.mxu0 0
        %1308 = vmatpush2.bf16.msra.mxu0 0
        %1309 = vmatprep.subr.bf16.mxu0 0
        %1310 = vmatpush2.bf16.msra.mxu0 0
        %1311 = vmatprep.subr.bf16.mxu0 0
        %1312 = vmatpush2.bf16.msra.mxu0 0
        %1313 = vmatprep.subr.bf16.mxu0 0
        %1314 = vmatpush2.bf16.msra.mxu0 0
        %1315 = vmatprep.subr.bf16.mxu0 0
        %1316 = vmatpush2.bf16.msra.mxu0 0
        %1317 = vmatprep.mubr.bf16.mxu0 0
        %1318 = vmatmul.mubr.bf16.gmra.mxu0 %v847
        %v1319 = vpop.f32.mrf.mxu0
        %v1320 = vadd.f32 0.0, %v1319
        %v1321 = vpop.f32.mrf.mxu0
        %v1322 = vadd.f32 0.0, %v1321
        %v1323 = vpop.f32.mrf.mxu0
        %v1324 = vadd.f32 0.0, %v1323
        %v1325 = vpop.f32.mrf.mxu0
        %v1326 = vadd.f32 0.0, %v1325
        %1327 = vmatprep.mubr.bf16.mxu0 0
        %1328 = vmatmul.mubr.bf16.gmra.mxu0 %v850
        %v1329 = vpop.f32.mrf.mxu0
        %v1330 = vadd.f32 0.0, %v1329
        %v1331 = vpop.f32.mrf.mxu0
        %v1332 = vadd.f32 0.0, %v1331
        %v1333 = vpop.f32.mrf.mxu0
        %v1334 = vadd.f32 0.0, %v1333
        %v1335 = vpop.f32.mrf.mxu0
        %v1336 = vadd.f32 0.0, %v1335
        %1337 = vmatprep.mubr.bf16.mxu0 0
        %1338 = vmatmul.mubr.bf16.gmra.mxu0 %v853
        %v1339 = vpop.f32.mrf.mxu0
        %v1340 = vadd.f32 0.0, %v1339
        %v1341 = vpop.f32.mrf.mxu0
        %v1342 = vadd.f32 0.0, %v1341
        %v1343 = vpop.f32.mrf.mxu0
        %v1344 = vadd.f32 0.0, %v1343
        %v1345 = vpop.f32.mrf.mxu0
        %v1346 = vadd.f32 0.0, %v1345
        %1347 = vmatprep.mubr.bf16.mxu0 0
        %1348 = vmatmul.mubr.bf16.gmra.mxu0 %v856
        %v1349 = vpop.f32.mrf.mxu0
        %v1350 = vadd.f32 0.0, %v1349
        %v1351 = vpop.f32.mrf.mxu0
        %v1352 = vadd.f32 0.0, %v1351
        %v1353 = vpop.f32.mrf.mxu0
        %v1354 = vadd.f32 0.0, %v1353
        %v1355 = vpop.f32.mrf.mxu0
        %v1356 = vadd.f32 0.0, %v1355
        %1357 = vmatprep.mubr.bf16.mxu0 0
        %1358 = vmatmul.mubr.bf16.gmra.mxu0 %v859
        %v1359 = vpop.f32.mrf.mxu0
        %v1360 = vadd.f32 0.0, %v1359
        %v1361 = vpop.f32.mrf.mxu0
        %v1362 = vadd.f32 0.0, %v1361
        %v1363 = vpop.f32.mrf.mxu0
        %v1364 = vadd.f32 0.0, %v1363
        %v1365 = vpop.f32.mrf.mxu0
        %v1366 = vadd.f32 0.0, %v1365
        %1367 = vmatprep.mubr.bf16.mxu0 0
        %1368 = vmatmul.mubr.bf16.gmra.mxu0 %v862
        %v1369 = vpop.f32.mrf.mxu0
        %v1370 = vadd.f32 0.0, %v1369
        %v1371 = vpop.f32.mrf.mxu0
        %v1372 = vadd.f32 0.0, %v1371
        %v1373 = vpop.f32.mrf.mxu0
        %v1374 = vadd.f32 0.0, %v1373
        %v1375 = vpop.f32.mrf.mxu0
        %v1376 = vadd.f32 0.0, %v1375
        %1377 = vmatprep.mubr.bf16.mxu0 0
        %1378 = vmatmul.mubr.bf16.gmra.mxu0 %v865
        %v1379 = vpop.f32.mrf.mxu0
        %v1380 = vadd.f32 0.0, %v1379
        %v1381 = vpop.f32.mrf.mxu0
        %v1382 = vadd.f32 0.0, %v1381
        %v1383 = vpop.f32.mrf.mxu0
        %v1384 = vadd.f32 0.0, %v1383
        %v1385 = vpop.f32.mrf.mxu0
        %v1386 = vadd.f32 0.0, %v1385
        %1387 = vmatprep.mubr.bf16.mxu0 0
        %1388 = vmatmul.mubr.bf16.gmra.mxu0 %v868
        %v1389 = vpop.f32.mrf.mxu0
        %v1390 = vadd.f32 0.0, %v1389
        %v1391 = vpop.f32.mrf.mxu0
        %v1392 = vadd.f32 0.0, %v1391
        %v1393 = vpop.f32.mrf.mxu0
        %v1394 = vadd.f32 0.0, %v1393
        %v1395 = vpop.f32.mrf.mxu0
        %v1396 = vadd.f32 0.0, %v1395
        %1397 = vdwg.mxu0
        %v1401 = vunpack.c.l.b16 %v1266
        %v1402 = vunpack.c.h.b16 %v1266
        %v1403 = vunpack.c.l.b16 %v1267
        %v1404 = vunpack.c.h.b16 %v1267
        %v1405 = vunpack.c.l.b16 %v1268
        %v1406 = vunpack.c.h.b16 %v1268
        %v1407 = vpack.c.b16 %v1403, %v1401
        %v1408 = vpack.c.b16 %v1404, %v1402
        %v1409 = vpack.c.b16 %v1405, %v1405
        %v1410 = vpack.c.b16 %v1406, %v1406
        %v1414 = vsel %vm1070, %v1409, 0
        %v1417 = vsel %vm1070, %v1410, 0
        %1419 = vmatprep.subr.bf16.mxu0 0
        %1420 = vmatpush1.bf16.msra.mxu0 0
        %1421 = vmatprep.subr.bf16.mxu0 0
        %1422 = vmatpush1.bf16.msra.mxu0 0
        %1423 = vmatprep.subr.bf16.mxu0 0
        %1424 = vmatpush1.bf16.msra.mxu0 0
        %1425 = vmatprep.subr.bf16.mxu0 0
        %1426 = vmatpush1.bf16.msra.mxu0 0
        %1427 = vmatprep.subr.bf16.mxu0 0
        %1428 = vmatpush1.bf16.msra.mxu0 0
        %1429 = vmatprep.subr.bf16.mxu0 0
        %1430 = vmatpush1.bf16.msra.mxu0 0
        %1431 = vmatprep.subr.bf16.mxu0 %v1417
        %1432 = vmatpush1.bf16.msra.mxu0 %v1414
        %1433 = vmatprep.subr.bf16.mxu0 %v1408
        %1434 = vmatpush1.bf16.msra.mxu0 %v1407
        %1435 = vmatprep.subr.bf16.mxu0 0
        %1436 = vmatpush2.bf16.msra.mxu0 0
        %1437 = vmatprep.subr.bf16.mxu0 0
        %1438 = vmatpush2.bf16.msra.mxu0 0
        %1439 = vmatprep.subr.bf16.mxu0 0
        %1440 = vmatpush2.bf16.msra.mxu0 0
        %1441 = vmatprep.subr.bf16.mxu0 0
        %1442 = vmatpush2.bf16.msra.mxu0 0
        %1443 = vmatprep.subr.bf16.mxu0 0
        %1444 = vmatpush2.bf16.msra.mxu0 0
        %1445 = vmatprep.subr.bf16.mxu0 0
        %1446 = vmatpush2.bf16.msra.mxu0 0
        %1447 = vmatprep.subr.bf16.mxu0 0
        %1448 = vmatpush2.bf16.msra.mxu0 0
        %1449 = vmatprep.subr.bf16.mxu0 0
        %1450 = vmatpush2.bf16.msra.mxu0 0
        %1451 = vmatprep.mubr.bf16.mxu0 0
        %1452 = vmatmul.mubr.bf16.gmra.mxu0 %v1047
        %v1453 = vpop.f32.mrf.mxu0
        %v1454 = vadd.f32 %v1320, %v1453
        %v1455 = vpop.f32.mrf.mxu0
        %v1456 = vadd.f32 %v1322, %v1455
        %v1457 = vpop.f32.mrf.mxu0
        %v1458 = vadd.f32 %v1324, %v1457
        %v1459 = vpop.f32.mrf.mxu0
        %v1460 = vadd.f32 %v1326, %v1459
        %1461 = vmatprep.mubr.bf16.mxu0 0
        %1462 = vmatmul.mubr.bf16.gmra.mxu0 %v1050
        %v1463 = vpop.f32.mrf.mxu0
        %v1464 = vadd.f32 %v1330, %v1463
        %v1465 = vpop.f32.mrf.mxu0
        %v1466 = vadd.f32 %v1332, %v1465
        %v1467 = vpop.f32.mrf.mxu0
        %v1468 = vadd.f32 %v1334, %v1467
        %v1469 = vpop.f32.mrf.mxu0
        %v1470 = vadd.f32 %v1336, %v1469
        %1471 = vmatprep.mubr.bf16.mxu0 0
        %1472 = vmatmul.mubr.bf16.gmra.mxu0 %v1053
        %v1473 = vpop.f32.mrf.mxu0
        %v1474 = vadd.f32 %v1340, %v1473
        %v1475 = vpop.f32.mrf.mxu0
        %v1476 = vadd.f32 %v1342, %v1475
        %v1477 = vpop.f32.mrf.mxu0
        %v1478 = vadd.f32 %v1344, %v1477
        %v1479 = vpop.f32.mrf.mxu0
        %v1480 = vadd.f32 %v1346, %v1479
        %1481 = vmatprep.mubr.bf16.mxu0 0
        %1482 = vmatmul.mubr.bf16.gmra.mxu0 %v1056
        %v1483 = vpop.f32.mrf.mxu0
        %v1484 = vadd.f32 %v1350, %v1483
        %v1485 = vpop.f32.mrf.mxu0
        %v1486 = vadd.f32 %v1352, %v1485
        %v1487 = vpop.f32.mrf.mxu0
        %v1488 = vadd.f32 %v1354, %v1487
        %v1489 = vpop.f32.mrf.mxu0
        %v1490 = vadd.f32 %v1356, %v1489
        %1491 = vmatprep.mubr.bf16.mxu0 0
        %1492 = vmatmul.mubr.bf16.gmra.mxu0 %v1059
        %v1493 = vpop.f32.mrf.mxu0
        %v1494 = vadd.f32 %v1360, %v1493
        %v1495 = vpop.f32.mrf.mxu0
        %v1496 = vadd.f32 %v1362, %v1495
        %v1497 = vpop.f32.mrf.mxu0
        %v1498 = vadd.f32 %v1364, %v1497
        %v1499 = vpop.f32.mrf.mxu0
        %v1500 = vadd.f32 %v1366, %v1499
        %1501 = vmatprep.mubr.bf16.mxu0 0
        %1502 = vmatmul.mubr.bf16.gmra.mxu0 %v1062
        %v1503 = vpop.f32.mrf.mxu0
        %v1504 = vadd.f32 %v1370, %v1503
        %v1505 = vpop.f32.mrf.mxu0
        %v1506 = vadd.f32 %v1372, %v1505
        %v1507 = vpop.f32.mrf.mxu0
        %v1508 = vadd.f32 %v1374, %v1507
        %v1509 = vpop.f32.mrf.mxu0
        %v1510 = vadd.f32 %v1376, %v1509
        %1511 = vmatprep.mubr.bf16.mxu0 0
        %1512 = vmatmul.mubr.bf16.gmra.mxu0 %v1065
        %v1513 = vpop.f32.mrf.mxu0
        %v1514 = vadd.f32 %v1380, %v1513
        %v1515 = vpop.f32.mrf.mxu0
        %v1516 = vadd.f32 %v1382, %v1515
        %v1517 = vpop.f32.mrf.mxu0
        %v1518 = vadd.f32 %v1384, %v1517
        %v1519 = vpop.f32.mrf.mxu0
        %v1520 = vadd.f32 %v1386, %v1519
        %1521 = vmatprep.mubr.bf16.mxu0 0
        %1522 = vmatmul.mubr.bf16.gmra.mxu0 %v1068
        %v1523 = vpop.f32.mrf.mxu0
        %v1524 = vadd.f32 %v1390, %v1523
        %v1525 = vpop.f32.mrf.mxu0
        %v1526 = vadd.f32 %v1392, %v1525
        %v1527 = vpop.f32.mrf.mxu0
        %v1528 = vadd.f32 %v1394, %v1527
        %v1529 = vpop.f32.mrf.mxu0
        %v1530 = vadd.f32 %v1396, %v1529
        %1531 = vdwg.mxu0
        %v1532 = vld [vmem:[#allocation8] sm:$0x3]
        %v1534 = vlaneseq
        %v1535 = vshrl.u32 %v1534, 7
        %v1536 = vsub.s32 0, %v1535
        %v1537 = vrot.slane %v1532, %v1536
        %v1538 = vlaneseq
        %v1539 = vshrl.u32 %v1538, 7
        %v1540 = vsub.s32 1, %v1539
        %v1541 = vrot.slane %v1532, %v1540
        %v1544 = vadd.f32 %v1454, %v1537
        %v1545 = vadd.f32 %v1456, %v1541
        %v1546 = vadd.f32 %v1458, %v1537
        %v1547 = vadd.f32 %v1460, %v1541
        %v1548 = vadd.f32 %v1464, %v1537
        %v1549 = vadd.f32 %v1466, %v1541
        %v1550 = vadd.f32 %v1468, %v1537
        %v1551 = vadd.f32 %v1470, %v1541
        %v1552 = vadd.f32 %v1474, %v1537
        %v1553 = vadd.f32 %v1476, %v1541
        %v1554 = vadd.f32 %v1478, %v1537
        %v1555 = vadd.f32 %v1480, %v1541
        %v1556 = vadd.f32 %v1484, %v1537
        %v1557 = vadd.f32 %v1486, %v1541
        %v1558 = vadd.f32 %v1488, %v1537
        %v1559 = vadd.f32 %v1490, %v1541
        %v1560 = vadd.f32 %v1494, %v1537
        %v1561 = vadd.f32 %v1496, %v1541
        %v1562 = vadd.f32 %v1498, %v1537
        %v1563 = vadd.f32 %v1500, %v1541
        %v1564 = vadd.f32 %v1504, %v1537
        %v1565 = vadd.f32 %v1506, %v1541
        %v1566 = vadd.f32 %v1508, %v1537
        %v1567 = vadd.f32 %v1510, %v1541
        %v1568 = vadd.f32 %v1514, %v1537
        %v1569 = vadd.f32 %v1516, %v1541
        %v1570 = vadd.f32 %v1518, %v1537
        %v1571 = vadd.f32 %v1520, %v1541
        %v1572 = vadd.f32 %v1524, %v1537
        %v1573 = vadd.f32 %v1526, %v1541
        %v1574 = vadd.f32 %v1528, %v1537
        %v1575 = vadd.f32 %v1530, %v1541
        %v1576 = vld [vmem:[#allocation10] sm:$0x3]
        %v1577 = vld [vmem:[#allocation11] sm:$0x3]
        %v1578 = vadd.f32 %v1544, %v1545
        %1579 = vadd.xlane.f32.xlu0 %v1578
        %v1580 = vpop.xlane.xlu0 %1579
        %v1581 = vadd.f32 %v1546, %v1547
        %1582 = vadd.xlane.f32.xlu0 %v1581
        %v1583 = vpop.xlane.xlu0 %1582
        %v1584 = vadd.f32 %v1548, %v1549
        %1585 = vadd.xlane.f32.xlu0 %v1584
        %v1586 = vpop.xlane.xlu0 %1585
        %v1587 = vadd.f32 %v1550, %v1551
        %1588 = vadd.xlane.f32.xlu0 %v1587
        %v1589 = vpop.xlane.xlu0 %1588
        %v1590 = vadd.f32 %v1552, %v1553
        %1591 = vadd.xlane.f32.xlu0 %v1590
        %v1592 = vpop.xlane.xlu0 %1591
        %v1593 = vadd.f32 %v1554, %v1555
        %1594 = vadd.xlane.f32.xlu0 %v1593
        %v1595 = vpop.xlane.xlu0 %1594
        %v1596 = vadd.f32 %v1556, %v1557
        %1597 = vadd.xlane.f32.xlu0 %v1596
        %v1598 = vpop.xlane.xlu0 %1597
        %v1599 = vadd.f32 %v1558, %v1559
        %1600 = vadd.xlane.f32.xlu0 %v1599
        %v1601 = vpop.xlane.xlu0 %1600
        %v1602 = vadd.f32 %v1560, %v1561
        %1603 = vadd.xlane.f32.xlu0 %v1602
        %v1604 = vpop.xlane.xlu0 %1603
        %v1605 = vadd.f32 %v1562, %v1563
        %1606 = vadd.xlane.f32.xlu0 %v1605
        %v1607 = vpop.xlane.xlu0 %1606
        %v1608 = vadd.f32 %v1564, %v1565
        %1609 = vadd.xlane.f32.xlu0 %v1608
        %v1610 = vpop.xlane.xlu0 %1609
        %v1611 = vadd.f32 %v1566, %v1567
        %1612 = vadd.xlane.f32.xlu0 %v1611
        %v1613 = vpop.xlane.xlu0 %1612
        %v1614 = vadd.f32 %v1568, %v1569
        %1615 = vadd.xlane.f32.xlu0 %v1614
        %v1616 = vpop.xlane.xlu0 %1615
        %v1617 = vadd.f32 %v1570, %v1571
        %1618 = vadd.xlane.f32.xlu0 %v1617
        %v1619 = vpop.xlane.xlu0 %1618
        %v1620 = vadd.f32 %v1572, %v1573
        %1621 = vadd.xlane.f32.xlu0 %v1620
        %v1622 = vpop.xlane.xlu0 %1621
        %v1623 = vadd.f32 %v1574, %v1575
        %1624 = vadd.xlane.f32.xlu0 %v1623
        %v1625 = vpop.xlane.xlu0 %1624
        %v1626 = vrcp.pop 256.0
        %v1627 = vmul.f32 %v1580, %v1626
        %v1628 = vmul.f32 %v1583, %v1626
        %v1629 = vmul.f32 %v1586, %v1626
        %v1630 = vmul.f32 %v1589, %v1626
        %v1631 = vmul.f32 %v1592, %v1626
        %v1632 = vmul.f32 %v1595, %v1626
        %v1633 = vmul.f32 %v1598, %v1626
        %v1634 = vmul.f32 %v1601, %v1626
        %v1635 = vmul.f32 %v1604, %v1626
        %v1636 = vmul.f32 %v1607, %v1626
        %v1637 = vmul.f32 %v1610, %v1626
        %v1638 = vmul.f32 %v1613, %v1626
        %v1639 = vmul.f32 %v1616, %v1626
        %v1640 = vmul.f32 %v1619, %v1626
        %v1641 = vmul.f32 %v1622, %v1626
        %v1642 = vmul.f32 %v1625, %v1626
        %v1643 = vsub.f32 %v1544, %v1627
        %v1644 = vsub.f32 %v1545, %v1627
        %v1645 = vsub.f32 %v1546, %v1628
        %v1646 = vsub.f32 %v1547, %v1628
        %v1647 = vsub.f32 %v1548, %v1629
        %v1648 = vsub.f32 %v1549, %v1629
        %v1649 = vsub.f32 %v1550, %v1630
        %v1650 = vsub.f32 %v1551, %v1630
        %v1651 = vsub.f32 %v1552, %v1631
        %v1652 = vsub.f32 %v1553, %v1631
        %v1653 = vsub.f32 %v1554, %v1632
        %v1654 = vsub.f32 %v1555, %v1632
        %v1655 = vsub.f32 %v1556, %v1633
        %v1656 = vsub.f32 %v1557, %v1633
        %v1657 = vsub.f32 %v1558, %v1634
        %v1658 = vsub.f32 %v1559, %v1634
        %v1659 = vsub.f32 %v1560, %v1635
        %v1660 = vsub.f32 %v1561, %v1635
        %v1661 = vsub.f32 %v1562, %v1636
        %v1662 = vsub.f32 %v1563, %v1636
        %v1663 = vsub.f32 %v1564, %v1637
        %v1664 = vsub.f32 %v1565, %v1637
        %v1665 = vsub.f32 %v1566, %v1638
        %v1666 = vsub.f32 %v1567, %v1638
        %v1667 = vsub.f32 %v1568, %v1639
        %v1668 = vsub.f32 %v1569, %v1639
        %v1669 = vsub.f32 %v1570, %v1640
        %v1670 = vsub.f32 %v1571, %v1640
        %v1671 = vsub.f32 %v1572, %v1641
        %v1672 = vsub.f32 %v1573, %v1641
        %v1673 = vsub.f32 %v1574, %v1642
        %v1674 = vsub.f32 %v1575, %v1642
        %v1675 = vmul.f32 %v1643, %v1643
        %v1676 = vmul.f32 %v1644, %v1644
        %v1677 = vmul.f32 %v1645, %v1645
        %v1678 = vmul.f32 %v1646, %v1646
        %v1679 = vmul.f32 %v1647, %v1647
        %v1680 = vmul.f32 %v1648, %v1648
        %v1681 = vmul.f32 %v1649, %v1649
        %v1682 = vmul.f32 %v1650, %v1650
        %v1683 = vmul.f32 %v1651, %v1651
        %v1684 = vmul.f32 %v1652, %v1652
        %v1685 = vmul.f32 %v1653, %v1653
        %v1686 = vmul.f32 %v1654, %v1654
        %v1687 = vmul.f32 %v1655, %v1655
        %v1688 = vmul.f32 %v1656, %v1656
        %v1689 = vmul.f32 %v1657, %v1657
        %v1690 = vmul.f32 %v1658, %v1658
        %v1691 = vmul.f32 %v1659, %v1659
        %v1692 = vmul.f32 %v1660, %v1660
        %v1693 = vmul.f32 %v1661, %v1661
        %v1694 = vmul.f32 %v1662, %v1662
        %v1695 = vmul.f32 %v1663, %v1663
        %v1696 = vmul.f32 %v1664, %v1664
        %v1697 = vmul.f32 %v1665, %v1665
        %v1698 = vmul.f32 %v1666, %v1666
        %v1699 = vmul.f32 %v1667, %v1667
        %v1700 = vmul.f32 %v1668, %v1668
        %v1701 = vmul.f32 %v1669, %v1669
        %v1702 = vmul.f32 %v1670, %v1670
        %v1703 = vmul.f32 %v1671, %v1671
        %v1704 = vmul.f32 %v1672, %v1672
        %v1705 = vmul.f32 %v1673, %v1673
        %v1706 = vmul.f32 %v1674, %v1674
        %v1707 = vadd.f32 %v1675, %v1676
        %1708 = vadd.xlane.f32.xlu0 %v1707
        %v1709 = vpop.xlane.xlu0 %1708
        %v1710 = vadd.f32 %v1677, %v1678
        %1711 = vadd.xlane.f32.xlu0 %v1710
        %v1712 = vpop.xlane.xlu0 %1711
        %v1713 = vadd.f32 %v1679, %v1680
        %1714 = vadd.xlane.f32.xlu0 %v1713
        %v1715 = vpop.xlane.xlu0 %1714
        %v1716 = vadd.f32 %v1681, %v1682
        %1717 = vadd.xlane.f32.xlu0 %v1716
        %v1718 = vpop.xlane.xlu0 %1717
        %v1719 = vadd.f32 %v1683, %v1684
        %1720 = vadd.xlane.f32.xlu0 %v1719
        %v1721 = vpop.xlane.xlu0 %1720
        %v1722 = vadd.f32 %v1685, %v1686
        %1723 = vadd.xlane.f32.xlu0 %v1722
        %v1724 = vpop.xlane.xlu0 %1723
        %v1725 = vadd.f32 %v1687, %v1688
        %1726 = vadd.xlane.f32.xlu0 %v1725
        %v1727 = vpop.xlane.xlu0 %1726
        %v1728 = vadd.f32 %v1689, %v1690
        %1729 = vadd.xlane.f32.xlu0 %v1728
        %v1730 = vpop.xlane.xlu0 %1729
        %v1731 = vadd.f32 %v1691, %v1692
        %1732 = vadd.xlane.f32.xlu0 %v1731
        %v1733 = vpop.xlane.xlu0 %1732
        %v1734 = vadd.f32 %v1693, %v1694
        %1735 = vadd.xlane.f32.xlu0 %v1734
        %v1736 = vpop.xlane.xlu0 %1735
        %v1737 = vadd.f32 %v1695, %v1696
        %1738 = vadd.xlane.f32.xlu0 %v1737
        %v1739 = vpop.xlane.xlu0 %1738
        %v1740 = vadd.f32 %v1697, %v1698
        %1741 = vadd.xlane.f32.xlu0 %v1740
        %v1742 = vpop.xlane.xlu0 %1741
        %v1743 = vadd.f32 %v1699, %v1700
        %1744 = vadd.xlane.f32.xlu0 %v1743
        %v1745 = vpop.xlane.xlu0 %1744
        %v1746 = vadd.f32 %v1701, %v1702
        %1747 = vadd.xlane.f32.xlu0 %v1746
        %v1748 = vpop.xlane.xlu0 %1747
        %v1749 = vadd.f32 %v1703, %v1704
        %1750 = vadd.xlane.f32.xlu0 %v1749
        %v1751 = vpop.xlane.xlu0 %1750
        %v1752 = vadd.f32 %v1705, %v1706
        %1753 = vadd.xlane.f32.xlu0 %v1752
        %v1754 = vpop.xlane.xlu0 %1753
        %v1755 = vmul.f32 %v1709, %v1626
        %v1756 = vmul.f32 %v1712, %v1626
        %v1757 = vmul.f32 %v1715, %v1626
        %v1758 = vmul.f32 %v1718, %v1626
        %v1759 = vmul.f32 %v1721, %v1626
        %v1760 = vmul.f32 %v1724, %v1626
        %v1761 = vmul.f32 %v1727, %v1626
        %v1762 = vmul.f32 %v1730, %v1626
        %v1763 = vmul.f32 %v1733, %v1626
        %v1764 = vmul.f32 %v1736, %v1626
        %v1765 = vmul.f32 %v1739, %v1626
        %v1766 = vmul.f32 %v1742, %v1626
        %v1767 = vmul.f32 %v1745, %v1626
        %v1768 = vmul.f32 %v1748, %v1626
        %v1769 = vmul.f32 %v1751, %v1626
        %v1770 = vmul.f32 %v1754, %v1626
        %v1771 = vadd.f32 %v1755, 1e-05
        %v1772 = vadd.f32 %v1756, 1e-05
        %v1773 = vadd.f32 %v1757, 1e-05
        %v1774 = vadd.f32 %v1758, 1e-05
        %v1775 = vadd.f32 %v1759, 1e-05
        %v1776 = vadd.f32 %v1760, 1e-05
        %v1777 = vadd.f32 %v1761, 1e-05
        %v1778 = vadd.f32 %v1762, 1e-05
        %v1779 = vadd.f32 %v1763, 1e-05
        %v1780 = vadd.f32 %v1764, 1e-05
        %v1781 = vadd.f32 %v1765, 1e-05
        %v1782 = vadd.f32 %v1766, 1e-05
        %v1783 = vadd.f32 %v1767, 1e-05
        %v1784 = vadd.f32 %v1768, 1e-05
        %v1785 = vadd.f32 %v1769, 1e-05
        %v1786 = vadd.f32 %v1770, 1e-05
        %v1787 = vrsqrt.pop %v1771
        %v1788 = vrsqrt.pop %v1772
        %v1789 = vrsqrt.pop %v1773
        %v1790 = vrsqrt.pop %v1774
        %v1791 = vrsqrt.pop %v1775
        %v1792 = vrsqrt.pop %v1776
        %v1793 = vrsqrt.pop %v1777
        %v1794 = vrsqrt.pop %v1778
        %v1795 = vrsqrt.pop %v1779
        %v1796 = vrsqrt.pop %v1780
        %v1797 = vrsqrt.pop %v1781
        %v1798 = vrsqrt.pop %v1782
        %v1799 = vrsqrt.pop %v1783
        %v1800 = vrsqrt.pop %v1784
        %v1801 = vrsqrt.pop %v1785
        %v1802 = vrsqrt.pop %v1786
        %v1804 = vlaneseq
        %v1805 = vshrl.u32 %v1804, 7
        %v1806 = vsub.s32 0, %v1805
        %v1807 = vrot.slane %v1576, %v1806
        %v1808 = vlaneseq
        %v1809 = vshrl.u32 %v1808, 7
        %v1810 = vsub.s32 1, %v1809
        %v1811 = vrot.slane %v1576, %v1810
        %v1814 = vmul.f32 %v1787, %v1807
        %v1815 = vmul.f32 %v1787, %v1811
        %v1816 = vmul.f32 %v1788, %v1807
        %v1817 = vmul.f32 %v1788, %v1811
        %v1818 = vmul.f32 %v1789, %v1807
        %v1819 = vmul.f32 %v1789, %v1811
        %v1820 = vmul.f32 %v1790, %v1807
        %v1821 = vmul.f32 %v1790, %v1811
        %v1822 = vmul.f32 %v1791, %v1807
        %v1823 = vmul.f32 %v1791, %v1811
        %v1824 = vmul.f32 %v1792, %v1807
        %v1825 = vmul.f32 %v1792, %v1811
        %v1826 = vmul.f32 %v1793, %v1807
        %v1827 = vmul.f32 %v1793, %v1811
        %v1828 = vmul.f32 %v1794, %v1807
        %v1829 = vmul.f32 %v1794, %v1811
        %v1830 = vmul.f32 %v1795, %v1807
        %v1831 = vmul.f32 %v1795, %v1811
        %v1832 = vmul.f32 %v1796, %v1807
        %v1833 = vmul.f32 %v1796, %v1811
        %v1834 = vmul.f32 %v1797, %v1807
        %v1835 = vmul.f32 %v1797, %v1811
        %v1836 = vmul.f32 %v1798, %v1807
        %v1837 = vmul.f32 %v1798, %v1811
        %v1838 = vmul.f32 %v1799, %v1807
        %v1839 = vmul.f32 %v1799, %v1811
        %v1840 = vmul.f32 %v1800, %v1807
        %v1841 = vmul.f32 %v1800, %v1811
        %v1842 = vmul.f32 %v1801, %v1807
        %v1843 = vmul.f32 %v1801, %v1811
        %v1844 = vmul.f32 %v1802, %v1807
        %v1845 = vmul.f32 %v1802, %v1811
        %v1846 = vmul.f32 %v1643, %v1814
        %v1847 = vmul.f32 %v1644, %v1815
        %v1848 = vmul.f32 %v1645, %v1816
        %v1849 = vmul.f32 %v1646, %v1817
        %v1850 = vmul.f32 %v1647, %v1818
        %v1851 = vmul.f32 %v1648, %v1819
        %v1852 = vmul.f32 %v1649, %v1820
        %v1853 = vmul.f32 %v1650, %v1821
        %v1854 = vmul.f32 %v1651, %v1822
        %v1855 = vmul.f32 %v1652, %v1823
        %v1856 = vmul.f32 %v1653, %v1824
        %v1857 = vmul.f32 %v1654, %v1825
        %v1858 = vmul.f32 %v1655, %v1826
        %v1859 = vmul.f32 %v1656, %v1827
        %v1860 = vmul.f32 %v1657, %v1828
        %v1861 = vmul.f32 %v1658, %v1829
        %v1862 = vmul.f32 %v1659, %v1830
        %v1863 = vmul.f32 %v1660, %v1831
        %v1864 = vmul.f32 %v1661, %v1832
        %v1865 = vmul.f32 %v1662, %v1833
        %v1866 = vmul.f32 %v1663, %v1834
        %v1867 = vmul.f32 %v1664, %v1835
        %v1868 = vmul.f32 %v1665, %v1836
        %v1869 = vmul.f32 %v1666, %v1837
        %v1870 = vmul.f32 %v1667, %v1838
        %v1871 = vmul.f32 %v1668, %v1839
        %v1872 = vmul.f32 %v1669, %v1840
        %v1873 = vmul.f32 %v1670, %v1841
        %v1874 = vmul.f32 %v1671, %v1842
        %v1875 = vmul.f32 %v1672, %v1843
        %v1876 = vmul.f32 %v1673, %v1844
        %v1877 = vmul.f32 %v1674, %v1845
        %v1879 = vlaneseq
        %v1880 = vshrl.u32 %v1879, 7
        %v1881 = vsub.s32 0, %v1880
        %v1882 = vrot.slane %v1577, %v1881
        %v1883 = vlaneseq
        %v1884 = vshrl.u32 %v1883, 7
        %v1885 = vsub.s32 1, %v1884
        %v1886 = vrot.slane %v1577, %v1885
        %v1889 = vadd.f32 %v1846, %v1882
        %v1890 = vadd.f32 %v1847, %v1886
        %v1891 = vadd.f32 %v1848, %v1882
        %v1892 = vadd.f32 %v1849, %v1886
        %v1893 = vadd.f32 %v1850, %v1882
        %v1894 = vadd.f32 %v1851, %v1886
        %v1895 = vadd.f32 %v1852, %v1882
        %v1896 = vadd.f32 %v1853, %v1886
        %v1897 = vadd.f32 %v1854, %v1882
        %v1898 = vadd.f32 %v1855, %v1886
        %v1899 = vadd.f32 %v1856, %v1882
        %v1900 = vadd.f32 %v1857, %v1886
        %v1901 = vadd.f32 %v1858, %v1882
        %v1902 = vadd.f32 %v1859, %v1886
        %v1903 = vadd.f32 %v1860, %v1882
        %v1904 = vadd.f32 %v1861, %v1886
        %v1905 = vadd.f32 %v1862, %v1882
        %v1906 = vadd.f32 %v1863, %v1886
        %v1907 = vadd.f32 %v1864, %v1882
        %v1908 = vadd.f32 %v1865, %v1886
        %v1909 = vadd.f32 %v1866, %v1882
        %v1910 = vadd.f32 %v1867, %v1886
        %v1911 = vadd.f32 %v1868, %v1882
        %v1912 = vadd.f32 %v1869, %v1886
        %v1913 = vadd.f32 %v1870, %v1882
        %v1914 = vadd.f32 %v1871, %v1886
        %v1915 = vadd.f32 %v1872, %v1882
        %v1916 = vadd.f32 %v1873, %v1886
        %v1917 = vadd.f32 %v1874, %v1882
        %v1918 = vadd.f32 %v1875, %v1886
        %v1919 = vadd.f32 %v1876, %v1882
        %v1920 = vadd.f32 %v1877, %v1886
        %v1921 = vmax.f32 %v1889, 0.0
        %v1922 = vmax.f32 %v1890, 0.0
        %v1923 = vmax.f32 %v1891, 0.0
        %v1924 = vmax.f32 %v1892, 0.0
        %v1925 = vmax.f32 %v1893, 0.0
        %v1926 = vmax.f32 %v1894, 0.0
        %v1927 = vmax.f32 %v1895, 0.0
        %v1928 = vmax.f32 %v1896, 0.0
        %v1929 = vmax.f32 %v1897, 0.0
        %v1930 = vmax.f32 %v1898, 0.0
        %v1931 = vmax.f32 %v1899, 0.0
        %v1932 = vmax.f32 %v1900, 0.0
        %v1933 = vmax.f32 %v1901, 0.0
        %v1934 = vmax.f32 %v1902, 0.0
        %v1935 = vmax.f32 %v1903, 0.0
        %v1936 = vmax.f32 %v1904, 0.0
        %v1937 = vmax.f32 %v1905, 0.0
        %v1938 = vmax.f32 %v1906, 0.0
        %v1939 = vmax.f32 %v1907, 0.0
        %v1940 = vmax.f32 %v1908, 0.0
        %v1941 = vmax.f32 %v1909, 0.0
        %v1942 = vmax.f32 %v1910, 0.0
        %v1943 = vmax.f32 %v1911, 0.0
        %v1944 = vmax.f32 %v1912, 0.0
        %v1945 = vmax.f32 %v1913, 0.0
        %v1946 = vmax.f32 %v1914, 0.0
        %v1947 = vmax.f32 %v1915, 0.0
        %v1948 = vmax.f32 %v1916, 0.0
        %v1949 = vmax.f32 %v1917, 0.0
        %v1950 = vmax.f32 %v1918, 0.0
        %v1951 = vmax.f32 %v1919, 0.0
        %v1952 = vmax.f32 %v1920, 0.0
        %v1953 = vpack.c.bf16 %v1923, %v1921
        %v1954 = vpack.c.bf16 %v1924, %v1922
        %v1955 = vpack.c.bf16 %v1927, %v1925
        %v1956 = vpack.c.bf16 %v1928, %v1926
        %v1957 = vpack.c.bf16 %v1931, %v1929
        %v1958 = vpack.c.bf16 %v1932, %v1930
        %v1959 = vpack.c.bf16 %v1935, %v1933
        %v1960 = vpack.c.bf16 %v1936, %v1934
        %v1961 = vpack.c.bf16 %v1939, %v1937
        %v1962 = vpack.c.bf16 %v1940, %v1938
        %v1963 = vpack.c.bf16 %v1943, %v1941
        %v1964 = vpack.c.bf16 %v1944, %v1942
        %v1965 = vpack.c.bf16 %v1947, %v1945
        %v1966 = vpack.c.bf16 %v1948, %v1946
        %v1967 = vpack.c.bf16 %v1951, %v1949
        %v1968 = vpack.c.bf16 %v1952, %v1950
        %v1969 = vld [vmem:[%s10] sm:$0xff]
        %v1970 = vld [vmem:[%s10 + $0x8] sm:$0xff]
        %v1971 = vld [vmem:[%s10 + $0x10] sm:$0xff]
        %v1972 = vld [vmem:[%s10 + $0x18] sm:$0xff]
        %v1973 = vld [vmem:[%s10 + $0x20] sm:$0xff]
        %v1974 = vld [vmem:[%s10 + $0x28] sm:$0xff]
        %v1975 = vld [vmem:[%s10 + $0x30] sm:$0xff]
        %v1976 = vld [vmem:[%s10 + $0x38] sm:$0xff]
        %v1977 = vld [vmem:[%s10 + $0x40] sm:$0xff]
        %v1978 = vld [vmem:[%s10 + $0x48] sm:$0xff]
        %v1979 = vld [vmem:[%s10 + $0x50] sm:$0xff]
        %v1980 = vld [vmem:[%s10 + $0x58] sm:$0xff]
        %v1981 = vld [vmem:[%s10 + $0x60] sm:$0xff]
        %v1982 = vld [vmem:[%s10 + $0x68] sm:$0xff]
        %v1983 = vld [vmem:[%s10 + $0x70] sm:$0xff]
        %v1984 = vld [vmem:[%s10 + $0x78] sm:$0xff]
        %v1985 = vld [vmem:[%s10 + $0x80] sm:$0xff]
        %v1986 = vld [vmem:[%s10 + $0x88] sm:$0xff]
        %v1987 = vld [vmem:[%s10 + $0x90] sm:$0xff]
        %v1988 = vld [vmem:[%s10 + $0x98] sm:$0xff]
        %v1989 = vld [vmem:[%s10 + $0xa0] sm:$0xff]
        %v1990 = vld [vmem:[%s10 + $0xa8] sm:$0xff]
        %v1991 = vld [vmem:[%s10 + $0xb0] sm:$0xff]
        %v1992 = vld [vmem:[%s10 + $0xb8] sm:$0xff]
        %v1993 = vld [vmem:[%s10 + $0xc0] sm:$0xff]
        %v1994 = vld [vmem:[%s10 + $0xc8] sm:$0xff]
        %v1995 = vld [vmem:[%s10 + $0xd0] sm:$0xff]
        %v1996 = vld [vmem:[%s10 + $0xd8] sm:$0xff]
        %v1997 = vld [vmem:[%s10 + $0xe0] sm:$0xff]
        %v1998 = vld [vmem:[%s10 + $0xe8] sm:$0xff]
        %v1999 = vld [vmem:[%s10 + $0xf0] sm:$0xff]
        %v2000 = vld [vmem:[%s10 + $0xf8] sm:$0xff]
        %v2001 = vld [vmem:[%s11] sm:$0x3]
        %v2003 = vlaneseq
        %v2004 = vshrl.u32 %v2003, 7
        %v2005 = vsub.s32 0, %v2004
        %v2006 = vrot.slane %v2001, %v2005
        %v2007 = vlaneseq
        %v2008 = vshrl.u32 %v2007, 7
        %v2009 = vsub.s32 1, %v2008
        %v2010 = vrot.slane %v2001, %v2009
        %v2045 = vunpack.c.l.b16 %v1969
        %v2046 = vunpack.c.h.b16 %v1969
        %v2047 = vunpack.c.l.b16 %v1970
        %v2048 = vunpack.c.h.b16 %v1970
        %v2049 = vunpack.c.l.b16 %v1971
        %v2050 = vunpack.c.h.b16 %v1971
        %v2051 = vunpack.c.l.b16 %v1972
        %v2052 = vunpack.c.h.b16 %v1972
        %v2053 = vunpack.c.l.b16 %v1973
        %v2054 = vunpack.c.h.b16 %v1973
        %v2055 = vunpack.c.l.b16 %v1974
        %v2056 = vunpack.c.h.b16 %v1974
        %v2057 = vunpack.c.l.b16 %v1975
        %v2058 = vunpack.c.h.b16 %v1975
        %v2059 = vunpack.c.l.b16 %v1976
        %v2060 = vunpack.c.h.b16 %v1976
        %v2061 = vunpack.c.l.b16 %v1977
        %v2062 = vunpack.c.h.b16 %v1977
        %v2063 = vunpack.c.l.b16 %v1978
        %v2064 = vunpack.c.h.b16 %v1978
        %v2065 = vunpack.c.l.b16 %v1979
        %v2066 = vunpack.c.h.b16 %v1979
        %v2067 = vunpack.c.l.b16 %v1980
        %v2068 = vunpack.c.h.b16 %v1980
        %v2069 = vunpack.c.l.b16 %v1981
        %v2070 = vunpack.c.h.b16 %v1981
        %v2071 = vunpack.c.l.b16 %v1982
        %v2072 = vunpack.c.h.b16 %v1982
        %v2073 = vunpack.c.l.b16 %v1983
        %v2074 = vunpack.c.h.b16 %v1983
        %v2075 = vunpack.c.l.b16 %v1984
        %v2076 = vunpack.c.h.b16 %v1984
        %v2077 = vunpack.c.l.b16 %v1985
        %v2078 = vunpack.c.h.b16 %v1985
        %v2079 = vunpack.c.l.b16 %v1986
        %v2080 = vunpack.c.h.b16 %v1986
        %v2081 = vunpack.c.l.b16 %v1987
        %v2082 = vunpack.c.h.b16 %v1987
        %v2083 = vunpack.c.l.b16 %v1988
        %v2084 = vunpack.c.h.b16 %v1988
        %v2085 = vunpack.c.l.b16 %v1989
        %v2086 = vunpack.c.h.b16 %v1989
        %v2087 = vunpack.c.l.b16 %v1990
        %v2088 = vunpack.c.h.b16 %v1990
        %v2089 = vunpack.c.l.b16 %v1991
        %v2090 = vunpack.c.h.b16 %v1991
        %v2091 = vunpack.c.l.b16 %v1992
        %v2092 = vunpack.c.h.b16 %v1992
        %v2093 = vunpack.c.l.b16 %v1993
        %v2094 = vunpack.c.h.b16 %v1993
        %v2095 = vunpack.c.l.b16 %v1994
        %v2096 = vunpack.c.h.b16 %v1994
        %v2097 = vunpack.c.l.b16 %v1995
        %v2098 = vunpack.c.h.b16 %v1995
        %v2099 = vunpack.c.l.b16 %v1996
        %v2100 = vunpack.c.h.b16 %v1996
        %v2101 = vunpack.c.l.b16 %v1997
        %v2102 = vunpack.c.h.b16 %v1997
        %v2103 = vunpack.c.l.b16 %v1998
        %v2104 = vunpack.c.h.b16 %v1998
        %v2105 = vunpack.c.l.b16 %v1999
        %v2106 = vunpack.c.h.b16 %v1999
        %v2107 = vunpack.c.l.b16 %v2000
        %v2108 = vunpack.c.h.b16 %v2000
        %v2109 = vpack.c.b16 %v2047, %v2045
        %v2110 = vpack.c.b16 %v2048, %v2046
        %v2111 = vpack.c.b16 %v2051, %v2049
        %v2112 = vpack.c.b16 %v2052, %v2050
        %v2113 = vpack.c.b16 %v2055, %v2053
        %v2114 = vpack.c.b16 %v2056, %v2054
        %v2115 = vpack.c.b16 %v2059, %v2057
        %v2116 = vpack.c.b16 %v2060, %v2058
        %v2117 = vpack.c.b16 %v2063, %v2061
        %v2118 = vpack.c.b16 %v2064, %v2062
        %v2119 = vpack.c.b16 %v2067, %v2065
        %v2120 = vpack.c.b16 %v2068, %v2066
        %v2121 = vpack.c.b16 %v2071, %v2069
        %v2122 = vpack.c.b16 %v2072, %v2070
        %v2123 = vpack.c.b16 %v2075, %v2073
        %v2124 = vpack.c.b16 %v2076, %v2074
        %v2125 = vpack.c.b16 %v2079, %v2077
        %v2126 = vpack.c.b16 %v2080, %v2078
        %v2127 = vpack.c.b16 %v2083, %v2081
        %v2128 = vpack.c.b16 %v2084, %v2082
        %v2129 = vpack.c.b16 %v2087, %v2085
        %v2130 = vpack.c.b16 %v2088, %v2086
        %v2131 = vpack.c.b16 %v2091, %v2089
        %v2132 = vpack.c.b16 %v2092, %v2090
        %v2133 = vpack.c.b16 %v2095, %v2093
        %v2134 = vpack.c.b16 %v2096, %v2094
        %v2135 = vpack.c.b16 %v2099, %v2097
        %v2136 = vpack.c.b16 %v2100, %v2098
        %v2137 = vpack.c.b16 %v2103, %v2101
        %v2138 = vpack.c.b16 %v2104, %v2102
        %v2139 = vpack.c.b16 %v2107, %v2105
        %v2140 = vpack.c.b16 %v2108, %v2106
        %2173 = vmatprep.subr.bf16.mxu0 %v2124
        %2174 = vmatpush1.bf16.msra.mxu0 %v2123
        %2175 = vmatprep.subr.bf16.mxu0 %v2122
        %2176 = vmatpush1.bf16.msra.mxu0 %v2121
        %2177 = vmatprep.subr.bf16.mxu0 %v2120
        %2178 = vmatpush1.bf16.msra.mxu0 %v2119
        %2179 = vmatprep.subr.bf16.mxu0 %v2118
        %2180 = vmatpush1.bf16.msra.mxu0 %v2117
        %2181 = vmatprep.subr.bf16.mxu0 %v2116
        %2182 = vmatpush1.bf16.msra.mxu0 %v2115
        %2183 = vmatprep.subr.bf16.mxu0 %v2114
        %2184 = vmatpush1.bf16.msra.mxu0 %v2113
        %2185 = vmatprep.subr.bf16.mxu0 %v2112
        %2186 = vmatpush1.bf16.msra.mxu0 %v2111
        %2187 = vmatprep.subr.bf16.mxu0 %v2110
        %2188 = vmatpush1.bf16.msra.mxu0 %v2109
        %2189 = vmatprep.subr.bf16.mxu0 %v2140
        %2190 = vmatpush2.bf16.msra.mxu0 %v2139
        %2191 = vmatprep.subr.bf16.mxu0 %v2138
        %2192 = vmatpush2.bf16.msra.mxu0 %v2137
        %2193 = vmatprep.subr.bf16.mxu0 %v2136
        %2194 = vmatpush2.bf16.msra.mxu0 %v2135
        %2195 = vmatprep.subr.bf16.mxu0 %v2134
        %2196 = vmatpush2.bf16.msra.mxu0 %v2133
        %2197 = vmatprep.subr.bf16.mxu0 %v2132
        %2198 = vmatpush2.bf16.msra.mxu0 %v2131
        %2199 = vmatprep.subr.bf16.mxu0 %v2130
        %2200 = vmatpush2.bf16.msra.mxu0 %v2129
        %2201 = vmatprep.subr.bf16.mxu0 %v2128
        %2202 = vmatpush2.bf16.msra.mxu0 %v2127
        %2203 = vmatprep.subr.bf16.mxu0 %v2126
        %2204 = vmatpush2.bf16.msra.mxu0 %v2125
        %2205 = vmatprep.mubr.bf16.mxu0 %v1954
        %2206 = vmatmul.mubr.bf16.gmra.mxu0 %v1953
        %v2207 = vpop.f32.mrf.mxu0
        %v2208 = vadd.f32 %v2006, %v2207
        %v2209 = vpop.f32.mrf.mxu0
        %v2210 = vadd.f32 %v2010, %v2209
        %v2211 = vpop.f32.mrf.mxu0
        %v2212 = vadd.f32 %v2006, %v2211
        %v2213 = vpop.f32.mrf.mxu0
        %v2214 = vadd.f32 %v2010, %v2213
        %2215 = vmatprep.mubr.bf16.mxu0 %v1956
        %2216 = vmatmul.mubr.bf16.gmra.mxu0 %v1955
        %v2217 = vpop.f32.mrf.mxu0
        %v2218 = vadd.f32 %v2006, %v2217
        %v2219 = vpop.f32.mrf.mxu0
        %v2220 = vadd.f32 %v2010, %v2219
        %v2221 = vpop.f32.mrf.mxu0
        %v2222 = vadd.f32 %v2006, %v2221
        %v2223 = vpop.f32.mrf.mxu0
        %v2224 = vadd.f32 %v2010, %v2223
        %2225 = vmatprep.mubr.bf16.mxu0 %v1958
        %2226 = vmatmul.mubr.bf16.gmra.mxu0 %v1957
        %v2227 = vpop.f32.mrf.mxu0
        %v2228 = vadd.f32 %v2006, %v2227
        %v2229 = vpop.f32.mrf.mxu0
        %v2230 = vadd.f32 %v2010, %v2229
        %v2231 = vpop.f32.mrf.mxu0
        %v2232 = vadd.f32 %v2006, %v2231
        %v2233 = vpop.f32.mrf.mxu0
        %v2234 = vadd.f32 %v2010, %v2233
        %2235 = vmatprep.mubr.bf16.mxu0 %v1960
        %2236 = vmatmul.mubr.bf16.gmra.mxu0 %v1959
        %v2237 = vpop.f32.mrf.mxu0
        %v2238 = vadd.f32 %v2006, %v2237
        %v2239 = vpop.f32.mrf.mxu0
        %v2240 = vadd.f32 %v2010, %v2239
        %v2241 = vpop.f32.mrf.mxu0
        %v2242 = vadd.f32 %v2006, %v2241
        %v2243 = vpop.f32.mrf.mxu0
        %v2244 = vadd.f32 %v2010, %v2243
        %2245 = vmatprep.mubr.bf16.mxu0 %v1962
        %2246 = vmatmul.mubr.bf16.gmra.mxu0 %v1961
        %v2247 = vpop.f32.mrf.mxu0
        %v2248 = vadd.f32 %v2006, %v2247
        %v2249 = vpop.f32.mrf.mxu0
        %v2250 = vadd.f32 %v2010, %v2249
        %v2251 = vpop.f32.mrf.mxu0
        %v2252 = vadd.f32 %v2006, %v2251
        %v2253 = vpop.f32.mrf.mxu0
        %v2254 = vadd.f32 %v2010, %v2253
        %2255 = vmatprep.mubr.bf16.mxu0 %v1964
        %2256 = vmatmul.mubr.bf16.gmra.mxu0 %v1963
        %v2257 = vpop.f32.mrf.mxu0
        %v2258 = vadd.f32 %v2006, %v2257
        %v2259 = vpop.f32.mrf.mxu0
        %v2260 = vadd.f32 %v2010, %v2259
        %v2261 = vpop.f32.mrf.mxu0
        %v2262 = vadd.f32 %v2006, %v2261
        %v2263 = vpop.f32.mrf.mxu0
        %v2264 = vadd.f32 %v2010, %v2263
        %2265 = vmatprep.mubr.bf16.mxu0 %v1966
        %2266 = vmatmul.mubr.bf16.gmra.mxu0 %v1965
        %v2267 = vpop.f32.mrf.mxu0
        %v2268 = vadd.f32 %v2006, %v2267
        %v2269 = vpop.f32.mrf.mxu0
        %v2270 = vadd.f32 %v2010, %v2269
        %v2271 = vpop.f32.mrf.mxu0
        %v2272 = vadd.f32 %v2006, %v2271
        %v2273 = vpop.f32.mrf.mxu0
        %v2274 = vadd.f32 %v2010, %v2273
        %2275 = vmatprep.mubr.bf16.mxu0 %v1968
        %2276 = vmatmul.mubr.bf16.gmra.mxu0 %v1967
        %v2277 = vpop.f32.mrf.mxu0
        %v2278 = vadd.f32 %v2006, %v2277
        %v2279 = vpop.f32.mrf.mxu0
        %v2280 = vadd.f32 %v2010, %v2279
        %v2281 = vpop.f32.mrf.mxu0
        %v2282 = vadd.f32 %v2006, %v2281
        %v2283 = vpop.f32.mrf.mxu0
        %v2284 = vadd.f32 %v2010, %v2283
        %2285 = vdwg.mxu0
        %v2286 = vld [vmem:[#allocation13] sm:$0x3]
        %v2287 = vld [vmem:[%s13] sm:$0x3]
        %v2288 = vadd.f32 %v2208, %v2210
        %2289 = vadd.xlane.f32.xlu0 %v2288
        %v2290 = vpop.xlane.xlu0 %2289
        %v2291 = vadd.f32 %v2212, %v2214
        %2292 = vadd.xlane.f32.xlu0 %v2291
        %v2293 = vpop.xlane.xlu0 %2292
        %v2294 = vadd.f32 %v2218, %v2220
        %2295 = vadd.xlane.f32.xlu0 %v2294
        %v2296 = vpop.xlane.xlu0 %2295
        %v2297 = vadd.f32 %v2222, %v2224
        %2298 = vadd.xlane.f32.xlu0 %v2297
        %v2299 = vpop.xlane.xlu0 %2298
        %v2300 = vadd.f32 %v2228, %v2230
        %2301 = vadd.xlane.f32.xlu0 %v2300
        %v2302 = vpop.xlane.xlu0 %2301
        %v2303 = vadd.f32 %v2232, %v2234
        %2304 = vadd.xlane.f32.xlu0 %v2303
        %v2305 = vpop.xlane.xlu0 %2304
        %v2306 = vadd.f32 %v2238, %v2240
        %2307 = vadd.xlane.f32.xlu0 %v2306
        %v2308 = vpop.xlane.xlu0 %2307
        %v2309 = vadd.f32 %v2242, %v2244
        %2310 = vadd.xlane.f32.xlu0 %v2309
        %v2311 = vpop.xlane.xlu0 %2310
        %v2312 = vadd.f32 %v2248, %v2250
        %2313 = vadd.xlane.f32.xlu0 %v2312
        %v2314 = vpop.xlane.xlu0 %2313
        %v2315 = vadd.f32 %v2252, %v2254
        %2316 = vadd.xlane.f32.xlu0 %v2315
        %v2317 = vpop.xlane.xlu0 %2316
        %v2318 = vadd.f32 %v2258, %v2260
        %2319 = vadd.xlane.f32.xlu0 %v2318
        %v2320 = vpop.xlane.xlu0 %2319
        %v2321 = vadd.f32 %v2262, %v2264
        %2322 = vadd.xlane.f32.xlu0 %v2321
        %v2323 = vpop.xlane.xlu0 %2322
        %v2324 = vadd.f32 %v2268, %v2270
        %2325 = vadd.xlane.f32.xlu0 %v2324
        %v2326 = vpop.xlane.xlu0 %2325
        %v2327 = vadd.f32 %v2272, %v2274
        %2328 = vadd.xlane.f32.xlu0 %v2327
        %v2329 = vpop.xlane.xlu0 %2328
        %v2330 = vadd.f32 %v2278, %v2280
        %2331 = vadd.xlane.f32.xlu0 %v2330
        %v2332 = vpop.xlane.xlu0 %2331
        %v2333 = vadd.f32 %v2282, %v2284
        %2334 = vadd.xlane.f32.xlu0 %v2333
        %v2335 = vpop.xlane.xlu0 %2334
        %v2336 = vmul.f32 %v2290, %v1626
        %v2337 = vmul.f32 %v2293, %v1626
        %v2338 = vmul.f32 %v2296, %v1626
        %v2339 = vmul.f32 %v2299, %v1626
        %v2340 = vmul.f32 %v2302, %v1626
        %v2341 = vmul.f32 %v2305, %v1626
        %v2342 = vmul.f32 %v2308, %v1626
        %v2343 = vmul.f32 %v2311, %v1626
        %v2344 = vmul.f32 %v2314, %v1626
        %v2345 = vmul.f32 %v2317, %v1626
        %v2346 = vmul.f32 %v2320, %v1626
        %v2347 = vmul.f32 %v2323, %v1626
        %v2348 = vmul.f32 %v2326, %v1626
        %v2349 = vmul.f32 %v2329, %v1626
        %v2350 = vmul.f32 %v2332, %v1626
        %v2351 = vmul.f32 %v2335, %v1626
        %v2352 = vsub.f32 %v2208, %v2336
        %v2353 = vsub.f32 %v2210, %v2336
        %v2354 = vsub.f32 %v2212, %v2337
        %v2355 = vsub.f32 %v2214, %v2337
        %v2356 = vsub.f32 %v2218, %v2338
        %v2357 = vsub.f32 %v2220, %v2338
        %v2358 = vsub.f32 %v2222, %v2339
        %v2359 = vsub.f32 %v2224, %v2339
        %v2360 = vsub.f32 %v2228, %v2340
        %v2361 = vsub.f32 %v2230, %v2340
        %v2362 = vsub.f32 %v2232, %v2341
        %v2363 = vsub.f32 %v2234, %v2341
        %v2364 = vsub.f32 %v2238, %v2342
        %v2365 = vsub.f32 %v2240, %v2342
        %v2366 = vsub.f32 %v2242, %v2343
        %v2367 = vsub.f32 %v2244, %v2343
        %v2368 = vsub.f32 %v2248, %v2344
        %v2369 = vsub.f32 %v2250, %v2344
        %v2370 = vsub.f32 %v2252, %v2345
        %v2371 = vsub.f32 %v2254, %v2345
        %v2372 = vsub.f32 %v2258, %v2346
        %v2373 = vsub.f32 %v2260, %v2346
        %v2374 = vsub.f32 %v2262, %v2347
        %v2375 = vsub.f32 %v2264, %v2347
        %v2376 = vsub.f32 %v2268, %v2348
        %v2377 = vsub.f32 %v2270, %v2348
        %v2378 = vsub.f32 %v2272, %v2349
        %v2379 = vsub.f32 %v2274, %v2349
        %v2380 = vsub.f32 %v2278, %v2350
        %v2381 = vsub.f32 %v2280, %v2350
        %v2382 = vsub.f32 %v2282, %v2351
        %v2383 = vsub.f32 %v2284, %v2351
        %v2384 = vmul.f32 %v2352, %v2352
        %v2385 = vmul.f32 %v2353, %v2353
        %v2386 = vmul.f32 %v2354, %v2354
        %v2387 = vmul.f32 %v2355, %v2355
        %v2388 = vmul.f32 %v2356, %v2356
        %v2389 = vmul.f32 %v2357, %v2357
        %v2390 = vmul.f32 %v2358, %v2358
        %v2391 = vmul.f32 %v2359, %v2359
        %v2392 = vmul.f32 %v2360, %v2360
        %v2393 = vmul.f32 %v2361, %v2361
        %v2394 = vmul.f32 %v2362, %v2362
        %v2395 = vmul.f32 %v2363, %v2363
        %v2396 = vmul.f32 %v2364, %v2364
        %v2397 = vmul.f32 %v2365, %v2365
        %v2398 = vmul.f32 %v2366, %v2366
        %v2399 = vmul.f32 %v2367, %v2367
        %v2400 = vmul.f32 %v2368, %v2368
        %v2401 = vmul.f32 %v2369, %v2369
        %v2402 = vmul.f32 %v2370, %v2370
        %v2403 = vmul.f32 %v2371, %v2371
        %v2404 = vmul.f32 %v2372, %v2372
        %v2405 = vmul.f32 %v2373, %v2373
        %v2406 = vmul.f32 %v2374, %v2374
        %v2407 = vmul.f32 %v2375, %v2375
        %v2408 = vmul.f32 %v2376, %v2376
        %v2409 = vmul.f32 %v2377, %v2377
        %v2410 = vmul.f32 %v2378, %v2378
        %v2411 = vmul.f32 %v2379, %v2379
        %v2412 = vmul.f32 %v2380, %v2380
        %v2413 = vmul.f32 %v2381, %v2381
        %v2414 = vmul.f32 %v2382, %v2382
        %v2415 = vmul.f32 %v2383, %v2383
        %v2416 = vadd.f32 %v2384, %v2385
        %2417 = vadd.xlane.f32.xlu0 %v2416
        %v2418 = vpop.xlane.xlu0 %2417
        %v2419 = vadd.f32 %v2386, %v2387
        %2420 = vadd.xlane.f32.xlu0 %v2419
        %v2421 = vpop.xlane.xlu0 %2420
        %v2422 = vadd.f32 %v2388, %v2389
        %2423 = vadd.xlane.f32.xlu0 %v2422
        %v2424 = vpop.xlane.xlu0 %2423
        %v2425 = vadd.f32 %v2390, %v2391
        %2426 = vadd.xlane.f32.xlu0 %v2425
        %v2427 = vpop.xlane.xlu0 %2426
        %v2428 = vadd.f32 %v2392, %v2393
        %2429 = vadd.xlane.f32.xlu0 %v2428
        %v2430 = vpop.xlane.xlu0 %2429
        %v2431 = vadd.f32 %v2394, %v2395
        %2432 = vadd.xlane.f32.xlu0 %v2431
        %v2433 = vpop.xlane.xlu0 %2432
        %v2434 = vadd.f32 %v2396, %v2397
        %2435 = vadd.xlane.f32.xlu0 %v2434
        %v2436 = vpop.xlane.xlu0 %2435
        %v2437 = vadd.f32 %v2398, %v2399
        %2438 = vadd.xlane.f32.xlu0 %v2437
        %v2439 = vpop.xlane.xlu0 %2438
        %v2440 = vadd.f32 %v2400, %v2401
        %2441 = vadd.xlane.f32.xlu0 %v2440
        %v2442 = vpop.xlane.xlu0 %2441
        %v2443 = vadd.f32 %v2402, %v2403
        %2444 = vadd.xlane.f32.xlu0 %v2443
        %v2445 = vpop.xlane.xlu0 %2444
        %v2446 = vadd.f32 %v2404, %v2405
        %2447 = vadd.xlane.f32.xlu0 %v2446
        %v2448 = vpop.xlane.xlu0 %2447
        %v2449 = vadd.f32 %v2406, %v2407
        %2450 = vadd.xlane.f32.xlu0 %v2449
        %v2451 = vpop.xlane.xlu0 %2450
        %v2452 = vadd.f32 %v2408, %v2409
        %2453 = vadd.xlane.f32.xlu0 %v2452
        %v2454 = vpop.xlane.xlu0 %2453
        %v2455 = vadd.f32 %v2410, %v2411
        %2456 = vadd.xlane.f32.xlu0 %v2455
        %v2457 = vpop.xlane.xlu0 %2456
        %v2458 = vadd.f32 %v2412, %v2413
        %2459 = vadd.xlane.f32.xlu0 %v2458
        %v2460 = vpop.xlane.xlu0 %2459
        %v2461 = vadd.f32 %v2414, %v2415
        %2462 = vadd.xlane.f32.xlu0 %v2461
        %v2463 = vpop.xlane.xlu0 %2462
        %v2464 = vmul.f32 %v2418, %v1626
        %v2465 = vmul.f32 %v2421, %v1626
        %v2466 = vmul.f32 %v2424, %v1626
        %v2467 = vmul.f32 %v2427, %v1626
        %v2468 = vmul.f32 %v2430, %v1626
        %v2469 = vmul.f32 %v2433, %v1626
        %v2470 = vmul.f32 %v2436, %v1626
        %v2471 = vmul.f32 %v2439, %v1626
        %v2472 = vmul.f32 %v2442, %v1626
        %v2473 = vmul.f32 %v2445, %v1626
        %v2474 = vmul.f32 %v2448, %v1626
        %v2475 = vmul.f32 %v2451, %v1626
        %v2476 = vmul.f32 %v2454, %v1626
        %v2477 = vmul.f32 %v2457, %v1626
        %v2478 = vmul.f32 %v2460, %v1626
        %v2479 = vmul.f32 %v2463, %v1626
        %v2480 = vadd.f32 %v2464, 1e-05
        %v2481 = vadd.f32 %v2465, 1e-05
        %v2482 = vadd.f32 %v2466, 1e-05
        %v2483 = vadd.f32 %v2467, 1e-05
        %v2484 = vadd.f32 %v2468, 1e-05
        %v2485 = vadd.f32 %v2469, 1e-05
        %v2486 = vadd.f32 %v2470, 1e-05
        %v2487 = vadd.f32 %v2471, 1e-05
        %v2488 = vadd.f32 %v2472, 1e-05
        %v2489 = vadd.f32 %v2473, 1e-05
        %v2490 = vadd.f32 %v2474, 1e-05
        %v2491 = vadd.f32 %v2475, 1e-05
        %v2492 = vadd.f32 %v2476, 1e-05
        %v2493 = vadd.f32 %v2477, 1e-05
        %v2494 = vadd.f32 %v2478, 1e-05
        %v2495 = vadd.f32 %v2479, 1e-05
        %v2496 = vrsqrt.pop %v2480
        %v2497 = vrsqrt.pop %v2481
        %v2498 = vrsqrt.pop %v2482
        %v2499 = vrsqrt.pop %v2483
        %v2500 = vrsqrt.pop %v2484
        %v2501 = vrsqrt.pop %v2485
        %v2502 = vrsqrt.pop %v2486
        %v2503 = vrsqrt.pop %v2487
        %v2504 = vrsqrt.pop %v2488
        %v2505 = vrsqrt.pop %v2489
        %v2506 = vrsqrt.pop %v2490
        %v2507 = vrsqrt.pop %v2491
        %v2508 = vrsqrt.pop %v2492
        %v2509 = vrsqrt.pop %v2493
        %v2510 = vrsqrt.pop %v2494
        %v2511 = vrsqrt.pop %v2495
        %v2513 = vlaneseq
        %v2514 = vshrl.u32 %v2513, 7
        %v2515 = vsub.s32 0, %v2514
        %v2516 = vrot.slane %v2286, %v2515
        %v2517 = vlaneseq
        %v2518 = vshrl.u32 %v2517, 7
        %v2519 = vsub.s32 1, %v2518
        %v2520 = vrot.slane %v2286, %v2519
        %v2523 = vmul.f32 %v2496, %v2516
        %v2524 = vmul.f32 %v2496, %v2520
        %v2525 = vmul.f32 %v2497, %v2516
        %v2526 = vmul.f32 %v2497, %v2520
        %v2527 = vmul.f32 %v2498, %v2516
        %v2528 = vmul.f32 %v2498, %v2520
        %v2529 = vmul.f32 %v2499, %v2516
        %v2530 = vmul.f32 %v2499, %v2520
        %v2531 = vmul.f32 %v2500, %v2516
        %v2532 = vmul.f32 %v2500, %v2520
        %v2533 = vmul.f32 %v2501, %v2516
        %v2534 = vmul.f32 %v2501, %v2520
        %v2535 = vmul.f32 %v2502, %v2516
        %v2536 = vmul.f32 %v2502, %v2520
        %v2537 = vmul.f32 %v2503, %v2516
        %v2538 = vmul.f32 %v2503, %v2520
        %v2539 = vmul.f32 %v2504, %v2516
        %v2540 = vmul.f32 %v2504, %v2520
        %v2541 = vmul.f32 %v2505, %v2516
        %v2542 = vmul.f32 %v2505, %v2520
        %v2543 = vmul.f32 %v2506, %v2516
        %v2544 = vmul.f32 %v2506, %v2520
        %v2545 = vmul.f32 %v2507, %v2516
        %v2546 = vmul.f32 %v2507, %v2520
        %v2547 = vmul.f32 %v2508, %v2516
        %v2548 = vmul.f32 %v2508, %v2520
        %v2549 = vmul.f32 %v2509, %v2516
        %v2550 = vmul.f32 %v2509, %v2520
        %v2551 = vmul.f32 %v2510, %v2516
        %v2552 = vmul.f32 %v2510, %v2520
        %v2553 = vmul.f32 %v2511, %v2516
        %v2554 = vmul.f32 %v2511, %v2520
        %v2555 = vmul.f32 %v2352, %v2523
        %v2556 = vmul.f32 %v2353, %v2524
        %v2557 = vmul.f32 %v2354, %v2525
        %v2558 = vmul.f32 %v2355, %v2526
        %v2559 = vmul.f32 %v2356, %v2527
        %v2560 = vmul.f32 %v2357, %v2528
        %v2561 = vmul.f32 %v2358, %v2529
        %v2562 = vmul.f32 %v2359, %v2530
        %v2563 = vmul.f32 %v2360, %v2531
        %v2564 = vmul.f32 %v2361, %v2532
        %v2565 = vmul.f32 %v2362, %v2533
        %v2566 = vmul.f32 %v2363, %v2534
        %v2567 = vmul.f32 %v2364, %v2535
        %v2568 = vmul.f32 %v2365, %v2536
        %v2569 = vmul.f32 %v2366, %v2537
        %v2570 = vmul.f32 %v2367, %v2538
        %v2571 = vmul.f32 %v2368, %v2539
        %v2572 = vmul.f32 %v2369, %v2540
        %v2573 = vmul.f32 %v2370, %v2541
        %v2574 = vmul.f32 %v2371, %v2542
        %v2575 = vmul.f32 %v2372, %v2543
        %v2576 = vmul.f32 %v2373, %v2544
        %v2577 = vmul.f32 %v2374, %v2545
        %v2578 = vmul.f32 %v2375, %v2546
        %v2579 = vmul.f32 %v2376, %v2547
        %v2580 = vmul.f32 %v2377, %v2548
        %v2581 = vmul.f32 %v2378, %v2549
        %v2582 = vmul.f32 %v2379, %v2550
        %v2583 = vmul.f32 %v2380, %v2551
        %v2584 = vmul.f32 %v2381, %v2552
        %v2585 = vmul.f32 %v2382, %v2553
        %v2586 = vmul.f32 %v2383, %v2554
        %v2588 = vlaneseq
        %v2589 = vshrl.u32 %v2588, 7
        %v2590 = vsub.s32 0, %v2589
        %v2591 = vrot.slane %v2287, %v2590
        %v2592 = vlaneseq
        %v2593 = vshrl.u32 %v2592, 7
        %v2594 = vsub.s32 1, %v2593
        %v2595 = vrot.slane %v2287, %v2594
        %v2598 = vadd.f32 %v2555, %v2591
        %v2599 = vadd.f32 %v2556, %v2595
        %v2600 = vadd.f32 %v2557, %v2591
        %v2601 = vadd.f32 %v2558, %v2595
        %v2602 = vadd.f32 %v2559, %v2591
        %v2603 = vadd.f32 %v2560, %v2595
        %v2604 = vadd.f32 %v2561, %v2591
        %v2605 = vadd.f32 %v2562, %v2595
        %v2606 = vadd.f32 %v2563, %v2591
        %v2607 = vadd.f32 %v2564, %v2595
        %v2608 = vadd.f32 %v2565, %v2591
        %v2609 = vadd.f32 %v2566, %v2595
        %v2610 = vadd.f32 %v2567, %v2591
        %v2611 = vadd.f32 %v2568, %v2595
        %v2612 = vadd.f32 %v2569, %v2591
        %v2613 = vadd.f32 %v2570, %v2595
        %v2614 = vadd.f32 %v2571, %v2591
        %v2615 = vadd.f32 %v2572, %v2595
        %v2616 = vadd.f32 %v2573, %v2591
        %v2617 = vadd.f32 %v2574, %v2595
        %v2618 = vadd.f32 %v2575, %v2591
        %v2619 = vadd.f32 %v2576, %v2595
        %v2620 = vadd.f32 %v2577, %v2591
        %v2621 = vadd.f32 %v2578, %v2595
        %v2622 = vadd.f32 %v2579, %v2591
        %v2623 = vadd.f32 %v2580, %v2595
        %v2624 = vadd.f32 %v2581, %v2591
        %v2625 = vadd.f32 %v2582, %v2595
        %v2626 = vadd.f32 %v2583, %v2591
        %v2627 = vadd.f32 %v2584, %v2595
        %v2628 = vadd.f32 %v2585, %v2591
        %v2629 = vadd.f32 %v2586, %v2595
        %v2630 = vmax.f32 %v2598, 0.0
        %v2631 = vmax.f32 %v2599, 0.0
        %v2632 = vmax.f32 %v2600, 0.0
        %v2633 = vmax.f32 %v2601, 0.0
        %v2634 = vmax.f32 %v2602, 0.0
        %v2635 = vmax.f32 %v2603, 0.0
        %v2636 = vmax.f32 %v2604, 0.0
        %v2637 = vmax.f32 %v2605, 0.0
        %v2638 = vmax.f32 %v2606, 0.0
        %v2639 = vmax.f32 %v2607, 0.0
        %v2640 = vmax.f32 %v2608, 0.0
        %v2641 = vmax.f32 %v2609, 0.0
        %v2642 = vmax.f32 %v2610, 0.0
        %v2643 = vmax.f32 %v2611, 0.0
        %v2644 = vmax.f32 %v2612, 0.0
        %v2645 = vmax.f32 %v2613, 0.0
        %v2646 = vmax.f32 %v2614, 0.0
        %v2647 = vmax.f32 %v2615, 0.0
        %v2648 = vmax.f32 %v2616, 0.0
        %v2649 = vmax.f32 %v2617, 0.0
        %v2650 = vmax.f32 %v2618, 0.0
        %v2651 = vmax.f32 %v2619, 0.0
        %v2652 = vmax.f32 %v2620, 0.0
        %v2653 = vmax.f32 %v2621, 0.0
        %v2654 = vmax.f32 %v2622, 0.0
        %v2655 = vmax.f32 %v2623, 0.0
        %v2656 = vmax.f32 %v2624, 0.0
        %v2657 = vmax.f32 %v2625, 0.0
        %v2658 = vmax.f32 %v2626, 0.0
        %v2659 = vmax.f32 %v2627, 0.0
        %v2660 = vmax.f32 %v2628, 0.0
        %v2661 = vmax.f32 %v2629, 0.0
        %v2662 = vpack.c.bf16 %v2632, %v2630
        %v2663 = vpack.c.bf16 %v2633, %v2631
        %v2664 = vpack.c.bf16 %v2636, %v2634
        %v2665 = vpack.c.bf16 %v2637, %v2635
        %v2666 = vpack.c.bf16 %v2640, %v2638
        %v2667 = vpack.c.bf16 %v2641, %v2639
        %v2668 = vpack.c.bf16 %v2644, %v2642
        %v2669 = vpack.c.bf16 %v2645, %v2643
        %v2670 = vpack.c.bf16 %v2648, %v2646
        %v2671 = vpack.c.bf16 %v2649, %v2647
        %v2672 = vpack.c.bf16 %v2652, %v2650
        %v2673 = vpack.c.bf16 %v2653, %v2651
        %v2674 = vpack.c.bf16 %v2656, %v2654
        %v2675 = vpack.c.bf16 %v2657, %v2655
        %v2676 = vpack.c.bf16 %v2660, %v2658
        %v2677 = vpack.c.bf16 %v2661, %v2659
        %v2678 = vld [vmem:[#allocation14] sm:$0xff]
        %v2679 = vld [vmem:[#allocation14 + $0x8] sm:$0xff]
        %v2680 = vld [vmem:[#allocation14 + $0x10] sm:$0xff]
        %v2681 = vld [vmem:[#allocation14 + $0x18] sm:$0xff]
        %v2682 = vld [vmem:[#allocation14 + $0x20] sm:$0xff]
        %v2683 = vld [vmem:[#allocation14 + $0x28] sm:$0xff]
        %v2684 = vld [vmem:[#allocation14 + $0x30] sm:$0xff]
        %v2685 = vld [vmem:[#allocation14 + $0x38] sm:$0xff]
        %v2686 = vld [vmem:[#allocation14 + $0x40] sm:$0xff]
        %v2687 = vld [vmem:[#allocation14 + $0x48] sm:$0xff]
        %v2688 = vld [vmem:[#allocation14 + $0x50] sm:$0xff]
        %v2689 = vld [vmem:[#allocation14 + $0x58] sm:$0xff]
        %v2690 = vld [vmem:[#allocation14 + $0x60] sm:$0xff]
        %v2691 = vld [vmem:[#allocation14 + $0x68] sm:$0xff]
        %v2692 = vld [vmem:[#allocation14 + $0x70] sm:$0xff]
        %v2693 = vld [vmem:[#allocation14 + $0x78] sm:$0xff]
        %v2694 = vld [vmem:[#allocation14 + $0x80] sm:$0xff]
        %v2695 = vld [vmem:[#allocation14 + $0x88] sm:$0xff]
        %v2696 = vld [vmem:[#allocation14 + $0x90] sm:$0xff]
        %v2697 = vld [vmem:[#allocation14 + $0x98] sm:$0xff]
        %v2698 = vld [vmem:[#allocation14 + $0xa0] sm:$0xff]
        %v2699 = vld [vmem:[#allocation14 + $0xa8] sm:$0xff]
        %v2700 = vld [vmem:[#allocation14 + $0xb0] sm:$0xff]
        %v2701 = vld [vmem:[#allocation14 + $0xb8] sm:$0xff]
        %v2702 = vld [vmem:[#allocation14 + $0xc0] sm:$0xff]
        %v2703 = vld [vmem:[#allocation14 + $0xc8] sm:$0xff]
        %v2704 = vld [vmem:[#allocation14 + $0xd0] sm:$0xff]
        %v2705 = vld [vmem:[#allocation14 + $0xd8] sm:$0xff]
        %v2706 = vld [vmem:[#allocation14 + $0xe0] sm:$0xff]
        %v2707 = vld [vmem:[#allocation14 + $0xe8] sm:$0xff]
        %v2708 = vld [vmem:[#allocation14 + $0xf0] sm:$0xff]
        %v2709 = vld [vmem:[#allocation14 + $0xf8] sm:$0xff]
        %v2710 = vld [vmem:[%s15] sm:$0x3]
        %v2712 = vlaneseq
        %v2713 = vshrl.u32 %v2712, 7
        %v2714 = vsub.s32 0, %v2713
        %v2715 = vrot.slane %v2710, %v2714
        %v2716 = vlaneseq
        %v2717 = vshrl.u32 %v2716, 7
        %v2718 = vsub.s32 1, %v2717
        %v2719 = vrot.slane %v2710, %v2718
        %v2754 = vunpack.c.l.b16 %v2678
        %v2755 = vunpack.c.h.b16 %v2678
        %v2756 = vunpack.c.l.b16 %v2679
        %v2757 = vunpack.c.h.b16 %v2679
        %v2758 = vunpack.c.l.b16 %v2680
        %v2759 = vunpack.c.h.b16 %v2680
        %v2760 = vunpack.c.l.b16 %v2681
        %v2761 = vunpack.c.h.b16 %v2681
        %v2762 = vunpack.c.l.b16 %v2682
        %v2763 = vunpack.c.h.b16 %v2682
        %v2764 = vunpack.c.l.b16 %v2683
        %v2765 = vunpack.c.h.b16 %v2683
        %v2766 = vunpack.c.l.b16 %v2684
        %v2767 = vunpack.c.h.b16 %v2684
        %v2768 = vunpack.c.l.b16 %v2685
        %v2769 = vunpack.c.h.b16 %v2685
        %v2770 = vunpack.c.l.b16 %v2686
        %v2771 = vunpack.c.h.b16 %v2686
        %v2772 = vunpack.c.l.b16 %v2687
        %v2773 = vunpack.c.h.b16 %v2687
        %v2774 = vunpack.c.l.b16 %v2688
        %v2775 = vunpack.c.h.b16 %v2688
        %v2776 = vunpack.c.l.b16 %v2689
        %v2777 = vunpack.c.h.b16 %v2689
        %v2778 = vunpack.c.l.b16 %v2690
        %v2779 = vunpack.c.h.b16 %v2690
        %v2780 = vunpack.c.l.b16 %v2691
        %v2781 = vunpack.c.h.b16 %v2691
        %v2782 = vunpack.c.l.b16 %v2692
        %v2783 = vunpack.c.h.b16 %v2692
        %v2784 = vunpack.c.l.b16 %v2693
        %v2785 = vunpack.c.h.b16 %v2693
        %v2786 = vunpack.c.l.b16 %v2694
        %v2787 = vunpack.c.h.b16 %v2694
        %v2788 = vunpack.c.l.b16 %v2695
        %v2789 = vunpack.c.h.b16 %v2695
        %v2790 = vunpack.c.l.b16 %v2696
        %v2791 = vunpack.c.h.b16 %v2696
        %v2792 = vunpack.c.l.b16 %v2697
        %v2793 = vunpack.c.h.b16 %v2697
        %v2794 = vunpack.c.l.b16 %v2698
        %v2795 = vunpack.c.h.b16 %v2698
        %v2796 = vunpack.c.l.b16 %v2699
        %v2797 = vunpack.c.h.b16 %v2699
        %v2798 = vunpack.c.l.b16 %v2700
        %v2799 = vunpack.c.h.b16 %v2700
        %v2800 = vunpack.c.l.b16 %v2701
        %v2801 = vunpack.c.h.b16 %v2701
        %v2802 = vunpack.c.l.b16 %v2702
        %v2803 = vunpack.c.h.b16 %v2702
        %v2804 = vunpack.c.l.b16 %v2703
        %v2805 = vunpack.c.h.b16 %v2703
        %v2806 = vunpack.c.l.b16 %v2704
        %v2807 = vunpack.c.h.b16 %v2704
        %v2808 = vunpack.c.l.b16 %v2705
        %v2809 = vunpack.c.h.b16 %v2705
        %v2810 = vunpack.c.l.b16 %v2706
        %v2811 = vunpack.c.h.b16 %v2706
        %v2812 = vunpack.c.l.b16 %v2707
        %v2813 = vunpack.c.h.b16 %v2707
        %v2814 = vunpack.c.l.b16 %v2708
        %v2815 = vunpack.c.h.b16 %v2708
        %v2816 = vunpack.c.l.b16 %v2709
        %v2817 = vunpack.c.h.b16 %v2709
        %v2818 = vpack.c.b16 %v2756, %v2754
        %v2819 = vpack.c.b16 %v2757, %v2755
        %v2820 = vpack.c.b16 %v2760, %v2758
        %v2821 = vpack.c.b16 %v2761, %v2759
        %v2822 = vpack.c.b16 %v2764, %v2762
        %v2823 = vpack.c.b16 %v2765, %v2763
        %v2824 = vpack.c.b16 %v2768, %v2766
        %v2825 = vpack.c.b16 %v2769, %v2767
        %v2826 = vpack.c.b16 %v2772, %v2770
        %v2827 = vpack.c.b16 %v2773, %v2771
        %v2828 = vpack.c.b16 %v2776, %v2774
        %v2829 = vpack.c.b16 %v2777, %v2775
        %v2830 = vpack.c.b16 %v2780, %v2778
        %v2831 = vpack.c.b16 %v2781, %v2779
        %v2832 = vpack.c.b16 %v2784, %v2782
        %v2833 = vpack.c.b16 %v2785, %v2783
        %v2834 = vpack.c.b16 %v2788, %v2786
        %v2835 = vpack.c.b16 %v2789, %v2787
        %v2836 = vpack.c.b16 %v2792, %v2790
        %v2837 = vpack.c.b16 %v2793, %v2791
        %v2838 = vpack.c.b16 %v2796, %v2794
        %v2839 = vpack.c.b16 %v2797, %v2795
        %v2840 = vpack.c.b16 %v2800, %v2798
        %v2841 = vpack.c.b16 %v2801, %v2799
        %v2842 = vpack.c.b16 %v2804, %v2802
        %v2843 = vpack.c.b16 %v2805, %v2803
        %v2844 = vpack.c.b16 %v2808, %v2806
        %v2845 = vpack.c.b16 %v2809, %v2807
        %v2846 = vpack.c.b16 %v2812, %v2810
        %v2847 = vpack.c.b16 %v2813, %v2811
        %v2848 = vpack.c.b16 %v2816, %v2814
        %v2849 = vpack.c.b16 %v2817, %v2815
        %2882 = vmatprep.subr.bf16.mxu0 %v2833
        %2883 = vmatpush1.bf16.msra.mxu0 %v2832
        %2884 = vmatprep.subr.bf16.mxu0 %v2831
        %2885 = vmatpush1.bf16.msra.mxu0 %v2830
        %2886 = vmatprep.subr.bf16.mxu0 %v2829
        %2887 = vmatpush1.bf16.msra.mxu0 %v2828
        %2888 = vmatprep.subr.bf16.mxu0 %v2827
        %2889 = vmatpush1.bf16.msra.mxu0 %v2826
        %2890 = vmatprep.subr.bf16.mxu0 %v2825
        %2891 = vmatpush1.bf16.msra.mxu0 %v2824
        %2892 = vmatprep.subr.bf16.mxu0 %v2823
        %2893 = vmatpush1.bf16.msra.mxu0 %v2822
        %2894 = vmatprep.subr.bf16.mxu0 %v2821
        %2895 = vmatpush1.bf16.msra.mxu0 %v2820
        %2896 = vmatprep.subr.bf16.mxu0 %v2819
        %2897 = vmatpush1.bf16.msra.mxu0 %v2818
        %2898 = vmatprep.subr.bf16.mxu0 %v2849
        %2899 = vmatpush2.bf16.msra.mxu0 %v2848
        %2900 = vmatprep.subr.bf16.mxu0 %v2847
        %2901 = vmatpush2.bf16.msra.mxu0 %v2846
        %2902 = vmatprep.subr.bf16.mxu0 %v2845
        %2903 = vmatpush2.bf16.msra.mxu0 %v2844
        %2904 = vmatprep.subr.bf16.mxu0 %v2843
        %2905 = vmatpush2.bf16.msra.mxu0 %v2842
        %2906 = vmatprep.subr.bf16.mxu0 %v2841
        %2907 = vmatpush2.bf16.msra.mxu0 %v2840
        %2908 = vmatprep.subr.bf16.mxu0 %v2839
        %2909 = vmatpush2.bf16.msra.mxu0 %v2838
        %2910 = vmatprep.subr.bf16.mxu0 %v2837
        %2911 = vmatpush2.bf16.msra.mxu0 %v2836
        %2912 = vmatprep.subr.bf16.mxu0 %v2835
        %2913 = vmatpush2.bf16.msra.mxu0 %v2834
        %2914 = vmatprep.mubr.bf16.mxu0 %v2663
        %2915 = vmatmul.mubr.bf16.gmra.mxu0 %v2662
        %v2916 = vpop.f32.mrf.mxu0
        %v2917 = vadd.f32 %v2715, %v2916
        %v2918 = vpop.f32.mrf.mxu0
        %v2919 = vadd.f32 %v2719, %v2918
        %v2920 = vpop.f32.mrf.mxu0
        %v2921 = vadd.f32 %v2715, %v2920
        %v2922 = vpop.f32.mrf.mxu0
        %v2923 = vadd.f32 %v2719, %v2922
        %2924 = vmatprep.mubr.bf16.mxu0 %v2665
        %2925 = vmatmul.mubr.bf16.gmra.mxu0 %v2664
        %v2926 = vpop.f32.mrf.mxu0
        %v2927 = vadd.f32 %v2715, %v2926
        %v2928 = vpop.f32.mrf.mxu0
        %v2929 = vadd.f32 %v2719, %v2928
        %v2930 = vpop.f32.mrf.mxu0
        %v2931 = vadd.f32 %v2715, %v2930
        %v2932 = vpop.f32.mrf.mxu0
        %v2933 = vadd.f32 %v2719, %v2932
        %2934 = vmatprep.mubr.bf16.mxu0 %v2667
        %2935 = vmatmul.mubr.bf16.gmra.mxu0 %v2666
        %v2936 = vpop.f32.mrf.mxu0
        %v2937 = vadd.f32 %v2715, %v2936
        %v2938 = vpop.f32.mrf.mxu0
        %v2939 = vadd.f32 %v2719, %v2938
        %v2940 = vpop.f32.mrf.mxu0
        %v2941 = vadd.f32 %v2715, %v2940
        %v2942 = vpop.f32.mrf.mxu0
        %v2943 = vadd.f32 %v2719, %v2942
        %2944 = vmatprep.mubr.bf16.mxu0 %v2669
        %2945 = vmatmul.mubr.bf16.gmra.mxu0 %v2668
        %v2946 = vpop.f32.mrf.mxu0
        %v2947 = vadd.f32 %v2715, %v2946
        %v2948 = vpop.f32.mrf.mxu0
        %v2949 = vadd.f32 %v2719, %v2948
        %v2950 = vpop.f32.mrf.mxu0
        %v2951 = vadd.f32 %v2715, %v2950
        %v2952 = vpop.f32.mrf.mxu0
        %v2953 = vadd.f32 %v2719, %v2952
        %2954 = vmatprep.mubr.bf16.mxu0 %v2671
        %2955 = vmatmul.mubr.bf16.gmra.mxu0 %v2670
        %v2956 = vpop.f32.mrf.mxu0
        %v2957 = vadd.f32 %v2715, %v2956
        %v2958 = vpop.f32.mrf.mxu0
        %v2959 = vadd.f32 %v2719, %v2958
        %v2960 = vpop.f32.mrf.mxu0
        %v2961 = vadd.f32 %v2715, %v2960
        %v2962 = vpop.f32.mrf.mxu0
        %v2963 = vadd.f32 %v2719, %v2962
        %2964 = vmatprep.mubr.bf16.mxu0 %v2673
        %2965 = vmatmul.mubr.bf16.gmra.mxu0 %v2672
        %v2966 = vpop.f32.mrf.mxu0
        %v2967 = vadd.f32 %v2715, %v2966
        %v2968 = vpop.f32.mrf.mxu0
        %v2969 = vadd.f32 %v2719, %v2968
        %v2970 = vpop.f32.mrf.mxu0
        %v2971 = vadd.f32 %v2715, %v2970
        %v2972 = vpop.f32.mrf.mxu0
        %v2973 = vadd.f32 %v2719, %v2972
        %2974 = vmatprep.mubr.bf16.mxu0 %v2675
        %2975 = vmatmul.mubr.bf16.gmra.mxu0 %v2674
        %v2976 = vpop.f32.mrf.mxu0
        %v2977 = vadd.f32 %v2715, %v2976
        %v2978 = vpop.f32.mrf.mxu0
        %v2979 = vadd.f32 %v2719, %v2978
        %v2980 = vpop.f32.mrf.mxu0
        %v2981 = vadd.f32 %v2715, %v2980
        %v2982 = vpop.f32.mrf.mxu0
        %v2983 = vadd.f32 %v2719, %v2982
        %2984 = vmatprep.mubr.bf16.mxu0 %v2677
        %2985 = vmatmul.mubr.bf16.gmra.mxu0 %v2676
        %v2986 = vpop.f32.mrf.mxu0
        %v2987 = vadd.f32 %v2715, %v2986
        %v2988 = vpop.f32.mrf.mxu0
        %v2989 = vadd.f32 %v2719, %v2988
        %v2990 = vpop.f32.mrf.mxu0
        %v2991 = vadd.f32 %v2715, %v2990
        %v2992 = vpop.f32.mrf.mxu0
        %v2993 = vadd.f32 %v2719, %v2992
        %2994 = vdwg.mxu0
        %v2995 = vld [vmem:[%s16] sm:$0x3]
        %v2996 = vld [vmem:[%s17] sm:$0x3]
        %v2997 = vadd.f32 %v2917, %v2919
        %2998 = vadd.xlane.f32.xlu0 %v2997
        %v2999 = vpop.xlane.xlu0 %2998
        %v3000 = vadd.f32 %v2921, %v2923
        %3001 = vadd.xlane.f32.xlu0 %v3000
        %v3002 = vpop.xlane.xlu0 %3001
        %v3003 = vadd.f32 %v2927, %v2929
        %3004 = vadd.xlane.f32.xlu0 %v3003
        %v3005 = vpop.xlane.xlu0 %3004
        %v3006 = vadd.f32 %v2931, %v2933
        %3007 = vadd.xlane.f32.xlu0 %v3006
        %v3008 = vpop.xlane.xlu0 %3007
        %v3009 = vadd.f32 %v2937, %v2939
        %3010 = vadd.xlane.f32.xlu0 %v3009
        %v3011 = vpop.xlane.xlu0 %3010
        %v3012 = vadd.f32 %v2941, %v2943
        %3013 = vadd.xlane.f32.xlu0 %v3012
        %v3014 = vpop.xlane.xlu0 %3013
        %v3015 = vadd.f32 %v2947, %v2949
        %3016 = vadd.xlane.f32.xlu0 %v3015
        %v3017 = vpop.xlane.xlu0 %3016
        %v3018 = vadd.f32 %v2951, %v2953
        %3019 = vadd.xlane.f32.xlu0 %v3018
        %v3020 = vpop.xlane.xlu0 %3019
        %v3021 = vadd.f32 %v2957, %v2959
        %3022 = vadd.xlane.f32.xlu0 %v3021
        %v3023 = vpop.xlane.xlu0 %3022
        %v3024 = vadd.f32 %v2961, %v2963
        %3025 = vadd.xlane.f32.xlu0 %v3024
        %v3026 = vpop.xlane.xlu0 %3025
        %v3027 = vadd.f32 %v2967, %v2969
        %3028 = vadd.xlane.f32.xlu0 %v3027
        %v3029 = vpop.xlane.xlu0 %3028
        %v3030 = vadd.f32 %v2971, %v2973
        %3031 = vadd.xlane.f32.xlu0 %v3030
        %v3032 = vpop.xlane.xlu0 %3031
        %v3033 = vadd.f32 %v2977, %v2979
        %3034 = vadd.xlane.f32.xlu0 %v3033
        %v3035 = vpop.xlane.xlu0 %3034
        %v3036 = vadd.f32 %v2981, %v2983
        %3037 = vadd.xlane.f32.xlu0 %v3036
        %v3038 = vpop.xlane.xlu0 %3037
        %v3039 = vadd.f32 %v2987, %v2989
        %3040 = vadd.xlane.f32.xlu0 %v3039
        %v3041 = vpop.xlane.xlu0 %3040
        %v3042 = vadd.f32 %v2991, %v2993
        %3043 = vadd.xlane.f32.xlu0 %v3042
        %v3044 = vpop.xlane.xlu0 %3043
        %v3045 = vmul.f32 %v2999, %v1626
        %v3046 = vmul.f32 %v3002, %v1626
        %v3047 = vmul.f32 %v3005, %v1626
        %v3048 = vmul.f32 %v3008, %v1626
        %v3049 = vmul.f32 %v3011, %v1626
        %v3050 = vmul.f32 %v3014, %v1626
        %v3051 = vmul.f32 %v3017, %v1626
        %v3052 = vmul.f32 %v3020, %v1626
        %v3053 = vmul.f32 %v3023, %v1626
        %v3054 = vmul.f32 %v3026, %v1626
        %v3055 = vmul.f32 %v3029, %v1626
        %v3056 = vmul.f32 %v3032, %v1626
        %v3057 = vmul.f32 %v3035, %v1626
        %v3058 = vmul.f32 %v3038, %v1626
        %v3059 = vmul.f32 %v3041, %v1626
        %v3060 = vmul.f32 %v3044, %v1626
        %v3061 = vsub.f32 %v2917, %v3045
        %v3062 = vsub.f32 %v2919, %v3045
        %v3063 = vsub.f32 %v2921, %v3046
        %v3064 = vsub.f32 %v2923, %v3046
        %v3065 = vsub.f32 %v2927, %v3047
        %v3066 = vsub.f32 %v2929, %v3047
        %v3067 = vsub.f32 %v2931, %v3048
        %v3068 = vsub.f32 %v2933, %v3048
        %v3069 = vsub.f32 %v2937, %v3049
        %v3070 = vsub.f32 %v2939, %v3049
        %v3071 = vsub.f32 %v2941, %v3050
        %v3072 = vsub.f32 %v2943, %v3050
        %v3073 = vsub.f32 %v2947, %v3051
        %v3074 = vsub.f32 %v2949, %v3051
        %v3075 = vsub.f32 %v2951, %v3052
        %v3076 = vsub.f32 %v2953, %v3052
        %v3077 = vsub.f32 %v2957, %v3053
        %v3078 = vsub.f32 %v2959, %v3053
        %v3079 = vsub.f32 %v2961, %v3054
        %v3080 = vsub.f32 %v2963, %v3054
        %v3081 = vsub.f32 %v2967, %v3055
        %v3082 = vsub.f32 %v2969, %v3055
        %v3083 = vsub.f32 %v2971, %v3056
        %v3084 = vsub.f32 %v2973, %v3056
        %v3085 = vsub.f32 %v2977, %v3057
        %v3086 = vsub.f32 %v2979, %v3057
        %v3087 = vsub.f32 %v2981, %v3058
        %v3088 = vsub.f32 %v2983, %v3058
        %v3089 = vsub.f32 %v2987, %v3059
        %v3090 = vsub.f32 %v2989, %v3059
        %v3091 = vsub.f32 %v2991, %v3060
        %v3092 = vsub.f32 %v2993, %v3060
        %v3093 = vmul.f32 %v3061, %v3061
        %v3094 = vmul.f32 %v3062, %v3062
        %v3095 = vmul.f32 %v3063, %v3063
        %v3096 = vmul.f32 %v3064, %v3064
        %v3097 = vmul.f32 %v3065, %v3065
        %v3098 = vmul.f32 %v3066, %v3066
        %v3099 = vmul.f32 %v3067, %v3067
        %v3100 = vmul.f32 %v3068, %v3068
        %v3101 = vmul.f32 %v3069, %v3069
        %v3102 = vmul.f32 %v3070, %v3070
        %v3103 = vmul.f32 %v3071, %v3071
        %v3104 = vmul.f32 %v3072, %v3072
        %v3105 = vmul.f32 %v3073, %v3073
        %v3106 = vmul.f32 %v3074, %v3074
        %v3107 = vmul.f32 %v3075, %v3075
        %v3108 = vmul.f32 %v3076, %v3076
        %v3109 = vmul.f32 %v3077, %v3077
        %v3110 = vmul.f32 %v3078, %v3078
        %v3111 = vmul.f32 %v3079, %v3079
        %v3112 = vmul.f32 %v3080, %v3080
        %v3113 = vmul.f32 %v3081, %v3081
        %v3114 = vmul.f32 %v3082, %v3082
        %v3115 = vmul.f32 %v3083, %v3083
        %v3116 = vmul.f32 %v3084, %v3084
        %v3117 = vmul.f32 %v3085, %v3085
        %v3118 = vmul.f32 %v3086, %v3086
        %v3119 = vmul.f32 %v3087, %v3087
        %v3120 = vmul.f32 %v3088, %v3088
        %v3121 = vmul.f32 %v3089, %v3089
        %v3122 = vmul.f32 %v3090, %v3090
        %v3123 = vmul.f32 %v3091, %v3091
        %v3124 = vmul.f32 %v3092, %v3092
        %v3125 = vadd.f32 %v3093, %v3094
        %3126 = vadd.xlane.f32.xlu0 %v3125
        %v3127 = vpop.xlane.xlu0 %3126
        %v3128 = vadd.f32 %v3095, %v3096
        %3129 = vadd.xlane.f32.xlu0 %v3128
        %v3130 = vpop.xlane.xlu0 %3129
        %v3131 = vadd.f32 %v3097, %v3098
        %3132 = vadd.xlane.f32.xlu0 %v3131
        %v3133 = vpop.xlane.xlu0 %3132
        %v3134 = vadd.f32 %v3099, %v3100
        %3135 = vadd.xlane.f32.xlu0 %v3134
        %v3136 = vpop.xlane.xlu0 %3135
        %v3137 = vadd.f32 %v3101, %v3102
        %3138 = vadd.xlane.f32.xlu0 %v3137
        %v3139 = vpop.xlane.xlu0 %3138
        %v3140 = vadd.f32 %v3103, %v3104
        %3141 = vadd.xlane.f32.xlu0 %v3140
        %v3142 = vpop.xlane.xlu0 %3141
        %v3143 = vadd.f32 %v3105, %v3106
        %3144 = vadd.xlane.f32.xlu0 %v3143
        %v3145 = vpop.xlane.xlu0 %3144
        %v3146 = vadd.f32 %v3107, %v3108
        %3147 = vadd.xlane.f32.xlu0 %v3146
        %v3148 = vpop.xlane.xlu0 %3147
        %v3149 = vadd.f32 %v3109, %v3110
        %3150 = vadd.xlane.f32.xlu0 %v3149
        %v3151 = vpop.xlane.xlu0 %3150
        %v3152 = vadd.f32 %v3111, %v3112
        %3153 = vadd.xlane.f32.xlu0 %v3152
        %v3154 = vpop.xlane.xlu0 %3153
        %v3155 = vadd.f32 %v3113, %v3114
        %3156 = vadd.xlane.f32.xlu0 %v3155
        %v3157 = vpop.xlane.xlu0 %3156
        %v3158 = vadd.f32 %v3115, %v3116
        %3159 = vadd.xlane.f32.xlu0 %v3158
        %v3160 = vpop.xlane.xlu0 %3159
        %v3161 = vadd.f32 %v3117, %v3118
        %3162 = vadd.xlane.f32.xlu0 %v3161
        %v3163 = vpop.xlane.xlu0 %3162
        %v3164 = vadd.f32 %v3119, %v3120
        %3165 = vadd.xlane.f32.xlu0 %v3164
        %v3166 = vpop.xlane.xlu0 %3165
        %v3167 = vadd.f32 %v3121, %v3122
        %3168 = vadd.xlane.f32.xlu0 %v3167
        %v3169 = vpop.xlane.xlu0 %3168
        %v3170 = vadd.f32 %v3123, %v3124
        %3171 = vadd.xlane.f32.xlu0 %v3170
        %v3172 = vpop.xlane.xlu0 %3171
        %v3173 = vmul.f32 %v3127, %v1626
        %v3174 = vmul.f32 %v3130, %v1626
        %v3175 = vmul.f32 %v3133, %v1626
        %v3176 = vmul.f32 %v3136, %v1626
        %v3177 = vmul.f32 %v3139, %v1626
        %v3178 = vmul.f32 %v3142, %v1626
        %v3179 = vmul.f32 %v3145, %v1626
        %v3180 = vmul.f32 %v3148, %v1626
        %v3181 = vmul.f32 %v3151, %v1626
        %v3182 = vmul.f32 %v3154, %v1626
        %v3183 = vmul.f32 %v3157, %v1626
        %v3184 = vmul.f32 %v3160, %v1626
        %v3185 = vmul.f32 %v3163, %v1626
        %v3186 = vmul.f32 %v3166, %v1626
        %v3187 = vmul.f32 %v3169, %v1626
        %v3188 = vmul.f32 %v3172, %v1626
        %v3189 = vadd.f32 %v3173, 1e-05
        %v3190 = vadd.f32 %v3174, 1e-05
        %v3191 = vadd.f32 %v3175, 1e-05
        %v3192 = vadd.f32 %v3176, 1e-05
        %v3193 = vadd.f32 %v3177, 1e-05
        %v3194 = vadd.f32 %v3178, 1e-05
        %v3195 = vadd.f32 %v3179, 1e-05
        %v3196 = vadd.f32 %v3180, 1e-05
        %v3197 = vadd.f32 %v3181, 1e-05
        %v3198 = vadd.f32 %v3182, 1e-05
        %v3199 = vadd.f32 %v3183, 1e-05
        %v3200 = vadd.f32 %v3184, 1e-05
        %v3201 = vadd.f32 %v3185, 1e-05
        %v3202 = vadd.f32 %v3186, 1e-05
        %v3203 = vadd.f32 %v3187, 1e-05
        %v3204 = vadd.f32 %v3188, 1e-05
        %v3205 = vrsqrt.pop %v3189
        %v3206 = vrsqrt.pop %v3190
        %v3207 = vrsqrt.pop %v3191
        %v3208 = vrsqrt.pop %v3192
        %v3209 = vrsqrt.pop %v3193
        %v3210 = vrsqrt.pop %v3194
        %v3211 = vrsqrt.pop %v3195
        %v3212 = vrsqrt.pop %v3196
        %v3213 = vrsqrt.pop %v3197
        %v3214 = vrsqrt.pop %v3198
        %v3215 = vrsqrt.pop %v3199
        %v3216 = vrsqrt.pop %v3200
        %v3217 = vrsqrt.pop %v3201
        %v3218 = vrsqrt.pop %v3202
        %v3219 = vrsqrt.pop %v3203
        %v3220 = vrsqrt.pop %v3204
        %v3222 = vlaneseq
        %v3223 = vshrl.u32 %v3222, 7
        %v3224 = vsub.s32 0, %v3223
        %v3225 = vrot.slane %v2995, %v3224
        %v3226 = vlaneseq
        %v3227 = vshrl.u32 %v3226, 7
        %v3228 = vsub.s32 1, %v3227
        %v3229 = vrot.slane %v2995, %v3228
        %v3232 = vmul.f32 %v3205, %v3225
        %v3233 = vmul.f32 %v3205, %v3229
        %v3234 = vmul.f32 %v3206, %v3225
        %v3235 = vmul.f32 %v3206, %v3229
        %v3236 = vmul.f32 %v3207, %v3225
        %v3237 = vmul.f32 %v3207, %v3229
        %v3238 = vmul.f32 %v3208, %v3225
        %v3239 = vmul.f32 %v3208, %v3229
        %v3240 = vmul.f32 %v3209, %v3225
        %v3241 = vmul.f32 %v3209, %v3229
        %v3242 = vmul.f32 %v3210, %v3225
        %v3243 = vmul.f32 %v3210, %v3229
        %v3244 = vmul.f32 %v3211, %v3225
        %v3245 = vmul.f32 %v3211, %v3229
        %v3246 = vmul.f32 %v3212, %v3225
        %v3247 = vmul.f32 %v3212, %v3229
        %v3248 = vmul.f32 %v3213, %v3225
        %v3249 = vmul.f32 %v3213, %v3229
        %v3250 = vmul.f32 %v3214, %v3225
        %v3251 = vmul.f32 %v3214, %v3229
        %v3252 = vmul.f32 %v3215, %v3225
        %v3253 = vmul.f32 %v3215, %v3229
        %v3254 = vmul.f32 %v3216, %v3225
        %v3255 = vmul.f32 %v3216, %v3229
        %v3256 = vmul.f32 %v3217, %v3225
        %v3257 = vmul.f32 %v3217, %v3229
        %v3258 = vmul.f32 %v3218, %v3225
        %v3259 = vmul.f32 %v3218, %v3229
        %v3260 = vmul.f32 %v3219, %v3225
        %v3261 = vmul.f32 %v3219, %v3229
        %v3262 = vmul.f32 %v3220, %v3225
        %v3263 = vmul.f32 %v3220, %v3229
        %v3264 = vmul.f32 %v3061, %v3232
        %v3265 = vmul.f32 %v3062, %v3233
        %v3266 = vmul.f32 %v3063, %v3234
        %v3267 = vmul.f32 %v3064, %v3235
        %v3268 = vmul.f32 %v3065, %v3236
        %v3269 = vmul.f32 %v3066, %v3237
        %v3270 = vmul.f32 %v3067, %v3238
        %v3271 = vmul.f32 %v3068, %v3239
        %v3272 = vmul.f32 %v3069, %v3240
        %v3273 = vmul.f32 %v3070, %v3241
        %v3274 = vmul.f32 %v3071, %v3242
        %v3275 = vmul.f32 %v3072, %v3243
        %v3276 = vmul.f32 %v3073, %v3244
        %v3277 = vmul.f32 %v3074, %v3245
        %v3278 = vmul.f32 %v3075, %v3246
        %v3279 = vmul.f32 %v3076, %v3247
        %v3280 = vmul.f32 %v3077, %v3248
        %v3281 = vmul.f32 %v3078, %v3249
        %v3282 = vmul.f32 %v3079, %v3250
        %v3283 = vmul.f32 %v3080, %v3251
        %v3284 = vmul.f32 %v3081, %v3252
        %v3285 = vmul.f32 %v3082, %v3253
        %v3286 = vmul.f32 %v3083, %v3254
        %v3287 = vmul.f32 %v3084, %v3255
        %v3288 = vmul.f32 %v3085, %v3256
        %v3289 = vmul.f32 %v3086, %v3257
        %v3290 = vmul.f32 %v3087, %v3258
        %v3291 = vmul.f32 %v3088, %v3259
        %v3292 = vmul.f32 %v3089, %v3260
        %v3293 = vmul.f32 %v3090, %v3261
        %v3294 = vmul.f32 %v3091, %v3262
        %v3295 = vmul.f32 %v3092, %v3263
        %v3297 = vlaneseq
        %v3298 = vshrl.u32 %v3297, 7
        %v3299 = vsub.s32 0, %v3298
        %v3300 = vrot.slane %v2996, %v3299
        %v3301 = vlaneseq
        %v3302 = vshrl.u32 %v3301, 7
        %v3303 = vsub.s32 1, %v3302
        %v3304 = vrot.slane %v2996, %v3303
        %v3307 = vadd.f32 %v3264, %v3300
        %v3308 = vadd.f32 %v3265, %v3304
        %v3309 = vadd.f32 %v3266, %v3300
        %v3310 = vadd.f32 %v3267, %v3304
        %v3311 = vadd.f32 %v3268, %v3300
        %v3312 = vadd.f32 %v3269, %v3304
        %v3313 = vadd.f32 %v3270, %v3300
        %v3314 = vadd.f32 %v3271, %v3304
        %v3315 = vadd.f32 %v3272, %v3300
        %v3316 = vadd.f32 %v3273, %v3304
        %v3317 = vadd.f32 %v3274, %v3300
        %v3318 = vadd.f32 %v3275, %v3304
        %v3319 = vadd.f32 %v3276, %v3300
        %v3320 = vadd.f32 %v3277, %v3304
        %v3321 = vadd.f32 %v3278, %v3300
        %v3322 = vadd.f32 %v3279, %v3304
        %v3323 = vadd.f32 %v3280, %v3300
        %v3324 = vadd.f32 %v3281, %v3304
        %v3325 = vadd.f32 %v3282, %v3300
        %v3326 = vadd.f32 %v3283, %v3304
        %v3327 = vadd.f32 %v3284, %v3300
        %v3328 = vadd.f32 %v3285, %v3304
        %v3329 = vadd.f32 %v3286, %v3300
        %v3330 = vadd.f32 %v3287, %v3304
        %v3331 = vadd.f32 %v3288, %v3300
        %v3332 = vadd.f32 %v3289, %v3304
        %v3333 = vadd.f32 %v3290, %v3300
        %v3334 = vadd.f32 %v3291, %v3304
        %v3335 = vadd.f32 %v3292, %v3300
        %v3336 = vadd.f32 %v3293, %v3304
        %v3337 = vadd.f32 %v3294, %v3300
        %v3338 = vadd.f32 %v3295, %v3304
        %v3339 = vmax.f32 %v3307, 0.0
        %v3340 = vmax.f32 %v3308, 0.0
        %v3341 = vmax.f32 %v3309, 0.0
        %v3342 = vmax.f32 %v3310, 0.0
        %v3343 = vmax.f32 %v3311, 0.0
        %v3344 = vmax.f32 %v3312, 0.0
        %v3345 = vmax.f32 %v3313, 0.0
        %v3346 = vmax.f32 %v3314, 0.0
        %v3347 = vmax.f32 %v3315, 0.0
        %v3348 = vmax.f32 %v3316, 0.0
        %v3349 = vmax.f32 %v3317, 0.0
        %v3350 = vmax.f32 %v3318, 0.0
        %v3351 = vmax.f32 %v3319, 0.0
        %v3352 = vmax.f32 %v3320, 0.0
        %v3353 = vmax.f32 %v3321, 0.0
        %v3354 = vmax.f32 %v3322, 0.0
        %v3355 = vmax.f32 %v3323, 0.0
        %v3356 = vmax.f32 %v3324, 0.0
        %v3357 = vmax.f32 %v3325, 0.0
        %v3358 = vmax.f32 %v3326, 0.0
        %v3359 = vmax.f32 %v3327, 0.0
        %v3360 = vmax.f32 %v3328, 0.0
        %v3361 = vmax.f32 %v3329, 0.0
        %v3362 = vmax.f32 %v3330, 0.0
        %v3363 = vmax.f32 %v3331, 0.0
        %v3364 = vmax.f32 %v3332, 0.0
        %v3365 = vmax.f32 %v3333, 0.0
        %v3366 = vmax.f32 %v3334, 0.0
        %v3367 = vmax.f32 %v3335, 0.0
        %v3368 = vmax.f32 %v3336, 0.0
        %v3369 = vmax.f32 %v3337, 0.0
        %v3370 = vmax.f32 %v3338, 0.0
        %v3371 = vadd.f32 %v3339, %v1234
        %v3372 = vadd.f32 %v3340, %v1235
        %v3373 = vadd.f32 %v3341, %v1236
        %v3374 = vadd.f32 %v3342, %v1237
        %v3375 = vadd.f32 %v3343, %v1238
        %v3376 = vadd.f32 %v3344, %v1239
        %v3377 = vadd.f32 %v3345, %v1240
        %v3378 = vadd.f32 %v3346, %v1241
        %v3379 = vadd.f32 %v3347, %v1242
        %v3380 = vadd.f32 %v3348, %v1243
        %v3381 = vadd.f32 %v3349, %v1244
        %v3382 = vadd.f32 %v3350, %v1245
        %v3383 = vadd.f32 %v3351, %v1246
        %v3384 = vadd.f32 %v3352, %v1247
        %v3385 = vadd.f32 %v3353, %v1248
        %v3386 = vadd.f32 %v3354, %v1249
        %v3387 = vadd.f32 %v3355, %v1250
        %v3388 = vadd.f32 %v3356, %v1251
        %v3389 = vadd.f32 %v3357, %v1252
        %v3390 = vadd.f32 %v3358, %v1253
        %v3391 = vadd.f32 %v3359, %v1254
        %v3392 = vadd.f32 %v3360, %v1255
        %v3393 = vadd.f32 %v3361, %v1256
        %v3394 = vadd.f32 %v3362, %v1257
        %v3395 = vadd.f32 %v3363, %v1258
        %v3396 = vadd.f32 %v3364, %v1259
        %v3397 = vadd.f32 %v3365, %v1260
        %v3398 = vadd.f32 %v3366, %v1261
        %v3399 = vadd.f32 %v3367, %v1262
        %v3400 = vadd.f32 %v3368, %v1263
        %v3401 = vadd.f32 %v3369, %v1264
        %v3402 = vadd.f32 %v3370, %v1265
        %v3403 = vld [vmem:[%s18] sm:$0x3]
        %v3405 = vlaneseq
        %v3406 = vshrl.u32 %v3405, 7
        %v3407 = vsub.s32 0, %v3406
        %v3408 = vrot.slane %v3403, %v3407
        %v3409 = vlaneseq
        %v3410 = vshrl.u32 %v3409, 7
        %v3411 = vsub.s32 1, %v3410
        %v3412 = vrot.slane %v3403, %v3411
        %v3415 = vmul.f32 %v3371, %v3408
        %v3416 = vmul.f32 %v3372, %v3412
        %v3417 = vmul.f32 %v3373, %v3408
        %v3418 = vmul.f32 %v3374, %v3412
        %v3419 = vmul.f32 %v3375, %v3408
        %v3420 = vmul.f32 %v3376, %v3412
        %v3421 = vmul.f32 %v3377, %v3408
        %v3422 = vmul.f32 %v3378, %v3412
        %v3423 = vmul.f32 %v3379, %v3408
        %v3424 = vmul.f32 %v3380, %v3412
        %v3425 = vmul.f32 %v3381, %v3408
        %v3426 = vmul.f32 %v3382, %v3412
        %v3427 = vmul.f32 %v3383, %v3408
        %v3428 = vmul.f32 %v3384, %v3412
        %v3429 = vmul.f32 %v3385, %v3408
        %v3430 = vmul.f32 %v3386, %v3412
        %v3431 = vmul.f32 %v3387, %v3408
        %v3432 = vmul.f32 %v3388, %v3412
        %v3433 = vmul.f32 %v3389, %v3408
        %v3434 = vmul.f32 %v3390, %v3412
        %v3435 = vmul.f32 %v3391, %v3408
        %v3436 = vmul.f32 %v3392, %v3412
        %v3437 = vmul.f32 %v3393, %v3408
        %v3438 = vmul.f32 %v3394, %v3412
        %v3439 = vmul.f32 %v3395, %v3408
        %v3440 = vmul.f32 %v3396, %v3412
        %v3441 = vmul.f32 %v3397, %v3408
        %v3442 = vmul.f32 %v3398, %v3412
        %v3443 = vmul.f32 %v3399, %v3408
        %v3444 = vmul.f32 %v3400, %v3412
        %v3445 = vmul.f32 %v3401, %v3408
        %v3446 = vmul.f32 %v3402, %v3412
        %v3447 = vadd.f32 %v3415, %v3416
        %3448 = vadd.xlane.f32.xlu0 %v3447
        %v3449 = vpop.xlane.xlu0 %3448
        %v3450 = vadd.f32 %v3417, %v3418
        %3451 = vadd.xlane.f32.xlu0 %v3450
        %v3452 = vpop.xlane.xlu0 %3451
        %v3453 = vadd.f32 %v3419, %v3420
        %3454 = vadd.xlane.f32.xlu0 %v3453
        %v3455 = vpop.xlane.xlu0 %3454
        %v3456 = vadd.f32 %v3421, %v3422
        %3457 = vadd.xlane.f32.xlu0 %v3456
        %v3458 = vpop.xlane.xlu0 %3457
        %v3459 = vadd.f32 %v3423, %v3424
        %3460 = vadd.xlane.f32.xlu0 %v3459
        %v3461 = vpop.xlane.xlu0 %3460
        %v3462 = vadd.f32 %v3425, %v3426
        %3463 = vadd.xlane.f32.xlu0 %v3462
        %v3464 = vpop.xlane.xlu0 %3463
        %v3465 = vadd.f32 %v3427, %v3428
        %3466 = vadd.xlane.f32.xlu0 %v3465
        %v3467 = vpop.xlane.xlu0 %3466
        %v3468 = vadd.f32 %v3429, %v3430
        %3469 = vadd.xlane.f32.xlu0 %v3468
        %v3470 = vpop.xlane.xlu0 %3469
        %v3471 = vadd.f32 %v3431, %v3432
        %3472 = vadd.xlane.f32.xlu0 %v3471
        %v3473 = vpop.xlane.xlu0 %3472
        %v3474 = vadd.f32 %v3433, %v3434
        %3475 = vadd.xlane.f32.xlu0 %v3474
        %v3476 = vpop.xlane.xlu0 %3475
        %v3477 = vadd.f32 %v3435, %v3436
        %3478 = vadd.xlane.f32.xlu0 %v3477
        %v3479 = vpop.xlane.xlu0 %3478
        %v3480 = vadd.f32 %v3437, %v3438
        %3481 = vadd.xlane.f32.xlu0 %v3480
        %v3482 = vpop.xlane.xlu0 %3481
        %v3483 = vadd.f32 %v3439, %v3440
        %3484 = vadd.xlane.f32.xlu0 %v3483
        %v3485 = vpop.xlane.xlu0 %3484
        %v3486 = vadd.f32 %v3441, %v3442
        %3487 = vadd.xlane.f32.xlu0 %v3486
        %v3488 = vpop.xlane.xlu0 %3487
        %v3489 = vadd.f32 %v3443, %v3444
        %3490 = vadd.xlane.f32.xlu0 %v3489
        %v3491 = vpop.xlane.xlu0 %3490
        %v3492 = vadd.f32 %v3445, %v3446
        %3493 = vadd.xlane.f32.xlu0 %v3492
        %v3494 = vpop.xlane.xlu0 %3493
        %s3495 = sld [smem:[#allocation2]]
        %v3496 = vstv %s3495
        %v3497 = vadd.f32 %v3449, %v3496
        %v3498 = vadd.f32 %v3452, %v3496
        %v3499 = vadd.f32 %v3455, %v3496
        %v3500 = vadd.f32 %v3458, %v3496
        %v3501 = vadd.f32 %v3461, %v3496
        %v3502 = vadd.f32 %v3464, %v3496
        %v3503 = vadd.f32 %v3467, %v3496
        %v3504 = vadd.f32 %v3470, %v3496
        %v3505 = vadd.f32 %v3473, %v3496
        %v3506 = vadd.f32 %v3476, %v3496
        %v3507 = vadd.f32 %v3479, %v3496
        %v3508 = vadd.f32 %v3482, %v3496
        %v3509 = vadd.f32 %v3485, %v3496
        %v3510 = vadd.f32 %v3488, %v3496
        %v3511 = vadd.f32 %v3491, %v3496
        %v3512 = vadd.f32 %v3494, %v3496
        %vm3513 = vcmask 7168
        %3514 = vst.msk [vmem:[%s757] sm:$0xff] %vm3513, %v3497
        %3515 = vst.msk [vmem:[%s757 + $0x8] sm:$0xff] %vm3513, %v3498
        %3516 = vst.msk [vmem:[%s757 + $0x10] sm:$0xff] %vm3513, %v3499
        %3517 = vst.msk [vmem:[%s757 + $0x18] sm:$0xff] %vm3513, %v3500
        %3518 = vst.msk [vmem:[%s757 + $0x20] sm:$0xff] %vm3513, %v3501
        %3519 = vst.msk [vmem:[%s757 + $0x28] sm:$0xff] %vm3513, %v3502
        %3520 = vst.msk [vmem:[%s757 + $0x30] sm:$0xff] %vm3513, %v3503
        %3521 = vst.msk [vmem:[%s757 + $0x38] sm:$0xff] %vm3513, %v3504
        %3522 = vst.msk [vmem:[%s757 + $0x40] sm:$0xff] %vm3513, %v3505
        %3523 = vst.msk [vmem:[%s757 + $0x48] sm:$0xff] %vm3513, %v3506
        %3524 = vst.msk [vmem:[%s757 + $0x50] sm:$0xff] %vm3513, %v3507
        %3525 = vst.msk [vmem:[%s757 + $0x58] sm:$0xff] %vm3513, %v3508
        %3526 = vst.msk [vmem:[%s757 + $0x60] sm:$0xff] %vm3513, %v3509
        %3527 = vst.msk [vmem:[%s757 + $0x68] sm:$0xff] %vm3513, %v3510
        %3528 = vst.msk [vmem:[%s757 + $0x70] sm:$0xff] %vm3513, %v3511
        %3529 = vst.msk [vmem:[%s757 + $0x78] sm:$0xff] %vm3513, %v3512
        %s3530 = smul.u32 16, %s37
        %p3531 = scmp.lt.s32.totalorder %s3530, 31
        %s3532 = scalar_select %p3531, %s3530, 31
        %s3533 = smul.addr %s3532, 8
        %s3534 = scalar_lea.vmem %s20, %s3533
        // Predicated region
        $region133: #{tpu_custom_call.1} parent=99 // pred_check
          %p3535 = pneg %p485
        $region134: #{tpu_custom_call.1} parent=99 // pred_check_branch
          %3537 = sbr.rel (%p3535) target = $region136
        $region135: #{tpu_custom_call.1} parent=99 // pred_region
          %s3538 = smul.u32 16, %s37
        $region136: #{tpu_custom_call.1} parent=99 // pred_fallthru
          _
      $region100: #{tpu_custom_call.1} parent=5 // pred_fallthru
        _
      %p3539 = scmp.le.s32.totalorder 2, %s32
      // Predicated region
      $region137: #{tpu_custom_call.1} parent=5 // pred_check
        %p3540 = pneg %p3539
      $region138: #{tpu_custom_call.1} parent=5 // pred_check_branch
        %3542 = sbr.rel (%p3540) target = $region140
      $region139: #{tpu_custom_call.1} parent=5 // pred_region
        %s3543 = ssub.s32 %s32, 2
        // Predicated region
        $region141: #{tpu_custom_call.1} parent=139 // pred_check
          %p3544 = pneg %p491
        $region142: #{tpu_custom_call.1} parent=139 // pred_check_branch
          %3546 = sbr.rel (%p3544) target = $region144
        $region143: #{tpu_custom_call.1} parent=139 // pred_region
          %s3547 = smul.u32 16, %s38
          %p3548 = scmp.lt.s32.totalorder %s3547, 31
          %s3549 = scalar_select %p3548, %s3547, 31
          %s3550 = smul.addr %s3549, 8
          %s3551 = scalar_lea.vmem %s20, %s3550
        $region144: #{tpu_custom_call.1} parent=139 // pred_fallthru
          _
      $region140: #{tpu_custom_call.1} parent=5 // pred_fallthru
        _
    $region6: #{tpu_custom_call.1} parent=1 // loop_footer
      %s36 = sadd.s32 1, %s32
    $region7: #{tpu_custom_call.1} parent=1 // loop_footer_branch
      %31 = sbr.rel target = $region3
    $region8: #{tpu_custom_call.1} parent=1 // loop_exit
      _
    %3552 = vsyncpa [#allocation4], 1
    %s3553 = scalar_lea.sflag [#allocation4], 1
    %3554 = vsyncpa %s3553, 1
    %3555 = vsyncpa [#allocation6], 1
    %3556 = vsyncpa [#allocation9], 1
    %3557 = vsyncpa [#allocation12], 1
    %3558 = vsyncpa [#allocation15], 1

</llo_original>
